<compile_context>
chip_gen: v5e
topology: v5e:2x2
jax: 0.10.0
libtpu: 0.0.40
codegen_flags: <defaults>
</compile_context>

<pallas_src>
import numpy as np
import jax
import jax.numpy as jnp
from jax.experimental import pallas as pl
from jax.experimental.pallas import tpu as pltpu  # noqa: F401

# Keep the pure-JAX reference in full f32 so the 1e-4 tolerance is meaningful.
jax.config.update("jax_default_matmul_precision", "highest")

# ---- model hyper-params (small, consistent with the module) ----
D_MODEL = 32
NHEAD = 4
HEAD_DIM = D_MODEL // NHEAD
DIM_FF = 64
SEQ = 8
BATCH = 2
ROWS = SEQ * BATCH              # row i -> (s, b) = (i // BATCH, i % BATCH)
LANES = 128
SCALE = 1.0 / float(HEAD_DIM) ** 0.5
LN_EPS = 1e-5
NEG_INF = -1e30
QKV_OUT = 2 * D_MODEL + NHEAD * D_MODEL   # [Q | K | V'_0..V'_3] = 192 lanes


def _layer_norm(x, gamma, beta):
    mu = jnp.mean(x, axis=-1, keepdims=True)
    var = jnp.mean((x - mu) ** 2, axis=-1, keepdims=True)
    return (x - mu) * jax.lax.rsqrt(var + LN_EPS) * gamma + beta


def encoder_layer_kernel(x_ref, wqkv_ref, w1_ref, w2_ref, p_ref, out_ref):
    """x_ref: (16, 96) = [q | k | src] with batch folded into rows.

    p_ref (8, 128) parameter slab rows:
      0: [bq*scale (32) | bk (32)]     1: bv @ Wo^T + bo (32)
      2: b1 (64)                        3: b2 (32)
      4: gamma1 (32)   5: beta1 (32)    6: gamma2 (32)   7: beta2 (32)
    """
    f32 = jnp.float32

    x = x_ref[...]                                   # (16, 96)
    src = x[:, 2 * D_MODEL:3 * D_MODEL]              # residual / value input (16, 32)

    # ---- fused Q / K / (Wo-folded per-head V) projection: one MXU matmul ----
    qkv = jnp.dot(x, wqkv_ref[...], preferred_element_type=f32)          # (16, 192)
    q = qkv[:, 0:D_MODEL] + p_ref[0:1, 0:D_MODEL]                        # scale folded in
    k = qkv[:, D_MODEL:2 * D_MODEL] + p_ref[0:1, D_MODEL:2 * D_MODEL]
    vfold = qkv[:, 2 * D_MODEL:]                                         # (16, 128)

    # ---- cross-batch mask generated in-kernel (rows are batch-minor) ----
    row_b = jax.lax.broadcasted_iota(jnp.int32, (ROWS, ROWS), 0) % BATCH
    col_b = jax.lax.broadcasted_iota(jnp.int32, (ROWS, ROWS), 1) % BATCH
    bias = jnp.where(row_b == col_b, 0.0, NEG_INF).astype(f32)           # (16, 16)

    # ---- attention: heads unrolled, Wo already folded into V' ----
    attn = jnp.zeros((ROWS, D_MODEL), f32)
    for h in range(NHEAD):
        lo = h * HEAD_DIM
        Qh = q[:, lo:lo + HEAD_DIM]                                      # (16, 8)
        Kh = k[:, lo:lo + HEAD_DIM]                                      # (16, 8)
        Vh = vfold[:, h * D_MODEL:(h + 1) * D_MODEL]                     # (16, 32)
        s = jax.lax.dot_general(Qh, Kh, (((1,), (1,)), ((), ())),
                                preferred_element_type=f32) + bias       # (16, 16)
        s = s - jnp.max(s, axis=-1, keepdims=True)
        probs = jnp.exp(s)
        probs = probs / jnp.sum(probs, axis=-1, keepdims=True)           # exact division
        attn = attn + jnp.dot(probs, Vh, preferred_element_type=f32)     # (16, 32)
    attn = attn + p_ref[1:2, 0:D_MODEL]              # folded (bv @ Wo^T + bo)

    # ---- residual + LayerNorm1 ----
    x1 = _layer_norm(src + attn, p_ref[4:5, 0:D_MODEL], p_ref[5:6, 0:D_MODEL])

    # ---- FFN: linear1 -> relu -> linear2 ----
    h1 = jnp.maximum(
        jnp.dot(x1, w1_ref[...], preferred_element_type=f32) + p_ref[2:3, 0:DIM_FF], 0.0)
    h2 = jnp.dot(h1, w2_ref[...], preferred_element_type=f32) + p_ref[3:4, 0:D_MODEL]

    # ---- residual + LayerNorm2 ----
    y = _layer_norm(x1 + h2, p_ref[6:7, 0:D_MODEL], p_ref[7:8, 0:D_MODEL])   # (16, 32)

    # ---- lane-dense store: full (16, 128) slab, no masked partial stores ----
    pad = jnp.zeros((ROWS, LANES - D_MODEL), f32)
    out_ref[...] = jnp.concatenate([y, pad], axis=-1).astype(out_ref.dtype)


@jax.jit
def transformer_encoder_layer(q, k, src, params):
    """q, k, src: (SEQ, BATCH, D_MODEL) float32 (PyTorch MHA layout).

    Single gridless pallas_call; the (seq, batch) -> rows fold and the q|k|src
    lane-concat are free/cheap XLA ops in the wrapper, giving the kernel
    2-D, lane-dense I/O and only 5 input DMAs.
    """
    x = jnp.concatenate(
        [q.reshape(ROWS, D_MODEL),
         k.reshape(ROWS, D_MODEL),
         src.reshape(ROWS, D_MODEL)], axis=-1)                  # (16, 96)
    out = pl.pallas_call(
        encoder_layer_kernel,
        out_shape=jax.ShapeDtypeStruct((ROWS, LANES), jnp.float32),
    )(x, params["w_qkv"], params["w1_t"], params["w2_t"], params["p_slab"])
    return out[:, :D_MODEL].reshape(SEQ, BATCH, D_MODEL)


# ---------------- pure-JAX reference (for verification) ----------------
def reference_forward(q, k, src, params):
    def ln(x, g, b):
        mu = jnp.mean(x, axis=-1, keepdims=True)
        var = jnp.mean((x - mu) ** 2, axis=-1, keepdims=True)
        return (x - mu) / jnp.sqrt(var + LN_EPS) * g + b

    L, N, E = q.shape
    Q = q @ params["wq_t"] + params["bq"]
    K = k @ params["wk_t"] + params["bk"]
    V = src @ params["wv_t"] + params["bv"]

    def split(x):
        return jnp.transpose(x.reshape(L, N, NHEAD, HEAD_DIM), (1, 2, 0, 3))

    Qh, Kh, Vh = split(Q), split(K), split(V)
    s = jnp.einsum("nhld,nhmd->nhlm", Qh, Kh) * SCALE
    p = jax.nn.softmax(s, axis=-1)
    o = jnp.einsum("nhlm,nhmd->nhld", p, Vh)
    o = jnp.transpose(o, (2, 0, 1, 3)).reshape(L, N, E)
    attn = o @ params["wo_t"] + params["bo"]
    x = ln(src + attn, params["g1"], params["be1"])
    h = jnp.maximum(x @ params["w1_t"] + params["b1"], 0.0)
    h = h @ params["w2_t"] + params["b2"]
    return ln(x + h, params["g2"], params["be2"])


def init_params(key):
    ks = jax.random.split(key, 12)
    s = 0.1
    E = D_MODEL
    in_proj_w = jax.random.normal(ks[0], (3 * E, E), jnp.float32) * s
    in_proj_b = jax.random.normal(ks[1], (3 * E,), jnp.float32) * s
    out_proj_w = jax.random.normal(ks[2], (E, E), jnp.float32) * s
    out_proj_b = jax.random.normal(ks[3], (E,), jnp.float32) * s
    w1 = jax.random.normal(ks[4], (DIM_FF, E), jnp.float32) * s
    b1 = jax.random.normal(ks[5], (DIM_FF,), jnp.float32) * s
    w2 = jax.random.normal(ks[6], (E, DIM_FF), jnp.float32) * s
    b2 = jax.random.normal(ks[7], (E,), jnp.float32) * s
    g1 = 1.0 + 0.1 * jax.random.normal(ks[8], (E,), jnp.float32)
    be1 = 0.1 * jax.random.normal(ks[9], (E,), jnp.float32)
    g2 = 1.0 + 0.1 * jax.random.normal(ks[10], (E,), jnp.float32)
    be2 = 0.1 * jax.random.normal(ks[11], (E,), jnp.float32)

    # pre-transposed so x @ W_t matches PyTorch's x @ W.T
    wq_t = np.asarray(in_proj_w[0:E].T)
    wk_t = np.asarray(in_proj_w[E:2 * E].T)
    wv_t = np.asarray(in_proj_w[2 * E:].T)
    wo_t = np.asarray(out_proj_w.T)
    bq = np.asarray(in_proj_b[0:E])
    bk = np.asarray(in_proj_b[E:2 * E])
    bv = np.asarray(in_proj_b[2 * E:])
    bo = np.asarray(out_proj_b)

    # Fused projection weight (96, 192): rows [q | k | src],
    # cols [Q*scale (32) | K (32) | V'_h = Wv_h^T @ Wo_h^T, h=0..3 (4 x 32)].
    w_qkv = np.zeros((3 * E, QKV_OUT), np.float32)
    w_qkv[0:E, 0:E] = wq_t * SCALE
    w_qkv[E:2 * E, E:2 * E] = wk_t
    for h in range(NHEAD):
        hs = slice(h * HEAD_DIM, (h + 1) * HEAD_DIM)
        w_qkv[2 * E:3 * E, 2 * E + h * E:2 * E + (h + 1) * E] = wv_t[:, hs] @ wo_t[hs, :]

    # Value-bias contribution commutes through softmax rows (they sum to 1):
    bo_fold = bv @ wo_t + bo

    # One (8, 128) slab holding all small vector parameters (single DMA).
    p_slab = np.zeros((8, LANES), np.float32)
    p_slab[0, 0:E] = bq * SCALE
    p_slab[0, E:2 * E] = bk
    p_slab[1, 0:E] = bo_fold
    p_slab[2, 0:DIM_FF] = np.asarray(b1)
    p_slab[3, 0:E] = np.asarray(b2)
    p_slab[4, 0:E] = np.asarray(g1)
    p_slab[5, 0:E] = np.asarray(be1)
    p_slab[6, 0:E] = np.asarray(g2)
    p_slab[7, 0:E] = np.asarray(be2)

    return {
        # raw parameters (pure-JAX reference)
        "wq_t": jnp.asarray(wq_t), "wk_t": jnp.asarray(wk_t), "wv_t": jnp.asarray(wv_t),
        "bq": jnp.asarray(bq).reshape(1, E), "bk": jnp.asarray(bk).reshape(1, E),
        "bv": jnp.asarray(bv).reshape(1, E),
        "wo_t": jnp.asarray(wo_t), "bo": jnp.asarray(bo).reshape(1, E),
        "b1": b1.reshape(1, DIM_FF), "b2": b2.reshape(1, E),
        "g1": g1.reshape(1, E), "be1": be1.reshape(1, E),
        "g2": g2.reshape(1, E), "be2": be2.reshape(1, E),
        # kernel-side fused parameters
        "w_qkv": jnp.asarray(w_qkv),
        "w1_t": jnp.asarray(w1.T), "w2_t": jnp.asarray(w2.T),
        "p_slab": jnp.asarray(p_slab),
    }


if __name__ == "__main__":
    key = jax.random.PRNGKey(0)
    kq, kk, ks_, kp = jax.random.split(key, 4)
    # PyTorch MultiheadAttention default layout: (seq, batch, d_model)
    q = jax.random.normal(kq, (SEQ, BATCH, D_MODEL), jnp.float32)
    k = jax.random.normal(kk, (SEQ, BATCH, D_MODEL), jnp.float32)
    src = jax.random.normal(ks_, (SEQ, BATCH, D_MODEL), jnp.float32)
    params = init_params(kp)

    out = jax.block_until_ready(transformer_encoder_layer(q, k, src, params))

    ref = reference_forward(q, k, src, params)
    assert out.shape == (SEQ, BATCH, D_MODEL)
    assert jnp.allclose(out, ref, atol=1e-4, rtol=1e-4), "mismatch vs reference"
    print("KERNEL_OK")
</pallas_src>

<mosaic_0001>
module attributes {stable_mosaic.version = 11 : i64} {
  func.func @encoder_layer_kernel(%arg0: memref<16x96xf32, #tpu.memory_space<vmem>>, %arg1: memref<96x192xf32, #tpu.memory_space<vmem>>, %arg2: memref<32x64xf32, #tpu.memory_space<vmem>>, %arg3: memref<64x32xf32, #tpu.memory_space<vmem>>, %arg4: memref<8x128xf32, #tpu.memory_space<vmem>>, %arg5: memref<16x128xf32, #tpu.memory_space<vmem>>) attributes {dimension_semantics = [], scalar_prefetch = 0 : i64, scratch_operands = 0 : i64, tpu.core_type = #tpu.core_type<tc>} {
    %c0 = arith.constant 0 : index
    %c0_0 = arith.constant 0 : index
    %0 = vector.load %arg0[%c0, %c0_0] : memref<16x96xf32, #tpu.memory_space<vmem>>, vector<16x96xf32>
    %1 = vector.extract_strided_slice %0 {offsets = [0, 64], sizes = [16, 32], strides = [1, 1]} : vector<16x96xf32> to vector<16x32xf32>
    %c0_1 = arith.constant 0 : index
    %c0_2 = arith.constant 0 : index
    %2 = vector.load %arg1[%c0_1, %c0_2] : memref<96x192xf32, #tpu.memory_space<vmem>>, vector<96x192xf32>
    %cst = arith.constant dense<0.000000e+00> : vector<16x192xf32>
    %3 = tpu.matmul %0, %2, %cst {dimension_numbers = #tpu.dot_dimension_numbers<[1], [0], [0], [1], [0, 0, 1, 1], [], []>, precision = #tpu.contract_precision<fp32>} : vector<16x96xf32>, vector<96x192xf32>, vector<16x192xf32> -> vector<16x192xf32>
    %4 = vector.extract_strided_slice %3 {offsets = [0, 0], sizes = [16, 32], strides = [1, 1]} : vector<16x192xf32> to vector<16x32xf32>
    %c0_3 = arith.constant 0 : index
    %c0_4 = arith.constant 0 : index
    %5 = vector.load %arg4[%c0_3, %c0_4] : memref<8x128xf32, #tpu.memory_space<vmem>>, vector<1x32xf32>
    %6 = vector.broadcast %5 : vector<1x32xf32> to vector<16x32xf32>
    %7 = arith.addf %4, %6 : vector<16x32xf32>
    %8 = vector.extract_strided_slice %3 {offsets = [0, 32], sizes = [16, 32], strides = [1, 1]} : vector<16x192xf32> to vector<16x32xf32>
    %c0_5 = arith.constant 0 : index
    %c32 = arith.constant 32 : index
    %9 = vector.load %arg4[%c0_5, %c32] : memref<8x128xf32, #tpu.memory_space<vmem>>, vector<1x32xf32>
    %10 = vector.broadcast %9 : vector<1x32xf32> to vector<16x32xf32>
    %11 = arith.addf %8, %10 : vector<16x32xf32>
    %12 = vector.extract_strided_slice %3 {offsets = [0, 64], sizes = [16, 128], strides = [1, 1]} : vector<16x192xf32> to vector<16x128xf32>
    %13 = tpu.iota {dimensions = array<i32: 0>} : vector<16x16xi32>
    %c2_i32 = arith.constant 2 : i32
    %c0_i32 = arith.constant 0 : i32
    %14 = arith.cmpi eq, %c2_i32, %c0_i32 : i32
    %c1_i32 = arith.constant 1 : i32
    %15 = arith.select %14, %c1_i32, %c2_i32 : i32
    %16 = vector.broadcast %15 : i32 to vector<16x16xi32>
    %17 = arith.remsi %13, %16 : vector<16x16xi32>
    %c0_i32_6 = arith.constant 0 : i32
    %18 = vector.broadcast %c0_i32_6 : i32 to vector<16x16xi32>
    %19 = arith.cmpi ne, %17, %18 : vector<16x16xi32>
    %c0_i32_7 = arith.constant 0 : i32
    %20 = vector.broadcast %c0_i32_7 : i32 to vector<16x16xi32>
    %21 = arith.cmpi slt, %17, %20 : vector<16x16xi32>
    %c0_i32_8 = arith.constant 0 : i32
    %22 = arith.cmpi slt, %15, %c0_i32_8 : i32
    %23 = vector.broadcast %22 : i1 to vector<16x16xi1>
    %24 = vector.broadcast %23 : vector<16x16xi1> to vector<16x16xi1>
    %25 = arith.xori %21, %24 : vector<16x16xi1>
    %26 = arith.andi %25, %19 : vector<16x16xi1>
    %27 = vector.broadcast %15 : i32 to vector<16x16xi32>
    %28 = arith.addi %17, %27 : vector<16x16xi32>
    %29 = arith.select %26, %28, %17 : vector<16x16xi1>, vector<16x16xi32>
    %30 = tpu.iota {dimensions = array<i32: 1>} : vector<16x16xi32>
    %c2_i32_9 = arith.constant 2 : i32
    %c0_i32_10 = arith.constant 0 : i32
    %31 = arith.cmpi eq, %c2_i32_9, %c0_i32_10 : i32
    %c1_i32_11 = arith.constant 1 : i32
    %32 = arith.select %31, %c1_i32_11, %c2_i32_9 : i32
    %33 = vector.broadcast %32 : i32 to vector<16x16xi32>
    %34 = arith.remsi %30, %33 : vector<16x16xi32>
    %c0_i32_12 = arith.constant 0 : i32
    %35 = vector.broadcast %c0_i32_12 : i32 to vector<16x16xi32>
    %36 = arith.cmpi ne, %34, %35 : vector<16x16xi32>
    %c0_i32_13 = arith.constant 0 : i32
    %37 = vector.broadcast %c0_i32_13 : i32 to vector<16x16xi32>
    %38 = arith.cmpi slt, %34, %37 : vector<16x16xi32>
    %c0_i32_14 = arith.constant 0 : i32
    %39 = arith.cmpi slt, %32, %c0_i32_14 : i32
    %40 = vector.broadcast %39 : i1 to vector<16x16xi1>
    %41 = vector.broadcast %40 : vector<16x16xi1> to vector<16x16xi1>
    %42 = arith.xori %38, %41 : vector<16x16xi1>
    %43 = arith.andi %42, %36 : vector<16x16xi1>
    %44 = vector.broadcast %32 : i32 to vector<16x16xi32>
    %45 = arith.addi %34, %44 : vector<16x16xi32>
    %46 = arith.select %43, %45, %34 : vector<16x16xi1>, vector<16x16xi32>
    %47 = arith.cmpi eq, %29, %46 : vector<16x16xi32>
    %cst_15 = arith.constant 0.000000e+00 : f32
    %cst_16 = arith.constant -1.000000e+30 : f32
    %48 = vector.broadcast %cst_15 : f32 to vector<16x16xf32>
    %49 = vector.broadcast %cst_16 : f32 to vector<16x16xf32>
    %50 = arith.select %47, %48, %49 : vector<16x16xi1>, vector<16x16xf32>
    %cst_17 = arith.constant 0.000000e+00 : f32
    %51 = vector.broadcast %cst_17 : f32 to vector<16x32xf32>
    %52 = vector.extract_strided_slice %7 {offsets = [0, 0], sizes = [16, 8], strides = [1, 1]} : vector<16x32xf32> to vector<16x8xf32>
    %53 = vector.extract_strided_slice %11 {offsets = [0, 0], sizes = [16, 8], strides = [1, 1]} : vector<16x32xf32> to vector<16x8xf32>
    %54 = vector.extract_strided_slice %12 {offsets = [0, 0], sizes = [16, 32], strides = [1, 1]} : vector<16x128xf32> to vector<16x32xf32>
    %cst_18 = arith.constant dense<0.000000e+00> : vector<16x16xf32>
    %55 = tpu.matmul %52, %53, %cst_18 {dimension_numbers = #tpu.dot_dimension_numbers<[1], [1], [0], [0], [0, 0, 1, 0], [], []>, precision = #tpu.contract_precision<fp32>} : vector<16x8xf32>, vector<16x8xf32>, vector<16x16xf32> -> vector<16x16xf32>
    %56 = arith.addf %55, %50 : vector<16x16xf32>
    %cst_19 = arith.constant dense<0xFF800000> : vector<16xf32>
    %57 = vector.multi_reduction <maximumf>, %56, %cst_19 [1] : vector<16x16xf32> to vector<16xf32>
    %58 = vector.shape_cast %57 : vector<16xf32> to vector<16x1xf32>
    %59 = vector.broadcast %58 : vector<16x1xf32> to vector<16x16xf32>
    %60 = arith.subf %56, %59 : vector<16x16xf32>
    %61 = math.exp %60 : vector<16x16xf32>
    %cst_20 = arith.constant dense<0.000000e+00> : vector<16xf32>
    %62 = vector.multi_reduction <add>, %61, %cst_20 [1] : vector<16x16xf32> to vector<16xf32>
    %63 = vector.shape_cast %62 : vector<16xf32> to vector<16x1xf32>
    %64 = vector.broadcast %63 : vector<16x1xf32> to vector<16x16xf32>
    %65 = arith.divf %61, %64 : vector<16x16xf32>
    %cst_21 = arith.constant dense<0.000000e+00> : vector<16x32xf32>
    %66 = tpu.matmul %65, %54, %cst_21 {dimension_numbers = #tpu.dot_dimension_numbers<[1], [0], [0], [1], [0, 0, 1, 1], [], []>, precision = #tpu.contract_precision<fp32>} : vector<16x16xf32>, vector<16x32xf32>, vector<16x32xf32> -> vector<16x32xf32>
    %67 = arith.addf %51, %66 : vector<16x32xf32>
    %68 = vector.extract_strided_slice %7 {offsets = [0, 8], sizes = [16, 8], strides = [1, 1]} : vector<16x32xf32> to vector<16x8xf32>
    %69 = vector.extract_strided_slice %11 {offsets = [0, 8], sizes = [16, 8], strides = [1, 1]} : vector<16x32xf32> to vector<16x8xf32>
    %70 = vector.extract_strided_slice %12 {offsets = [0, 32], sizes = [16, 32], strides = [1, 1]} : vector<16x128xf32> to vector<16x32xf32>
    %cst_22 = arith.constant dense<0.000000e+00> : vector<16x16xf32>
    %71 = tpu.matmul %68, %69, %cst_22 {dimension_numbers = #tpu.dot_dimension_numbers<[1], [1], [0], [0], [0, 0, 1, 0], [], []>, precision = #tpu.contract_precision<fp32>} : vector<16x8xf32>, vector<16x8xf32>, vector<16x16xf32> -> vector<16x16xf32>
    %72 = arith.addf %71, %50 : vector<16x16xf32>
    %cst_23 = arith.constant dense<0xFF800000> : vector<16xf32>
    %73 = vector.multi_reduction <maximumf>, %72, %cst_23 [1] : vector<16x16xf32> to vector<16xf32>
    %74 = vector.shape_cast %73 : vector<16xf32> to vector<16x1xf32>
    %75 = vector.broadcast %74 : vector<16x1xf32> to vector<16x16xf32>
    %76 = arith.subf %72, %75 : vector<16x16xf32>
    %77 = math.exp %76 : vector<16x16xf32>
    %cst_24 = arith.constant dense<0.000000e+00> : vector<16xf32>
    %78 = vector.multi_reduction <add>, %77, %cst_24 [1] : vector<16x16xf32> to vector<16xf32>
    %79 = vector.shape_cast %78 : vector<16xf32> to vector<16x1xf32>
    %80 = vector.broadcast %79 : vector<16x1xf32> to vector<16x16xf32>
    %81 = arith.divf %77, %80 : vector<16x16xf32>
    %cst_25 = arith.constant dense<0.000000e+00> : vector<16x32xf32>
    %82 = tpu.matmul %81, %70, %cst_25 {dimension_numbers = #tpu.dot_dimension_numbers<[1], [0], [0], [1], [0, 0, 1, 1], [], []>, precision = #tpu.contract_precision<fp32>} : vector<16x16xf32>, vector<16x32xf32>, vector<16x32xf32> -> vector<16x32xf32>
    %83 = arith.addf %67, %82 : vector<16x32xf32>
    %84 = vector.extract_strided_slice %7 {offsets = [0, 16], sizes = [16, 8], strides = [1, 1]} : vector<16x32xf32> to vector<16x8xf32>
    %85 = vector.extract_strided_slice %11 {offsets = [0, 16], sizes = [16, 8], strides = [1, 1]} : vector<16x32xf32> to vector<16x8xf32>
    %86 = vector.extract_strided_slice %12 {offsets = [0, 64], sizes = [16, 32], strides = [1, 1]} : vector<16x128xf32> to vector<16x32xf32>
    %cst_26 = arith.constant dense<0.000000e+00> : vector<16x16xf32>
    %87 = tpu.matmul %84, %85, %cst_26 {dimension_numbers = #tpu.dot_dimension_numbers<[1], [1], [0], [0], [0, 0, 1, 0], [], []>, precision = #tpu.contract_precision<fp32>} : vector<16x8xf32>, vector<16x8xf32>, vector<16x16xf32> -> vector<16x16xf32>
    %88 = arith.addf %87, %50 : vector<16x16xf32>
    %cst_27 = arith.constant dense<0xFF800000> : vector<16xf32>
    %89 = vector.multi_reduction <maximumf>, %88, %cst_27 [1] : vector<16x16xf32> to vector<16xf32>
    %90 = vector.shape_cast %89 : vector<16xf32> to vector<16x1xf32>
    %91 = vector.broadcast %90 : vector<16x1xf32> to vector<16x16xf32>
    %92 = arith.subf %88, %91 : vector<16x16xf32>
    %93 = math.exp %92 : vector<16x16xf32>
    %cst_28 = arith.constant dense<0.000000e+00> : vector<16xf32>
    %94 = vector.multi_reduction <add>, %93, %cst_28 [1] : vector<16x16xf32> to vector<16xf32>
    %95 = vector.shape_cast %94 : vector<16xf32> to vector<16x1xf32>
    %96 = vector.broadcast %95 : vector<16x1xf32> to vector<16x16xf32>
    %97 = arith.divf %93, %96 : vector<16x16xf32>
    %cst_29 = arith.constant dense<0.000000e+00> : vector<16x32xf32>
    %98 = tpu.matmul %97, %86, %cst_29 {dimension_numbers = #tpu.dot_dimension_numbers<[1], [0], [0], [1], [0, 0, 1, 1], [], []>, precision = #tpu.contract_precision<fp32>} : vector<16x16xf32>, vector<16x32xf32>, vector<16x32xf32> -> vector<16x32xf32>
    %99 = arith.addf %83, %98 : vector<16x32xf32>
    %100 = vector.extract_strided_slice %7 {offsets = [0, 24], sizes = [16, 8], strides = [1, 1]} : vector<16x32xf32> to vector<16x8xf32>
    %101 = vector.extract_strided_slice %11 {offsets = [0, 24], sizes = [16, 8], strides = [1, 1]} : vector<16x32xf32> to vector<16x8xf32>
    %102 = vector.extract_strided_slice %12 {offsets = [0, 96], sizes = [16, 32], strides = [1, 1]} : vector<16x128xf32> to vector<16x32xf32>
    %cst_30 = arith.constant dense<0.000000e+00> : vector<16x16xf32>
    %103 = tpu.matmul %100, %101, %cst_30 {dimension_numbers = #tpu.dot_dimension_numbers<[1], [1], [0], [0], [0, 0, 1, 0], [], []>, precision = #tpu.contract_precision<fp32>} : vector<16x8xf32>, vector<16x8xf32>, vector<16x16xf32> -> vector<16x16xf32>
    %104 = arith.addf %103, %50 : vector<16x16xf32>
    %cst_31 = arith.constant dense<0xFF800000> : vector<16xf32>
    %105 = vector.multi_reduction <maximumf>, %104, %cst_31 [1] : vector<16x16xf32> to vector<16xf32>
    %106 = vector.shape_cast %105 : vector<16xf32> to vector<16x1xf32>
    %107 = vector.broadcast %106 : vector<16x1xf32> to vector<16x16xf32>
    %108 = arith.subf %104, %107 : vector<16x16xf32>
    %109 = math.exp %108 : vector<16x16xf32>
    %cst_32 = arith.constant dense<0.000000e+00> : vector<16xf32>
    %110 = vector.multi_reduction <add>, %109, %cst_32 [1] : vector<16x16xf32> to vector<16xf32>
    %111 = vector.shape_cast %110 : vector<16xf32> to vector<16x1xf32>
    %112 = vector.broadcast %111 : vector<16x1xf32> to vector<16x16xf32>
    %113 = arith.divf %109, %112 : vector<16x16xf32>
    %cst_33 = arith.constant dense<0.000000e+00> : vector<16x32xf32>
    %114 = tpu.matmul %113, %102, %cst_33 {dimension_numbers = #tpu.dot_dimension_numbers<[1], [0], [0], [1], [0, 0, 1, 1], [], []>, precision = #tpu.contract_precision<fp32>} : vector<16x16xf32>, vector<16x32xf32>, vector<16x32xf32> -> vector<16x32xf32>
    %115 = arith.addf %99, %114 : vector<16x32xf32>
    %c1 = arith.constant 1 : index
    %c0_34 = arith.constant 0 : index
    %116 = vector.load %arg4[%c1, %c0_34] : memref<8x128xf32, #tpu.memory_space<vmem>>, vector<1x32xf32>
    %117 = vector.broadcast %116 : vector<1x32xf32> to vector<16x32xf32>
    %118 = arith.addf %115, %117 : vector<16x32xf32>
    %119 = arith.addf %1, %118 : vector<16x32xf32>
    %c4 = arith.constant 4 : index
    %c0_35 = arith.constant 0 : index
    %120 = vector.load %arg4[%c4, %c0_35] : memref<8x128xf32, #tpu.memory_space<vmem>>, vector<1x32xf32>
    %c5 = arith.constant 5 : index
    %c0_36 = arith.constant 0 : index
    %121 = vector.load %arg4[%c5, %c0_36] : memref<8x128xf32, #tpu.memory_space<vmem>>, vector<1x32xf32>
    %cst_37 = arith.constant dense<0.000000e+00> : vector<16xf32>
    %122 = vector.multi_reduction <add>, %119, %cst_37 [1] : vector<16x32xf32> to vector<16xf32>
    %123 = vector.shape_cast %122 : vector<16xf32> to vector<16x1xf32>
    %cst_38 = arith.constant 3.200000e+01 : f32
    %124 = vector.broadcast %cst_38 : f32 to vector<16x1xf32>
    %125 = arith.divf %123, %124 : vector<16x1xf32>
    %126 = vector.broadcast %125 : vector<16x1xf32> to vector<16x32xf32>
    %127 = arith.subf %119, %126 : vector<16x32xf32>
    %128 = arith.mulf %127, %127 : vector<16x32xf32>
    %cst_39 = arith.constant dense<0.000000e+00> : vector<16xf32>
    %129 = vector.multi_reduction <add>, %128, %cst_39 [1] : vector<16x32xf32> to vector<16xf32>
    %130 = vector.shape_cast %129 : vector<16xf32> to vector<16x1xf32>
    %cst_40 = arith.constant 3.200000e+01 : f32
    %131 = vector.broadcast %cst_40 : f32 to vector<16x1xf32>
    %132 = arith.divf %130, %131 : vector<16x1xf32>
    %133 = vector.broadcast %125 : vector<16x1xf32> to vector<16x32xf32>
    %134 = arith.subf %119, %133 : vector<16x32xf32>
    %cst_41 = arith.constant 9.99999974E-6 : f32
    %135 = vector.broadcast %cst_41 : f32 to vector<16x1xf32>
    %136 = arith.addf %132, %135 : vector<16x1xf32>
    %137 = math.rsqrt %136 : vector<16x1xf32>
    %138 = vector.broadcast %137 : vector<16x1xf32> to vector<16x32xf32>
    %139 = arith.mulf %134, %138 : vector<16x32xf32>
    %140 = vector.broadcast %120 : vector<1x32xf32> to vector<16x32xf32>
    %141 = arith.mulf %139, %140 : vector<16x32xf32>
    %142 = vector.broadcast %121 : vector<1x32xf32> to vector<16x32xf32>
    %143 = arith.addf %141, %142 : vector<16x32xf32>
    %c0_42 = arith.constant 0 : index
    %c0_43 = arith.constant 0 : index
    %144 = vector.load %arg2[%c0_42, %c0_43] : memref<32x64xf32, #tpu.memory_space<vmem>>, vector<32x64xf32>
    %cst_44 = arith.constant dense<0.000000e+00> : vector<16x64xf32>
    %145 = tpu.matmul %143, %144, %cst_44 {dimension_numbers = #tpu.dot_dimension_numbers<[1], [0], [0], [1], [0, 0, 1, 1], [], []>, precision = #tpu.contract_precision<fp32>} : vector<16x32xf32>, vector<32x64xf32>, vector<16x64xf32> -> vector<16x64xf32>
    %c2 = arith.constant 2 : index
    %c0_45 = arith.constant 0 : index
    %146 = vector.load %arg4[%c2, %c0_45] : memref<8x128xf32, #tpu.memory_space<vmem>>, vector<1x64xf32>
    %147 = vector.broadcast %146 : vector<1x64xf32> to vector<16x64xf32>
    %148 = arith.addf %145, %147 : vector<16x64xf32>
    %cst_46 = arith.constant 0.000000e+00 : f32
    %149 = vector.broadcast %cst_46 : f32 to vector<16x64xf32>
    %150 = arith.maximumf %148, %149 : vector<16x64xf32>
    %c0_47 = arith.constant 0 : index
    %c0_48 = arith.constant 0 : index
    %151 = vector.load %arg3[%c0_47, %c0_48] : memref<64x32xf32, #tpu.memory_space<vmem>>, vector<64x32xf32>
    %cst_49 = arith.constant dense<0.000000e+00> : vector<16x32xf32>
    %152 = tpu.matmul %150, %151, %cst_49 {dimension_numbers = #tpu.dot_dimension_numbers<[1], [0], [0], [1], [0, 0, 1, 1], [], []>, precision = #tpu.contract_precision<fp32>} : vector<16x64xf32>, vector<64x32xf32>, vector<16x32xf32> -> vector<16x32xf32>
    %c3 = arith.constant 3 : index
    %c0_50 = arith.constant 0 : index
    %153 = vector.load %arg4[%c3, %c0_50] : memref<8x128xf32, #tpu.memory_space<vmem>>, vector<1x32xf32>
    %154 = vector.broadcast %153 : vector<1x32xf32> to vector<16x32xf32>
    %155 = arith.addf %152, %154 : vector<16x32xf32>
    %156 = arith.addf %143, %155 : vector<16x32xf32>
    %c6 = arith.constant 6 : index
    %c0_51 = arith.constant 0 : index
    %157 = vector.load %arg4[%c6, %c0_51] : memref<8x128xf32, #tpu.memory_space<vmem>>, vector<1x32xf32>
    %c7 = arith.constant 7 : index
    %c0_52 = arith.constant 0 : index
    %158 = vector.load %arg4[%c7, %c0_52] : memref<8x128xf32, #tpu.memory_space<vmem>>, vector<1x32xf32>
    %cst_53 = arith.constant dense<0.000000e+00> : vector<16xf32>
    %159 = vector.multi_reduction <add>, %156, %cst_53 [1] : vector<16x32xf32> to vector<16xf32>
    %160 = vector.shape_cast %159 : vector<16xf32> to vector<16x1xf32>
    %cst_54 = arith.constant 3.200000e+01 : f32
    %161 = vector.broadcast %cst_54 : f32 to vector<16x1xf32>
    %162 = arith.divf %160, %161 : vector<16x1xf32>
    %163 = vector.broadcast %162 : vector<16x1xf32> to vector<16x32xf32>
    %164 = arith.subf %156, %163 : vector<16x32xf32>
    %165 = arith.mulf %164, %164 : vector<16x32xf32>
    %cst_55 = arith.constant dense<0.000000e+00> : vector<16xf32>
    %166 = vector.multi_reduction <add>, %165, %cst_55 [1] : vector<16x32xf32> to vector<16xf32>
    %167 = vector.shape_cast %166 : vector<16xf32> to vector<16x1xf32>
    %cst_56 = arith.constant 3.200000e+01 : f32
    %168 = vector.broadcast %cst_56 : f32 to vector<16x1xf32>
    %169 = arith.divf %167, %168 : vector<16x1xf32>
    %170 = vector.broadcast %162 : vector<16x1xf32> to vector<16x32xf32>
    %171 = arith.subf %156, %170 : vector<16x32xf32>
    %cst_57 = arith.constant 9.99999974E-6 : f32
    %172 = vector.broadcast %cst_57 : f32 to vector<16x1xf32>
    %173 = arith.addf %169, %172 : vector<16x1xf32>
    %174 = math.rsqrt %173 : vector<16x1xf32>
    %175 = vector.broadcast %174 : vector<16x1xf32> to vector<16x32xf32>
    %176 = arith.mulf %171, %175 : vector<16x32xf32>
    %177 = vector.broadcast %157 : vector<1x32xf32> to vector<16x32xf32>
    %178 = arith.mulf %176, %177 : vector<16x32xf32>
    %179 = vector.broadcast %158 : vector<1x32xf32> to vector<16x32xf32>
    %180 = arith.addf %178, %179 : vector<16x32xf32>
    %cst_58 = arith.constant 0.000000e+00 : f32
    %181 = vector.broadcast %cst_58 : f32 to vector<16x96xf32>
    %182 = tpu.concatenate %180, %181 in 1 : vector<16x32xf32>, vector<16x96xf32> -> vector<16x128xf32>
    %c0_59 = arith.constant 0 : index
    %c0_60 = arith.constant 0 : index
    %183 = vector.load %arg5[%c0_59, %c0_60] : memref<16x128xf32, #tpu.memory_space<vmem>>, vector<16x128xf32>
    tpu.vector_store %arg5[%c0_59, %c0_60], %182 {strides = array<i32>} : memref<16x128xf32, #tpu.memory_space<vmem>>, vector<16x128xf32>,
    return
  }
}

</mosaic_0001>

<llo_original>
// kernel: transformer_encoder_layer.1
$region0: #{transformer_encoder_layer.1}
  #allocation0 [shape = 'u32[]', space=smem, size = 0x4, offset = 0x4, fixed_abs, tag = 'smem constant byte address 0x4 - core index']
  #allocation1 [shape = 'u32[72,128]{1,0:T(1,128)}', space=vmem, size = 0x9000, scoped, tag = 'internal scratch']
  %s0 = inlined_call_operand.vmem [shape: f32[16,96], index: 0, kind: input, shape index: {}]
  %s1 = inlined_call_operand.hbm [shape: f32[96,192], index: 1, kind: input, shape index: {}]
  %s2 = inlined_call_operand.vmem [shape: f32[32,64], index: 2, kind: input, shape index: {}]
  %s3 = inlined_call_operand.vmem [shape: f32[64,32], index: 3, kind: input, shape index: {}]
  %s4 = inlined_call_operand.vmem [shape: f32[8,128], index: 4, kind: input, shape index: {}]
  %s5 = inlined_call_operand.hbm [shape: f32[16,128], index: 5, kind: output, shape index: {}]
  %s6 = sld [smem:[#allocation0]]
  $region34: #{transformer_encoder_layer.1} parent=0
    _
  %s8 = ssub.s32 1, %s6
  %s9 = scalar_select 0, %s8, %s6
  $region1: #{transformer_encoder_layer.1} parent=0
    #allocation2 [shape = 'u8[98304]{0}', space=vmem, size = 0x18000, scoped, tag = 'input window, operand 1, single buffered']
    #allocation3 [shape = 's32[1]{0}', space=sflag, size = 0x4, scoped, tag = 'scoped memory for transformer_encoder_layer.1']
    #allocation4 [shape = 's32[1]{0}', space=sflag, size = 0x4, scoped, tag = 'scoped memory for transformer_encoder_layer.1']
    #allocation5 [shape = 'u8[8192]{0}', space=vmem, size = 0x2000, scoped, tag = 'output window, operand 0, single buffered']
    %10 = vsyncpa [#allocation3], 0
    %11 = vsyncpa [#allocation4], 0
    // Predicated region
    $region2: #{transformer_encoder_layer.1} parent=1 // pred_check
      _
    $region3: #{transformer_encoder_layer.1} parent=1 // pred_check_branch
      %13 = sbr.rel (0) target = $region5
    $region4: #{transformer_encoder_layer.1} parent=1 // pred_region
      _
    $region5: #{transformer_encoder_layer.1} parent=1 // pred_fallthru
      _
    // Predicated region
    $region6: #{transformer_encoder_layer.1} parent=1 // pred_check
      _
    $region7: #{transformer_encoder_layer.1} parent=1 // pred_check_branch
      %15 = sbr.rel (0) target = $region9
    $region8: #{transformer_encoder_layer.1} parent=1 // pred_region
      %17 = vsyncadd [#allocation3], 0
      %s18 = sshll.u32 %s1, 4
      %s19 = int_to_ptr.hbm [resolvable:$true] %s18
      %s20 = sshll.u32 [#allocation2], 4
      %s21 = int_to_ptr.vmem [resolvable:$true] %s20
      %26 = dma.hbm_to_vmem [thread:$0]  %s19, 3072, %s21, [#allocation3], 256, 256, 16
    $region9: #{transformer_encoder_layer.1} parent=1 // pred_fallthru
      _
    // Predicated region
    $region10: #{transformer_encoder_layer.1} parent=1 // pred_check
      _
    $region11: #{transformer_encoder_layer.1} parent=1 // pred_check_branch
      %28 = sbr.rel (0) target = $region13
    $region12: #{transformer_encoder_layer.1} parent=1 // pred_region
      _
    $region13: #{transformer_encoder_layer.1} parent=1 // pred_fallthru
      _
    // Predicated region
    $region14: #{transformer_encoder_layer.1} parent=1 // pred_check
      _
    $region15: #{transformer_encoder_layer.1} parent=1 // pred_check_branch
      %30 = sbr.rel (0) target = $region17
    $region16: #{transformer_encoder_layer.1} parent=1 // pred_region
      _
    $region17: #{transformer_encoder_layer.1} parent=1 // pred_fallthru
      _
    // Predicated region
    $region18: #{transformer_encoder_layer.1} parent=1 // pred_check
      _
    $region19: #{transformer_encoder_layer.1} parent=1 // pred_check_branch
      %32 = sbr.rel (0) target = $region21
    $region20: #{transformer_encoder_layer.1} parent=1 // pred_region
      _
    $region21: #{transformer_encoder_layer.1} parent=1 // pred_fallthru
      _
    // Predicated region
    $region22: #{transformer_encoder_layer.1} parent=1 // pred_check
      _
    $region23: #{transformer_encoder_layer.1} parent=1 // pred_check_branch
      %34 = sbr.rel (0) target = $region25
    $region24: #{transformer_encoder_layer.1} parent=1 // pred_region
      %36 = dma.done [#allocation3], 3072
    $region25: #{transformer_encoder_layer.1} parent=1 // pred_fallthru
      _
    %v37 = vld [vmem:[%s0] sm:$0xff]
    %v38 = vld [vmem:[%s0 + $0x8] sm:$0xff]
    %v39 = vld [vmem:[#allocation2] sm:$0xff]
    %v40 = vld [vmem:[#allocation2 + $0x8] sm:$0xff]
    %v41 = vld [vmem:[#allocation2 + $0x10] sm:$0xff]
    %v42 = vld [vmem:[#allocation2 + $0x18] sm:$0xff]
    %v43 = vld [vmem:[#allocation2 + $0x20] sm:$0xff]
    %v44 = vld [vmem:[#allocation2 + $0x28] sm:$0xff]
    %v45 = vld [vmem:[#allocation2 + $0x30] sm:$0xff]
    %v46 = vld [vmem:[#allocation2 + $0x38] sm:$0xff]
    %v47 = vld [vmem:[#allocation2 + $0x40] sm:$0xff]
    %v48 = vld [vmem:[#allocation2 + $0x48] sm:$0xff]
    %v49 = vld [vmem:[#allocation2 + $0x50] sm:$0xff]
    %v50 = vld [vmem:[#allocation2 + $0x58] sm:$0xff]
    %v51 = vld [vmem:[#allocation2 + $0x60] sm:$0xff]
    %v52 = vld [vmem:[#allocation2 + $0x68] sm:$0xff]
    %v53 = vld [vmem:[#allocation2 + $0x70] sm:$0xff]
    %v54 = vld [vmem:[#allocation2 + $0x78] sm:$0xff]
    %v55 = vld [vmem:[#allocation2 + $0x80] sm:$0xff]
    %v56 = vld [vmem:[#allocation2 + $0x88] sm:$0xff]
    %v57 = vld [vmem:[#allocation2 + $0x90] sm:$0xff]
    %v58 = vld [vmem:[#allocation2 + $0x98] sm:$0xff]
    %v59 = vld [vmem:[#allocation2 + $0xa0] sm:$0xff]
    %v60 = vld [vmem:[#allocation2 + $0xa8] sm:$0xff]
    %v61 = vld [vmem:[#allocation2 + $0xb0] sm:$0xff]
    %v62 = vld [vmem:[#allocation2 + $0xb8] sm:$0xff]
    %vm63 = vcmask 785408
    %v65 = vsel %vm63, %v37, 0
    %v68 = vsel %vm63, %v38, 0
    %70 = vmatpush.msra.mxu0 0.0
    %71 = vmatpush.msra.mxu0 0.0
    %72 = vmatpush.msra.mxu0 0.0
    %73 = vmatpush.msra.mxu0 0.0
    %v74 = vand.u32 %v61, 4294901760
    %75 = vmatpush.msra.mxu0 %v74
    %v76 = vand.u32 %v59, 4294901760
    %77 = vmatpush.msra.mxu0 %v76
    %v78 = vand.u32 %v57, 4294901760
    %79 = vmatpush.msra.mxu0 %v78
    %v80 = vand.u32 %v55, 4294901760
    %81 = vmatpush.msra.mxu0 %v80
    %v82 = vand.u32 %v53, 4294901760
    %83 = vmatpush.msra.mxu0 %v82
    %v84 = vand.u32 %v51, 4294901760
    %85 = vmatpush.msra.mxu0 %v84
    %v86 = vand.u32 %v49, 4294901760
    %87 = vmatpush.msra.mxu0 %v86
    %v88 = vand.u32 %v47, 4294901760
    %89 = vmatpush.msra.mxu0 %v88
    %v90 = vand.u32 %v45, 4294901760
    %91 = vmatpush.msra.mxu0 %v90
    %v92 = vand.u32 %v43, 4294901760
    %93 = vmatpush.msra.mxu0 %v92
    %v94 = vand.u32 %v41, 4294901760
    %95 = vmatpush.msra.mxu0 %v94
    %v96 = vand.u32 %v39, 4294901760
    %97 = vmatpush.msra.mxu0 %v96
    %v98 = vand.u32 %v65, 4294901760
    %v99 = vsub.f32 %v65, %v98
    %v100 = vand.u32 %v99, 4294901760
    %v101 = vsub.f32 %v99, %v100
    %v102 = vand.u32 %v101, 4294901760
    %103 = vmatmul.f32.gmra.mxu0 %v102
    %v104 = vpop.f32.mrf.mxu0
    %v105 = vadd.f32 0.0, %v104
    %v106 = vand.u32 %v68, 4294901760
    %v107 = vsub.f32 %v68, %v106
    %v108 = vand.u32 %v107, 4294901760
    %v109 = vsub.f32 %v107, %v108
    %v110 = vand.u32 %v109, 4294901760
    %111 = vmatmul.f32.gmra.mxu0 %v110
    %v112 = vpop.f32.mrf.mxu0
    %v113 = vadd.f32 0.0, %v112
    %114 = vdwg.mxu0
    %115 = vmatpush.msra.mxu0 0.0
    %116 = vmatpush.msra.mxu0 0.0
    %117 = vmatpush.msra.mxu0 0.0
    %118 = vmatpush.msra.mxu0 0.0
    %v119 = vand.u32 %v61, 4294901760
    %v120 = vsub.f32 %v61, %v119
    %v121 = vand.u32 %v120, 4294901760
    %v122 = vsub.f32 %v120, %v121
    %v123 = vand.u32 %v122, 4294901760
    %124 = vmatpush.msra.mxu0 %v123
    %v125 = vand.u32 %v59, 4294901760
    %v126 = vsub.f32 %v59, %v125
    %v127 = vand.u32 %v126, 4294901760
    %v128 = vsub.f32 %v126, %v127
    %v129 = vand.u32 %v128, 4294901760
    %130 = vmatpush.msra.mxu0 %v129
    %v131 = vand.u32 %v57, 4294901760
    %v132 = vsub.f32 %v57, %v131
    %v133 = vand.u32 %v132, 4294901760
    %v134 = vsub.f32 %v132, %v133
    %v135 = vand.u32 %v134, 4294901760
    %136 = vmatpush.msra.mxu0 %v135
    %v137 = vand.u32 %v55, 4294901760
    %v138 = vsub.f32 %v55, %v137
    %v139 = vand.u32 %v138, 4294901760
    %v140 = vsub.f32 %v138, %v139
    %v141 = vand.u32 %v140, 4294901760
    %142 = vmatpush.msra.mxu0 %v141
    %v143 = vand.u32 %v53, 4294901760
    %v144 = vsub.f32 %v53, %v143
    %v145 = vand.u32 %v144, 4294901760
    %v146 = vsub.f32 %v144, %v145
    %v147 = vand.u32 %v146, 4294901760
    %148 = vmatpush.msra.mxu0 %v147
    %v149 = vand.u32 %v51, 4294901760
    %v150 = vsub.f32 %v51, %v149
    %v151 = vand.u32 %v150, 4294901760
    %v152 = vsub.f32 %v150, %v151
    %v153 = vand.u32 %v152, 4294901760
    %154 = vmatpush.msra.mxu0 %v153
    %v155 = vand.u32 %v49, 4294901760
    %v156 = vsub.f32 %v49, %v155
    %v157 = vand.u32 %v156, 4294901760
    %v158 = vsub.f32 %v156, %v157
    %v159 = vand.u32 %v158, 4294901760
    %160 = vmatpush.msra.mxu0 %v159
    %v161 = vand.u32 %v47, 4294901760
    %v162 = vsub.f32 %v47, %v161
    %v163 = vand.u32 %v162, 4294901760
    %v164 = vsub.f32 %v162, %v163
    %v165 = vand.u32 %v164, 4294901760
    %166 = vmatpush.msra.mxu0 %v165
    %v167 = vand.u32 %v45, 4294901760
    %v168 = vsub.f32 %v45, %v167
    %v169 = vand.u32 %v168, 4294901760
    %v170 = vsub.f32 %v168, %v169
    %v171 = vand.u32 %v170, 4294901760
    %172 = vmatpush.msra.mxu0 %v171
    %v173 = vand.u32 %v43, 4294901760
    %v174 = vsub.f32 %v43, %v173
    %v175 = vand.u32 %v174, 4294901760
    %v176 = vsub.f32 %v174, %v175
    %v177 = vand.u32 %v176, 4294901760
    %178 = vmatpush.msra.mxu0 %v177
    %v179 = vand.u32 %v41, 4294901760
    %v180 = vsub.f32 %v41, %v179
    %v181 = vand.u32 %v180, 4294901760
    %v182 = vsub.f32 %v180, %v181
    %v183 = vand.u32 %v182, 4294901760
    %184 = vmatpush.msra.mxu0 %v183
    %v185 = vand.u32 %v39, 4294901760
    %v186 = vsub.f32 %v39, %v185
    %v187 = vand.u32 %v186, 4294901760
    %v188 = vsub.f32 %v186, %v187
    %v189 = vand.u32 %v188, 4294901760
    %190 = vmatpush.msra.mxu0 %v189
    %v191 = vand.u32 %v65, 4294901760
    %192 = vmatmul.f32.gmra.mxu0 %v191
    %v193 = vpop.f32.mrf.mxu0
    %v194 = vadd.f32 %v105, %v193
    %v195 = vand.u32 %v68, 4294901760
    %196 = vmatmul.f32.gmra.mxu0 %v195
    %v197 = vpop.f32.mrf.mxu0
    %v198 = vadd.f32 %v113, %v197
    %199 = vdwg.mxu0
    %200 = vmatpush.msra.mxu0 0.0
    %201 = vmatpush.msra.mxu0 0.0
    %202 = vmatpush.msra.mxu0 0.0
    %203 = vmatpush.msra.mxu0 0.0
    %v204 = vand.u32 %v61, 4294901760
    %v205 = vsub.f32 %v61, %v204
    %206 = vmatpush.msra.mxu0 %v205
    %v207 = vand.u32 %v59, 4294901760
    %v208 = vsub.f32 %v59, %v207
    %209 = vmatpush.msra.mxu0 %v208
    %v210 = vand.u32 %v57, 4294901760
    %v211 = vsub.f32 %v57, %v210
    %212 = vmatpush.msra.mxu0 %v211
    %v213 = vand.u32 %v55, 4294901760
    %v214 = vsub.f32 %v55, %v213
    %215 = vmatpush.msra.mxu0 %v214
    %v216 = vand.u32 %v53, 4294901760
    %v217 = vsub.f32 %v53, %v216
    %218 = vmatpush.msra.mxu0 %v217
    %v219 = vand.u32 %v51, 4294901760
    %v220 = vsub.f32 %v51, %v219
    %221 = vmatpush.msra.mxu0 %v220
    %v222 = vand.u32 %v49, 4294901760
    %v223 = vsub.f32 %v49, %v222
    %224 = vmatpush.msra.mxu0 %v223
    %v225 = vand.u32 %v47, 4294901760
    %v226 = vsub.f32 %v47, %v225
    %227 = vmatpush.msra.mxu0 %v226
    %v228 = vand.u32 %v45, 4294901760
    %v229 = vsub.f32 %v45, %v228
    %230 = vmatpush.msra.mxu0 %v229
    %v231 = vand.u32 %v43, 4294901760
    %v232 = vsub.f32 %v43, %v231
    %233 = vmatpush.msra.mxu0 %v232
    %v234 = vand.u32 %v41, 4294901760
    %v235 = vsub.f32 %v41, %v234
    %236 = vmatpush.msra.mxu0 %v235
    %v237 = vand.u32 %v39, 4294901760
    %v238 = vsub.f32 %v39, %v237
    %239 = vmatpush.msra.mxu0 %v238
    %v240 = vand.u32 %v65, 4294901760
    %v241 = vsub.f32 %v65, %v240
    %242 = vmatmul.f32.gmra.mxu0 %v241
    %v243 = vpop.f32.mrf.mxu0
    %v244 = vadd.f32 %v194, %v243
    %v245 = vand.u32 %v68, 4294901760
    %v246 = vsub.f32 %v68, %v245
    %247 = vmatmul.f32.gmra.mxu0 %v246
    %v248 = vpop.f32.mrf.mxu0
    %v249 = vadd.f32 %v198, %v248
    %250 = vdwg.mxu0
    %251 = vmatpush.msra.mxu0 0.0
    %252 = vmatpush.msra.mxu0 0.0
    %253 = vmatpush.msra.mxu0 0.0
    %254 = vmatpush.msra.mxu0 0.0
    %v255 = vand.u32 %v61, 4294901760
    %256 = vmatpush.msra.mxu0 %v255
    %v257 = vand.u32 %v59, 4294901760
    %258 = vmatpush.msra.mxu0 %v257
    %v259 = vand.u32 %v57, 4294901760
    %260 = vmatpush.msra.mxu0 %v259
    %v261 = vand.u32 %v55, 4294901760
    %262 = vmatpush.msra.mxu0 %v261
    %v263 = vand.u32 %v53, 4294901760
    %264 = vmatpush.msra.mxu0 %v263
    %v265 = vand.u32 %v51, 4294901760
    %266 = vmatpush.msra.mxu0 %v265
    %v267 = vand.u32 %v49, 4294901760
    %268 = vmatpush.msra.mxu0 %v267
    %v269 = vand.u32 %v47, 4294901760
    %270 = vmatpush.msra.mxu0 %v269
    %v271 = vand.u32 %v45, 4294901760
    %272 = vmatpush.msra.mxu0 %v271
    %v273 = vand.u32 %v43, 4294901760
    %274 = vmatpush.msra.mxu0 %v273
    %v275 = vand.u32 %v41, 4294901760
    %276 = vmatpush.msra.mxu0 %v275
    %v277 = vand.u32 %v39, 4294901760
    %278 = vmatpush.msra.mxu0 %v277
    %v279 = vand.u32 %v65, 4294901760
    %v280 = vsub.f32 %v65, %v279
    %v281 = vand.u32 %v280, 4294901760
    %282 = vmatmul.f32.gmra.mxu0 %v281
    %v283 = vpop.f32.mrf.mxu0
    %v284 = vadd.f32 %v244, %v283
    %v285 = vand.u32 %v68, 4294901760
    %v286 = vsub.f32 %v68, %v285
    %v287 = vand.u32 %v286, 4294901760
    %288 = vmatmul.f32.gmra.mxu0 %v287
    %v289 = vpop.f32.mrf.mxu0
    %v290 = vadd.f32 %v249, %v289
    %291 = vdwg.mxu0
    %292 = vmatpush.msra.mxu0 0.0
    %293 = vmatpush.msra.mxu0 0.0
    %294 = vmatpush.msra.mxu0 0.0
    %295 = vmatpush.msra.mxu0 0.0
    %v296 = vand.u32 %v61, 4294901760
    %v297 = vsub.f32 %v61, %v296
    %v298 = vand.u32 %v297, 4294901760
    %299 = vmatpush.msra.mxu0 %v298
    %v300 = vand.u32 %v59, 4294901760
    %v301 = vsub.f32 %v59, %v300
    %v302 = vand.u32 %v301, 4294901760
    %303 = vmatpush.msra.mxu0 %v302
    %v304 = vand.u32 %v57, 4294901760
    %v305 = vsub.f32 %v57, %v304
    %v306 = vand.u32 %v305, 4294901760
    %307 = vmatpush.msra.mxu0 %v306
    %v308 = vand.u32 %v55, 4294901760
    %v309 = vsub.f32 %v55, %v308
    %v310 = vand.u32 %v309, 4294901760
    %311 = vmatpush.msra.mxu0 %v310
    %v312 = vand.u32 %v53, 4294901760
    %v313 = vsub.f32 %v53, %v312
    %v314 = vand.u32 %v313, 4294901760
    %315 = vmatpush.msra.mxu0 %v314
    %v316 = vand.u32 %v51, 4294901760
    %v317 = vsub.f32 %v51, %v316
    %v318 = vand.u32 %v317, 4294901760
    %319 = vmatpush.msra.mxu0 %v318
    %v320 = vand.u32 %v49, 4294901760
    %v321 = vsub.f32 %v49, %v320
    %v322 = vand.u32 %v321, 4294901760
    %323 = vmatpush.msra.mxu0 %v322
    %v324 = vand.u32 %v47, 4294901760
    %v325 = vsub.f32 %v47, %v324
    %v326 = vand.u32 %v325, 4294901760
    %327 = vmatpush.msra.mxu0 %v326
    %v328 = vand.u32 %v45, 4294901760
    %v329 = vsub.f32 %v45, %v328
    %v330 = vand.u32 %v329, 4294901760
    %331 = vmatpush.msra.mxu0 %v330
    %v332 = vand.u32 %v43, 4294901760
    %v333 = vsub.f32 %v43, %v332
    %v334 = vand.u32 %v333, 4294901760
    %335 = vmatpush.msra.mxu0 %v334
    %v336 = vand.u32 %v41, 4294901760
    %v337 = vsub.f32 %v41, %v336
    %v338 = vand.u32 %v337, 4294901760
    %339 = vmatpush.msra.mxu0 %v338
    %v340 = vand.u32 %v39, 4294901760
    %v341 = vsub.f32 %v39, %v340
    %v342 = vand.u32 %v341, 4294901760
    %343 = vmatpush.msra.mxu0 %v342
    %v344 = vand.u32 %v65, 4294901760
    %345 = vmatmul.f32.gmra.mxu0 %v344
    %v346 = vpop.f32.mrf.mxu0
    %v347 = vadd.f32 %v284, %v346
    %v348 = vand.u32 %v68, 4294901760
    %349 = vmatmul.f32.gmra.mxu0 %v348
    %v350 = vpop.f32.mrf.mxu0
    %v351 = vadd.f32 %v290, %v350
    %352 = vdwg.mxu0
    %353 = vmatpush.msra.mxu0 0.0
    %354 = vmatpush.msra.mxu0 0.0
    %355 = vmatpush.msra.mxu0 0.0
    %356 = vmatpush.msra.mxu0 0.0
    %v357 = vand.u32 %v61, 4294901760
    %358 = vmatpush.msra.mxu0 %v357
    %v359 = vand.u32 %v59, 4294901760
    %360 = vmatpush.msra.mxu0 %v359
    %v361 = vand.u32 %v57, 4294901760
    %362 = vmatpush.msra.mxu0 %v361
    %v363 = vand.u32 %v55, 4294901760
    %364 = vmatpush.msra.mxu0 %v363
    %v365 = vand.u32 %v53, 4294901760
    %366 = vmatpush.msra.mxu0 %v365
    %v367 = vand.u32 %v51, 4294901760
    %368 = vmatpush.msra.mxu0 %v367
    %v369 = vand.u32 %v49, 4294901760
    %370 = vmatpush.msra.mxu0 %v369
    %v371 = vand.u32 %v47, 4294901760
    %372 = vmatpush.msra.mxu0 %v371
    %v373 = vand.u32 %v45, 4294901760
    %374 = vmatpush.msra.mxu0 %v373
    %v375 = vand.u32 %v43, 4294901760
    %376 = vmatpush.msra.mxu0 %v375
    %v377 = vand.u32 %v41, 4294901760
    %378 = vmatpush.msra.mxu0 %v377
    %v379 = vand.u32 %v39, 4294901760
    %380 = vmatpush.msra.mxu0 %v379
    %v381 = vand.u32 %v65, 4294901760
    %382 = vmatmul.f32.gmra.mxu0 %v381
    %v383 = vpop.f32.mrf.mxu0
    %v384 = vadd.f32 %v347, %v383
    %v385 = vand.u32 %v68, 4294901760
    %386 = vmatmul.f32.gmra.mxu0 %v385
    %v387 = vpop.f32.mrf.mxu0
    %v388 = vadd.f32 %v351, %v387
    %389 = vdwg.mxu0
    %390 = vmatpush.msra.mxu0 0.0
    %391 = vmatpush.msra.mxu0 0.0
    %392 = vmatpush.msra.mxu0 0.0
    %393 = vmatpush.msra.mxu0 0.0
    %v394 = vand.u32 %v62, 4294901760
    %395 = vmatpush.msra.mxu0 %v394
    %v396 = vand.u32 %v60, 4294901760
    %397 = vmatpush.msra.mxu0 %v396
    %v398 = vand.u32 %v58, 4294901760
    %399 = vmatpush.msra.mxu0 %v398
    %v400 = vand.u32 %v56, 4294901760
    %401 = vmatpush.msra.mxu0 %v400
    %v402 = vand.u32 %v54, 4294901760
    %403 = vmatpush.msra.mxu0 %v402
    %v404 = vand.u32 %v52, 4294901760
    %405 = vmatpush.msra.mxu0 %v404
    %v406 = vand.u32 %v50, 4294901760
    %407 = vmatpush.msra.mxu0 %v406
    %v408 = vand.u32 %v48, 4294901760
    %409 = vmatpush.msra.mxu0 %v408
    %v410 = vand.u32 %v46, 4294901760
    %411 = vmatpush.msra.mxu0 %v410
    %v412 = vand.u32 %v44, 4294901760
    %413 = vmatpush.msra.mxu0 %v412
    %v414 = vand.u32 %v42, 4294901760
    %415 = vmatpush.msra.mxu0 %v414
    %v416 = vand.u32 %v40, 4294901760
    %417 = vmatpush.msra.mxu0 %v416
    %v418 = vand.u32 %v65, 4294901760
    %v419 = vsub.f32 %v65, %v418
    %v420 = vand.u32 %v419, 4294901760
    %v421 = vsub.f32 %v419, %v420
    %v422 = vand.u32 %v421, 4294901760
    %423 = vmatmul.f32.gmra.mxu0 %v422
    %v424 = vpop.f32.mrf.mxu0
    %v425 = vadd.f32 0.0, %v424
    %v426 = vand.u32 %v68, 4294901760
    %v427 = vsub.f32 %v68, %v426
    %v428 = vand.u32 %v427, 4294901760
    %v429 = vsub.f32 %v427, %v428
    %v430 = vand.u32 %v429, 4294901760
    %431 = vmatmul.f32.gmra.mxu0 %v430
    %v432 = vpop.f32.mrf.mxu0
    %v433 = vadd.f32 0.0, %v432
    %434 = vdwg.mxu0
    %435 = vmatpush.msra.mxu0 0.0
    %436 = vmatpush.msra.mxu0 0.0
    %437 = vmatpush.msra.mxu0 0.0
    %438 = vmatpush.msra.mxu0 0.0
    %v439 = vand.u32 %v62, 4294901760
    %v440 = vsub.f32 %v62, %v439
    %v441 = vand.u32 %v440, 4294901760
    %v442 = vsub.f32 %v440, %v441
    %v443 = vand.u32 %v442, 4294901760
    %444 = vmatpush.msra.mxu0 %v443
    %v445 = vand.u32 %v60, 4294901760
    %v446 = vsub.f32 %v60, %v445
    %v447 = vand.u32 %v446, 4294901760
    %v448 = vsub.f32 %v446, %v447
    %v449 = vand.u32 %v448, 4294901760
    %450 = vmatpush.msra.mxu0 %v449
    %v451 = vand.u32 %v58, 4294901760
    %v452 = vsub.f32 %v58, %v451
    %v453 = vand.u32 %v452, 4294901760
    %v454 = vsub.f32 %v452, %v453
    %v455 = vand.u32 %v454, 4294901760
    %456 = vmatpush.msra.mxu0 %v455
    %v457 = vand.u32 %v56, 4294901760
    %v458 = vsub.f32 %v56, %v457
    %v459 = vand.u32 %v458, 4294901760
    %v460 = vsub.f32 %v458, %v459
    %v461 = vand.u32 %v460, 4294901760
    %462 = vmatpush.msra.mxu0 %v461
    %v463 = vand.u32 %v54, 4294901760
    %v464 = vsub.f32 %v54, %v463
    %v465 = vand.u32 %v464, 4294901760
    %v466 = vsub.f32 %v464, %v465
    %v467 = vand.u32 %v466, 4294901760
    %468 = vmatpush.msra.mxu0 %v467
    %v469 = vand.u32 %v52, 4294901760
    %v470 = vsub.f32 %v52, %v469
    %v471 = vand.u32 %v470, 4294901760
    %v472 = vsub.f32 %v470, %v471
    %v473 = vand.u32 %v472, 4294901760
    %474 = vmatpush.msra.mxu0 %v473
    %v475 = vand.u32 %v50, 4294901760
    %v476 = vsub.f32 %v50, %v475
    %v477 = vand.u32 %v476, 4294901760
    %v478 = vsub.f32 %v476, %v477
    %v479 = vand.u32 %v478, 4294901760
    %480 = vmatpush.msra.mxu0 %v479
    %v481 = vand.u32 %v48, 4294901760
    %v482 = vsub.f32 %v48, %v481
    %v483 = vand.u32 %v482, 4294901760
    %v484 = vsub.f32 %v482, %v483
    %v485 = vand.u32 %v484, 4294901760
    %486 = vmatpush.msra.mxu0 %v485
    %v487 = vand.u32 %v46, 4294901760
    %v488 = vsub.f32 %v46, %v487
    %v489 = vand.u32 %v488, 4294901760
    %v490 = vsub.f32 %v488, %v489
    %v491 = vand.u32 %v490, 4294901760
    %492 = vmatpush.msra.mxu0 %v491
    %v493 = vand.u32 %v44, 4294901760
    %v494 = vsub.f32 %v44, %v493
    %v495 = vand.u32 %v494, 4294901760
    %v496 = vsub.f32 %v494, %v495
    %v497 = vand.u32 %v496, 4294901760
    %498 = vmatpush.msra.mxu0 %v497
    %v499 = vand.u32 %v42, 4294901760
    %v500 = vsub.f32 %v42, %v499
    %v501 = vand.u32 %v500, 4294901760
    %v502 = vsub.f32 %v500, %v501
    %v503 = vand.u32 %v502, 4294901760
    %504 = vmatpush.msra.mxu0 %v503
    %v505 = vand.u32 %v40, 4294901760
    %v506 = vsub.f32 %v40, %v505
    %v507 = vand.u32 %v506, 4294901760
    %v508 = vsub.f32 %v506, %v507
    %v509 = vand.u32 %v508, 4294901760
    %510 = vmatpush.msra.mxu0 %v509
    %v511 = vand.u32 %v65, 4294901760
    %512 = vmatmul.f32.gmra.mxu0 %v511
    %v513 = vpop.f32.mrf.mxu0
    %v514 = vadd.f32 %v425, %v513
    %v515 = vand.u32 %v68, 4294901760
    %516 = vmatmul.f32.gmra.mxu0 %v515
    %v517 = vpop.f32.mrf.mxu0
    %v518 = vadd.f32 %v433, %v517
    %519 = vdwg.mxu0
    %520 = vmatpush.msra.mxu0 0.0
    %521 = vmatpush.msra.mxu0 0.0
    %522 = vmatpush.msra.mxu0 0.0
    %523 = vmatpush.msra.mxu0 0.0
    %v524 = vand.u32 %v62, 4294901760
    %v525 = vsub.f32 %v62, %v524
    %526 = vmatpush.msra.mxu0 %v525
    %v527 = vand.u32 %v60, 4294901760
    %v528 = vsub.f32 %v60, %v527
    %529 = vmatpush.msra.mxu0 %v528
    %v530 = vand.u32 %v58, 4294901760
    %v531 = vsub.f32 %v58, %v530
    %532 = vmatpush.msra.mxu0 %v531
    %v533 = vand.u32 %v56, 4294901760
    %v534 = vsub.f32 %v56, %v533
    %535 = vmatpush.msra.mxu0 %v534
    %v536 = vand.u32 %v54, 4294901760
    %v537 = vsub.f32 %v54, %v536
    %538 = vmatpush.msra.mxu0 %v537
    %v539 = vand.u32 %v52, 4294901760
    %v540 = vsub.f32 %v52, %v539
    %541 = vmatpush.msra.mxu0 %v540
    %v542 = vand.u32 %v50, 4294901760
    %v543 = vsub.f32 %v50, %v542
    %544 = vmatpush.msra.mxu0 %v543
    %v545 = vand.u32 %v48, 4294901760
    %v546 = vsub.f32 %v48, %v545
    %547 = vmatpush.msra.mxu0 %v546
    %v548 = vand.u32 %v46, 4294901760
    %v549 = vsub.f32 %v46, %v548
    %550 = vmatpush.msra.mxu0 %v549
    %v551 = vand.u32 %v44, 4294901760
    %v552 = vsub.f32 %v44, %v551
    %553 = vmatpush.msra.mxu0 %v552
    %v554 = vand.u32 %v42, 4294901760
    %v555 = vsub.f32 %v42, %v554
    %556 = vmatpush.msra.mxu0 %v555
    %v557 = vand.u32 %v40, 4294901760
    %v558 = vsub.f32 %v40, %v557
    %559 = vmatpush.msra.mxu0 %v558
    %v560 = vand.u32 %v65, 4294901760
    %v561 = vsub.f32 %v65, %v560
    %562 = vmatmul.f32.gmra.mxu0 %v561
    %v563 = vpop.f32.mrf.mxu0
    %v564 = vadd.f32 %v514, %v563
    %v565 = vand.u32 %v68, 4294901760
    %v566 = vsub.f32 %v68, %v565
    %567 = vmatmul.f32.gmra.mxu0 %v566
    %v568 = vpop.f32.mrf.mxu0
    %v569 = vadd.f32 %v518, %v568
    %570 = vdwg.mxu0
    %571 = vmatpush.msra.mxu0 0.0
    %572 = vmatpush.msra.mxu0 0.0
    %573 = vmatpush.msra.mxu0 0.0
    %574 = vmatpush.msra.mxu0 0.0
    %v575 = vand.u32 %v62, 4294901760
    %576 = vmatpush.msra.mxu0 %v575
    %v577 = vand.u32 %v60, 4294901760
    %578 = vmatpush.msra.mxu0 %v577
    %v579 = vand.u32 %v58, 4294901760
    %580 = vmatpush.msra.mxu0 %v579
    %v581 = vand.u32 %v56, 4294901760
    %582 = vmatpush.msra.mxu0 %v581
    %v583 = vand.u32 %v54, 4294901760
    %584 = vmatpush.msra.mxu0 %v583
    %v585 = vand.u32 %v52, 4294901760
    %586 = vmatpush.msra.mxu0 %v585
    %v587 = vand.u32 %v50, 4294901760
    %588 = vmatpush.msra.mxu0 %v587
    %v589 = vand.u32 %v48, 4294901760
    %590 = vmatpush.msra.mxu0 %v589
    %v591 = vand.u32 %v46, 4294901760
    %592 = vmatpush.msra.mxu0 %v591
    %v593 = vand.u32 %v44, 4294901760
    %594 = vmatpush.msra.mxu0 %v593
    %v595 = vand.u32 %v42, 4294901760
    %596 = vmatpush.msra.mxu0 %v595
    %v597 = vand.u32 %v40, 4294901760
    %598 = vmatpush.msra.mxu0 %v597
    %v599 = vand.u32 %v65, 4294901760
    %v600 = vsub.f32 %v65, %v599
    %v601 = vand.u32 %v600, 4294901760
    %602 = vmatmul.f32.gmra.mxu0 %v601
    %v603 = vpop.f32.mrf.mxu0
    %v604 = vadd.f32 %v564, %v603
    %v605 = vand.u32 %v68, 4294901760
    %v606 = vsub.f32 %v68, %v605
    %v607 = vand.u32 %v606, 4294901760
    %608 = vmatmul.f32.gmra.mxu0 %v607
    %v609 = vpop.f32.mrf.mxu0
    %v610 = vadd.f32 %v569, %v609
    %611 = vdwg.mxu0
    %612 = vmatpush.msra.mxu0 0.0
    %613 = vmatpush.msra.mxu0 0.0
    %614 = vmatpush.msra.mxu0 0.0
    %615 = vmatpush.msra.mxu0 0.0
    %v616 = vand.u32 %v62, 4294901760
    %v617 = vsub.f32 %v62, %v616
    %v618 = vand.u32 %v617, 4294901760
    %619 = vmatpush.msra.mxu0 %v618
    %v620 = vand.u32 %v60, 4294901760
    %v621 = vsub.f32 %v60, %v620
    %v622 = vand.u32 %v621, 4294901760
    %623 = vmatpush.msra.mxu0 %v622
    %v624 = vand.u32 %v58, 4294901760
    %v625 = vsub.f32 %v58, %v624
    %v626 = vand.u32 %v625, 4294901760
    %627 = vmatpush.msra.mxu0 %v626
    %v628 = vand.u32 %v56, 4294901760
    %v629 = vsub.f32 %v56, %v628
    %v630 = vand.u32 %v629, 4294901760
    %631 = vmatpush.msra.mxu0 %v630
    %v632 = vand.u32 %v54, 4294901760
    %v633 = vsub.f32 %v54, %v632
    %v634 = vand.u32 %v633, 4294901760
    %635 = vmatpush.msra.mxu0 %v634
    %v636 = vand.u32 %v52, 4294901760
    %v637 = vsub.f32 %v52, %v636
    %v638 = vand.u32 %v637, 4294901760
    %639 = vmatpush.msra.mxu0 %v638
    %v640 = vand.u32 %v50, 4294901760
    %v641 = vsub.f32 %v50, %v640
    %v642 = vand.u32 %v641, 4294901760
    %643 = vmatpush.msra.mxu0 %v642
    %v644 = vand.u32 %v48, 4294901760
    %v645 = vsub.f32 %v48, %v644
    %v646 = vand.u32 %v645, 4294901760
    %647 = vmatpush.msra.mxu0 %v646
    %v648 = vand.u32 %v46, 4294901760
    %v649 = vsub.f32 %v46, %v648
    %v650 = vand.u32 %v649, 4294901760
    %651 = vmatpush.msra.mxu0 %v650
    %v652 = vand.u32 %v44, 4294901760
    %v653 = vsub.f32 %v44, %v652
    %v654 = vand.u32 %v653, 4294901760
    %655 = vmatpush.msra.mxu0 %v654
    %v656 = vand.u32 %v42, 4294901760
    %v657 = vsub.f32 %v42, %v656
    %v658 = vand.u32 %v657, 4294901760
    %659 = vmatpush.msra.mxu0 %v658
    %v660 = vand.u32 %v40, 4294901760
    %v661 = vsub.f32 %v40, %v660
    %v662 = vand.u32 %v661, 4294901760
    %663 = vmatpush.msra.mxu0 %v662
    %v664 = vand.u32 %v65, 4294901760
    %665 = vmatmul.f32.gmra.mxu0 %v664
    %v666 = vpop.f32.mrf.mxu0
    %v667 = vadd.f32 %v604, %v666
    %v668 = vand.u32 %v68, 4294901760
    %669 = vmatmul.f32.gmra.mxu0 %v668
    %v670 = vpop.f32.mrf.mxu0
    %v671 = vadd.f32 %v610, %v670
    %672 = vdwg.mxu0
    %673 = vmatpush.msra.mxu0 0.0
    %674 = vmatpush.msra.mxu0 0.0
    %675 = vmatpush.msra.mxu0 0.0
    %676 = vmatpush.msra.mxu0 0.0
    %v677 = vand.u32 %v62, 4294901760
    %678 = vmatpush.msra.mxu0 %v677
    %v679 = vand.u32 %v60, 4294901760
    %680 = vmatpush.msra.mxu0 %v679
    %v681 = vand.u32 %v58, 4294901760
    %682 = vmatpush.msra.mxu0 %v681
    %v683 = vand.u32 %v56, 4294901760
    %684 = vmatpush.msra.mxu0 %v683
    %v685 = vand.u32 %v54, 4294901760
    %686 = vmatpush.msra.mxu0 %v685
    %v687 = vand.u32 %v52, 4294901760
    %688 = vmatpush.msra.mxu0 %v687
    %v689 = vand.u32 %v50, 4294901760
    %690 = vmatpush.msra.mxu0 %v689
    %v691 = vand.u32 %v48, 4294901760
    %692 = vmatpush.msra.mxu0 %v691
    %v693 = vand.u32 %v46, 4294901760
    %694 = vmatpush.msra.mxu0 %v693
    %v695 = vand.u32 %v44, 4294901760
    %696 = vmatpush.msra.mxu0 %v695
    %v697 = vand.u32 %v42, 4294901760
    %698 = vmatpush.msra.mxu0 %v697
    %v699 = vand.u32 %v40, 4294901760
    %700 = vmatpush.msra.mxu0 %v699
    %v701 = vand.u32 %v65, 4294901760
    %702 = vmatmul.f32.gmra.mxu0 %v701
    %v703 = vpop.f32.mrf.mxu0
    %v704 = vadd.f32 %v667, %v703
    %v705 = vand.u32 %v68, 4294901760
    %706 = vmatmul.f32.gmra.mxu0 %v705
    %v707 = vpop.f32.mrf.mxu0
    %v708 = vadd.f32 %v671, %v707
    %709 = vdwg.mxu0
    %v710 = vld [vmem:[%s4] sm:$0x1]
    %v711 = vperm.slane %v710, 0
    %v712 = vadd.f32 %v384, %v711
    %v713 = vadd.f32 %v388, %v711
    %v714 = vlaneseq
    %v715 = vshrl.u32 %v714, 7
    %v716 = vadd.s32 %v715, 8
    %vm717 = vcmp.lt.s32.totalorder %v715, 0
    %v718 = vsub.s32 0, %v715
    %v719 = vsel %vm717, %v718, %v715
    %v720 = vshrl.u32 %v719, 1
    %v721 = vand.u32 %v719, 1
    %v722 = vsub.s32 0, %v721
    %v723 = vsel %vm717, %v722, %v721
    %vm724 = vcmp.lt.s32.totalorder %v716, 0
    %v725 = vsub.s32 0, %v716
    %v726 = vsel %vm724, %v725, %v716
    %v727 = vshrl.u32 %v726, 1
    %v728 = vand.u32 %v726, 1
    %v729 = vsub.s32 0, %v728
    %v730 = vsel %vm724, %v729, %v728
    %vm731 = vcmp.ne.s32.totalorder %v723, 0
    %vm732 = vcmp.ne.s32.totalorder %v730, 0
    %vm733 = vcmp.lt.s32.totalorder %v723, 0
    %vm734 = vcmp.lt.s32.totalorder %v730, 0
    %vm735 = vmand %vm733, %vm731
    %vm736 = vmand %vm734, %vm732
    %v737 = vadd.s32 %v723, 2
    %v738 = vadd.s32 %v730, 2
    %v739 = vsel %vm735, %v737, %v723
    %v740 = vsel %vm736, %v738, %v730
    %v741 = vlaneseq
    %v742 = vand.u32 %v741, 127
    %vm743 = vcmp.lt.s32.totalorder %v742, 0
    %v744 = vsub.s32 0, %v742
    %v745 = vsel %vm743, %v744, %v742
    %v746 = vshrl.u32 %v745, 1
    %v747 = vand.u32 %v745, 1
    %v748 = vsub.s32 0, %v747
    %v749 = vsel %vm743, %v748, %v747
    %vm750 = vcmp.ne.s32.totalorder %v749, 0
    %vm751 = vcmp.lt.s32.totalorder %v749, 0
    %vm752 = vmand %vm751, %vm750
    %v753 = vadd.s32 %v749, 2
    %v754 = vsel %vm752, %v753, %v749
    %vm755 = vcmp.eq.s32.totalorder %v739, %v754
    %vm756 = vcmp.eq.s32.totalorder %v740, %v754
    %v757 = vsel %vm755, 0.0, -1e+30
    %v758 = vsel %vm756, 0.0, -1e+30
    %761 = vrot.lane.b32.xlu0 %v712, 96
    %v762 = vpop.permute.xlu0 %761
    %763 = vrot.lane.b32.xlu0 %v713, 96
    %v764 = vpop.permute.xlu0 %763
    %vm765 = vcmask 64512
    %v766 = vsel %vm765, %v712, 0
    %v768 = vsel %vm765, %v713, 0
    %v770 = vsel %vm765, %v762, 0
    %v772 = vsel %vm765, %v764, 0
    %774 = vmatpush.xpose.msra.mxu0 0.0
    %775 = vmatpush.xpose.msra.mxu0 0.0
    %776 = vmatpush.xpose.msra.mxu0 0.0
    %777 = vmatpush.xpose.msra.mxu0 0.0
    %778 = vmatpush.xpose.msra.mxu0 0.0
    %779 = vmatpush.xpose.msra.mxu0 0.0
    %780 = vmatpush.xpose.msra.mxu0 0.0
    %781 = vmatpush.xpose.msra.mxu0 0.0
    %782 = vmatpush.xpose.msra.mxu0 0.0
    %783 = vmatpush.xpose.msra.mxu0 0.0
    %784 = vmatpush.xpose.msra.mxu0 0.0
    %785 = vmatpush.xpose.msra.mxu0 0.0
    %786 = vmatpush.xpose.msra.mxu0 0.0
    %787 = vmatpush.xpose.msra.mxu0 0.0
    %v788 = vand.u32 %v772, 4294901760
    %789 = vmatpush.xpose.msra.mxu0 %v788
    %v790 = vand.u32 %v770, 4294901760
    %791 = vmatpush.xpose.msra.mxu0 %v790
    %v792 = vand.u32 %v766, 4294901760
    %v793 = vsub.f32 %v766, %v792
    %v794 = vand.u32 %v793, 4294901760
    %v795 = vsub.f32 %v793, %v794
    %v796 = vand.u32 %v795, 4294901760
    %797 = vmatmul.f32.gmra.mxu0 %v796
    %v798 = vpop.f32.mrf.mxu0
    %v799 = vadd.f32 %v757, %v798
    %v800 = vand.u32 %v768, 4294901760
    %v801 = vsub.f32 %v768, %v800
    %v802 = vand.u32 %v801, 4294901760
    %v803 = vsub.f32 %v801, %v802
    %v804 = vand.u32 %v803, 4294901760
    %805 = vmatmul.f32.gmra.mxu0 %v804
    %v806 = vpop.f32.mrf.mxu0
    %v807 = vadd.f32 %v758, %v806
    %808 = vdwg.mxu0
    %809 = vmatpush.xpose.msra.mxu0 0.0
    %810 = vmatpush.xpose.msra.mxu0 0.0
    %811 = vmatpush.xpose.msra.mxu0 0.0
    %812 = vmatpush.xpose.msra.mxu0 0.0
    %813 = vmatpush.xpose.msra.mxu0 0.0
    %814 = vmatpush.xpose.msra.mxu0 0.0
    %815 = vmatpush.xpose.msra.mxu0 0.0
    %816 = vmatpush.xpose.msra.mxu0 0.0
    %817 = vmatpush.xpose.msra.mxu0 0.0
    %818 = vmatpush.xpose.msra.mxu0 0.0
    %819 = vmatpush.xpose.msra.mxu0 0.0
    %820 = vmatpush.xpose.msra.mxu0 0.0
    %821 = vmatpush.xpose.msra.mxu0 0.0
    %822 = vmatpush.xpose.msra.mxu0 0.0
    %v823 = vand.u32 %v772, 4294901760
    %v824 = vsub.f32 %v772, %v823
    %v825 = vand.u32 %v824, 4294901760
    %v826 = vsub.f32 %v824, %v825
    %v827 = vand.u32 %v826, 4294901760
    %828 = vmatpush.xpose.msra.mxu0 %v827
    %v829 = vand.u32 %v770, 4294901760
    %v830 = vsub.f32 %v770, %v829
    %v831 = vand.u32 %v830, 4294901760
    %v832 = vsub.f32 %v830, %v831
    %v833 = vand.u32 %v832, 4294901760
    %834 = vmatpush.xpose.msra.mxu0 %v833
    %v835 = vand.u32 %v766, 4294901760
    %836 = vmatmul.f32.gmra.mxu0 %v835
    %v837 = vpop.f32.mrf.mxu0
    %v838 = vadd.f32 %v799, %v837
    %v839 = vand.u32 %v768, 4294901760
    %840 = vmatmul.f32.gmra.mxu0 %v839
    %v841 = vpop.f32.mrf.mxu0
    %v842 = vadd.f32 %v807, %v841
    %843 = vdwg.mxu0
    %844 = vmatpush.xpose.msra.mxu0 0.0
    %845 = vmatpush.xpose.msra.mxu0 0.0
    %846 = vmatpush.xpose.msra.mxu0 0.0
    %847 = vmatpush.xpose.msra.mxu0 0.0
    %848 = vmatpush.xpose.msra.mxu0 0.0
    %849 = vmatpush.xpose.msra.mxu0 0.0
    %850 = vmatpush.xpose.msra.mxu0 0.0
    %851 = vmatpush.xpose.msra.mxu0 0.0
    %852 = vmatpush.xpose.msra.mxu0 0.0
    %853 = vmatpush.xpose.msra.mxu0 0.0
    %854 = vmatpush.xpose.msra.mxu0 0.0
    %855 = vmatpush.xpose.msra.mxu0 0.0
    %856 = vmatpush.xpose.msra.mxu0 0.0
    %857 = vmatpush.xpose.msra.mxu0 0.0
    %v858 = vand.u32 %v772, 4294901760
    %v859 = vsub.f32 %v772, %v858
    %860 = vmatpush.xpose.msra.mxu0 %v859
    %v861 = vand.u32 %v770, 4294901760
    %v862 = vsub.f32 %v770, %v861
    %863 = vmatpush.xpose.msra.mxu0 %v862
    %v864 = vand.u32 %v766, 4294901760
    %v865 = vsub.f32 %v766, %v864
    %866 = vmatmul.f32.gmra.mxu0 %v865
    %v867 = vpop.f32.mrf.mxu0
    %v868 = vadd.f32 %v838, %v867
    %v869 = vand.u32 %v768, 4294901760
    %v870 = vsub.f32 %v768, %v869
    %871 = vmatmul.f32.gmra.mxu0 %v870
    %v872 = vpop.f32.mrf.mxu0
    %v873 = vadd.f32 %v842, %v872
    %874 = vdwg.mxu0
    %875 = vmatpush.xpose.msra.mxu0 0.0
    %876 = vmatpush.xpose.msra.mxu0 0.0
    %877 = vmatpush.xpose.msra.mxu0 0.0
    %878 = vmatpush.xpose.msra.mxu0 0.0
    %879 = vmatpush.xpose.msra.mxu0 0.0
    %880 = vmatpush.xpose.msra.mxu0 0.0
    %881 = vmatpush.xpose.msra.mxu0 0.0
    %882 = vmatpush.xpose.msra.mxu0 0.0
    %883 = vmatpush.xpose.msra.mxu0 0.0
    %884 = vmatpush.xpose.msra.mxu0 0.0
    %885 = vmatpush.xpose.msra.mxu0 0.0
    %886 = vmatpush.xpose.msra.mxu0 0.0
    %887 = vmatpush.xpose.msra.mxu0 0.0
    %888 = vmatpush.xpose.msra.mxu0 0.0
    %v889 = vand.u32 %v772, 4294901760
    %890 = vmatpush.xpose.msra.mxu0 %v889
    %v891 = vand.u32 %v770, 4294901760
    %892 = vmatpush.xpose.msra.mxu0 %v891
    %v893 = vand.u32 %v766, 4294901760
    %v894 = vsub.f32 %v766, %v893
    %v895 = vand.u32 %v894, 4294901760
    %896 = vmatmul.f32.gmra.mxu0 %v895
    %v897 = vpop.f32.mrf.mxu0
    %v898 = vadd.f32 %v868, %v897
    %v899 = vand.u32 %v768, 4294901760
    %v900 = vsub.f32 %v768, %v899
    %v901 = vand.u32 %v900, 4294901760
    %902 = vmatmul.f32.gmra.mxu0 %v901
    %v903 = vpop.f32.mrf.mxu0
    %v904 = vadd.f32 %v873, %v903
    %905 = vdwg.mxu0
    %906 = vmatpush.xpose.msra.mxu0 0.0
    %907 = vmatpush.xpose.msra.mxu0 0.0
    %908 = vmatpush.xpose.msra.mxu0 0.0
    %909 = vmatpush.xpose.msra.mxu0 0.0
    %910 = vmatpush.xpose.msra.mxu0 0.0
    %911 = vmatpush.xpose.msra.mxu0 0.0
    %912 = vmatpush.xpose.msra.mxu0 0.0
    %913 = vmatpush.xpose.msra.mxu0 0.0
    %914 = vmatpush.xpose.msra.mxu0 0.0
    %915 = vmatpush.xpose.msra.mxu0 0.0
    %916 = vmatpush.xpose.msra.mxu0 0.0
    %917 = vmatpush.xpose.msra.mxu0 0.0
    %918 = vmatpush.xpose.msra.mxu0 0.0
    %919 = vmatpush.xpose.msra.mxu0 0.0
    %v920 = vand.u32 %v772, 4294901760
    %v921 = vsub.f32 %v772, %v920
    %v922 = vand.u32 %v921, 4294901760
    %923 = vmatpush.xpose.msra.mxu0 %v922
    %v924 = vand.u32 %v770, 4294901760
    %v925 = vsub.f32 %v770, %v924
    %v926 = vand.u32 %v925, 4294901760
    %927 = vmatpush.xpose.msra.mxu0 %v926
    %v928 = vand.u32 %v766, 4294901760
    %929 = vmatmul.f32.gmra.mxu0 %v928
    %v930 = vpop.f32.mrf.mxu0
    %v931 = vadd.f32 %v898, %v930
    %v932 = vand.u32 %v768, 4294901760
    %933 = vmatmul.f32.gmra.mxu0 %v932
    %v934 = vpop.f32.mrf.mxu0
    %v935 = vadd.f32 %v904, %v934
    %936 = vdwg.mxu0
    %937 = vmatpush.xpose.msra.mxu0 0.0
    %938 = vmatpush.xpose.msra.mxu0 0.0
    %939 = vmatpush.xpose.msra.mxu0 0.0
    %940 = vmatpush.xpose.msra.mxu0 0.0
    %941 = vmatpush.xpose.msra.mxu0 0.0
    %942 = vmatpush.xpose.msra.mxu0 0.0
    %943 = vmatpush.xpose.msra.mxu0 0.0
    %944 = vmatpush.xpose.msra.mxu0 0.0
    %945 = vmatpush.xpose.msra.mxu0 0.0
    %946 = vmatpush.xpose.msra.mxu0 0.0
    %947 = vmatpush.xpose.msra.mxu0 0.0
    %948 = vmatpush.xpose.msra.mxu0 0.0
    %949 = vmatpush.xpose.msra.mxu0 0.0
    %950 = vmatpush.xpose.msra.mxu0 0.0
    %v951 = vand.u32 %v772, 4294901760
    %952 = vmatpush.xpose.msra.mxu0 %v951
    %v953 = vand.u32 %v770, 4294901760
    %954 = vmatpush.xpose.msra.mxu0 %v953
    %v955 = vand.u32 %v766, 4294901760
    %956 = vmatmul.f32.gmra.mxu0 %v955
    %v957 = vpop.f32.mrf.mxu0
    %v958 = vadd.f32 %v931, %v957
    %v959 = vand.u32 %v768, 4294901760
    %960 = vmatmul.f32.gmra.mxu0 %v959
    %v961 = vpop.f32.mrf.mxu0
    %v962 = vadd.f32 %v935, %v961
    %963 = vdwg.mxu0
    %vm964 = vcmask 130048
    %v965 = vsel %vm964, %v958, -inf
    %966 = vmax.xlane.f32.xlu0 %v965
    %v967 = vpop.xlane.xlu0 %966
    %v968 = vsel %vm964, %v962, -inf
    %969 = vmax.xlane.f32.xlu0 %v968
    %v970 = vpop.xlane.xlu0 %969
    %v971 = vsub.f32 %v958, %v967
    %v972 = vsub.f32 %v962, %v970
    %v973 = vmul.f32 %v971, 1.442695
    %v974 = vpow.pop %v973
    %v975 = vmul.f32 %v972, 1.442695
    %v976 = vpow.pop %v975
    %v977 = vsel %vm964, %v974, 0.0
    %978 = vadd.xlane.f32.xlu0 %v977
    %v979 = vpop.xlane.xlu0 %978
    %v980 = vsel %vm964, %v976, 0.0
    %981 = vadd.xlane.f32.xlu0 %v980
    %v982 = vpop.xlane.xlu0 %981
    %v983 = vrcp.pop %v979
    %v984 = vmul.f32 %v979, %v983
    %v985 = vsub.f32 1.0, %v984
    %v986 = vmul.f32 %v983, %v985
    %v987 = vadd.f32 %v983, %v986
    %vm988 = vweird.f32 %v979
    %vm989 = vweird.f32 %v983
    %vm990 = vmor %vm988, %vm989
    %v991 = vsel %vm990, %v983, %v987
    %v992 = vand.u32 2147483647, %v979
    %vm993 = vcmp.eq.f32.partialorder %v992, 8.507059e+37
    %v994 = vand.u32 %v979, 2147483648
    %v995 = vor.u32 1.1754944e-38, %v994
    %v996 = vsel %vm993, %v995, %v991
    %v997 = vmul.f32 %v974, %v996
    %v998 = vrcp.pop %v982
    %v999 = vmul.f32 %v982, %v998
    %v1000 = vsub.f32 1.0, %v999
    %v1001 = vmul.f32 %v998, %v1000
    %v1002 = vadd.f32 %v998, %v1001
    %vm1003 = vweird.f32 %v982
    %vm1004 = vweird.f32 %v998
    %vm1005 = vmor %vm1003, %vm1004
    %v1006 = vsel %vm1005, %v998, %v1002
    %v1007 = vand.u32 2147483647, %v982
    %vm1008 = vcmp.eq.f32.partialorder %v1007, 8.507059e+37
    %v1009 = vand.u32 %v982, 2147483648
    %v1010 = vor.u32 1.1754944e-38, %v1009
    %v1011 = vsel %vm1008, %v1010, %v1006
    %v1012 = vmul.f32 %v976, %v1011
    %1013 = vrot.lane.b32.xlu0 %v712, 120
    %v1014 = vpop.permute.xlu0 %1013
    %1015 = vrot.lane.b32.xlu0 %v713, 120
    %v1016 = vpop.permute.xlu0 %1015
    %1017 = vrot.lane.b32.xlu0 %v712, 88
    %v1018 = vpop.permute.xlu0 %1017
    %1019 = vrot.lane.b32.xlu0 %v713, 88
    %v1020 = vpop.permute.xlu0 %1019
    %v1021 = vsel %vm765, %v1014, 0
    %v1023 = vsel %vm765, %v1016, 0
    %v1025 = vsel %vm765, %v1018, 0
    %v1027 = vsel %vm765, %v1020, 0
    %1029 = vmatpush.xpose.msra.mxu0 0.0
    %1030 = vmatpush.xpose.msra.mxu0 0.0
    %1031 = vmatpush.xpose.msra.mxu0 0.0
    %1032 = vmatpush.xpose.msra.mxu0 0.0
    %1033 = vmatpush.xpose.msra.mxu0 0.0
    %1034 = vmatpush.xpose.msra.mxu0 0.0
    %1035 = vmatpush.xpose.msra.mxu0 0.0
    %1036 = vmatpush.xpose.msra.mxu0 0.0
    %1037 = vmatpush.xpose.msra.mxu0 0.0
    %1038 = vmatpush.xpose.msra.mxu0 0.0
    %1039 = vmatpush.xpose.msra.mxu0 0.0
    %1040 = vmatpush.xpose.msra.mxu0 0.0
    %1041 = vmatpush.xpose.msra.mxu0 0.0
    %1042 = vmatpush.xpose.msra.mxu0 0.0
    %v1043 = vand.u32 %v1027, 4294901760
    %1044 = vmatpush.xpose.msra.mxu0 %v1043
    %v1045 = vand.u32 %v1025, 4294901760
    %1046 = vmatpush.xpose.msra.mxu0 %v1045
    %v1047 = vand.u32 %v1021, 4294901760
    %v1048 = vsub.f32 %v1021, %v1047
    %v1049 = vand.u32 %v1048, 4294901760
    %v1050 = vsub.f32 %v1048, %v1049
    %v1051 = vand.u32 %v1050, 4294901760
    %1052 = vmatmul.f32.gmra.mxu0 %v1051
    %v1053 = vpop.f32.mrf.mxu0
    %v1054 = vadd.f32 %v757, %v1053
    %v1055 = vand.u32 %v1023, 4294901760
    %v1056 = vsub.f32 %v1023, %v1055
    %v1057 = vand.u32 %v1056, 4294901760
    %v1058 = vsub.f32 %v1056, %v1057
    %v1059 = vand.u32 %v1058, 4294901760
    %1060 = vmatmul.f32.gmra.mxu0 %v1059
    %v1061 = vpop.f32.mrf.mxu0
    %v1062 = vadd.f32 %v758, %v1061
    %1063 = vdwg.mxu0
    %1064 = vmatpush.xpose.msra.mxu0 0.0
    %1065 = vmatpush.xpose.msra.mxu0 0.0
    %1066 = vmatpush.xpose.msra.mxu0 0.0
    %1067 = vmatpush.xpose.msra.mxu0 0.0
    %1068 = vmatpush.xpose.msra.mxu0 0.0
    %1069 = vmatpush.xpose.msra.mxu0 0.0
    %1070 = vmatpush.xpose.msra.mxu0 0.0
    %1071 = vmatpush.xpose.msra.mxu0 0.0
    %1072 = vmatpush.xpose.msra.mxu0 0.0
    %1073 = vmatpush.xpose.msra.mxu0 0.0
    %1074 = vmatpush.xpose.msra.mxu0 0.0
    %1075 = vmatpush.xpose.msra.mxu0 0.0
    %1076 = vmatpush.xpose.msra.mxu0 0.0
    %1077 = vmatpush.xpose.msra.mxu0 0.0
    %v1078 = vand.u32 %v1027, 4294901760
    %v1079 = vsub.f32 %v1027, %v1078
    %v1080 = vand.u32 %v1079, 4294901760
    %v1081 = vsub.f32 %v1079, %v1080
    %v1082 = vand.u32 %v1081, 4294901760
    %1083 = vmatpush.xpose.msra.mxu0 %v1082
    %v1084 = vand.u32 %v1025, 4294901760
    %v1085 = vsub.f32 %v1025, %v1084
    %v1086 = vand.u32 %v1085, 4294901760
    %v1087 = vsub.f32 %v1085, %v1086
    %v1088 = vand.u32 %v1087, 4294901760
    %1089 = vmatpush.xpose.msra.mxu0 %v1088
    %v1090 = vand.u32 %v1021, 4294901760
    %1091 = vmatmul.f32.gmra.mxu0 %v1090
    %v1092 = vpop.f32.mrf.mxu0
    %v1093 = vadd.f32 %v1054, %v1092
    %v1094 = vand.u32 %v1023, 4294901760
    %1095 = vmatmul.f32.gmra.mxu0 %v1094
    %v1096 = vpop.f32.mrf.mxu0
    %v1097 = vadd.f32 %v1062, %v1096
    %1098 = vdwg.mxu0
    %1099 = vmatpush.xpose.msra.mxu0 0.0
    %1100 = vmatpush.xpose.msra.mxu0 0.0
    %1101 = vmatpush.xpose.msra.mxu0 0.0
    %1102 = vmatpush.xpose.msra.mxu0 0.0
    %1103 = vmatpush.xpose.msra.mxu0 0.0
    %1104 = vmatpush.xpose.msra.mxu0 0.0
    %1105 = vmatpush.xpose.msra.mxu0 0.0
    %1106 = vmatpush.xpose.msra.mxu0 0.0
    %1107 = vmatpush.xpose.msra.mxu0 0.0
    %1108 = vmatpush.xpose.msra.mxu0 0.0
    %1109 = vmatpush.xpose.msra.mxu0 0.0
    %1110 = vmatpush.xpose.msra.mxu0 0.0
    %1111 = vmatpush.xpose.msra.mxu0 0.0
    %1112 = vmatpush.xpose.msra.mxu0 0.0
    %v1113 = vand.u32 %v1027, 4294901760
    %v1114 = vsub.f32 %v1027, %v1113
    %1115 = vmatpush.xpose.msra.mxu0 %v1114
    %v1116 = vand.u32 %v1025, 4294901760
    %v1117 = vsub.f32 %v1025, %v1116
    %1118 = vmatpush.xpose.msra.mxu0 %v1117
    %v1119 = vand.u32 %v1021, 4294901760
    %v1120 = vsub.f32 %v1021, %v1119
    %1121 = vmatmul.f32.gmra.mxu0 %v1120
    %v1122 = vpop.f32.mrf.mxu0
    %v1123 = vadd.f32 %v1093, %v1122
    %v1124 = vand.u32 %v1023, 4294901760
    %v1125 = vsub.f32 %v1023, %v1124
    %1126 = vmatmul.f32.gmra.mxu0 %v1125
    %v1127 = vpop.f32.mrf.mxu0
    %v1128 = vadd.f32 %v1097, %v1127
    %1129 = vdwg.mxu0
    %1130 = vmatpush.xpose.msra.mxu0 0.0
    %1131 = vmatpush.xpose.msra.mxu0 0.0
    %1132 = vmatpush.xpose.msra.mxu0 0.0
    %1133 = vmatpush.xpose.msra.mxu0 0.0
    %1134 = vmatpush.xpose.msra.mxu0 0.0
    %1135 = vmatpush.xpose.msra.mxu0 0.0
    %1136 = vmatpush.xpose.msra.mxu0 0.0
    %1137 = vmatpush.xpose.msra.mxu0 0.0
    %1138 = vmatpush.xpose.msra.mxu0 0.0
    %1139 = vmatpush.xpose.msra.mxu0 0.0
    %1140 = vmatpush.xpose.msra.mxu0 0.0
    %1141 = vmatpush.xpose.msra.mxu0 0.0
    %1142 = vmatpush.xpose.msra.mxu0 0.0
    %1143 = vmatpush.xpose.msra.mxu0 0.0
    %v1144 = vand.u32 %v1027, 4294901760
    %1145 = vmatpush.xpose.msra.mxu0 %v1144
    %v1146 = vand.u32 %v1025, 4294901760
    %1147 = vmatpush.xpose.msra.mxu0 %v1146
    %v1148 = vand.u32 %v1021, 4294901760
    %v1149 = vsub.f32 %v1021, %v1148
    %v1150 = vand.u32 %v1149, 4294901760
    %1151 = vmatmul.f32.gmra.mxu0 %v1150
    %v1152 = vpop.f32.mrf.mxu0
    %v1153 = vadd.f32 %v1123, %v1152
    %v1154 = vand.u32 %v1023, 4294901760
    %v1155 = vsub.f32 %v1023, %v1154
    %v1156 = vand.u32 %v1155, 4294901760
    %1157 = vmatmul.f32.gmra.mxu0 %v1156
    %v1158 = vpop.f32.mrf.mxu0
    %v1159 = vadd.f32 %v1128, %v1158
    %1160 = vdwg.mxu0
    %1161 = vmatpush.xpose.msra.mxu0 0.0
    %1162 = vmatpush.xpose.msra.mxu0 0.0
    %1163 = vmatpush.xpose.msra.mxu0 0.0
    %1164 = vmatpush.xpose.msra.mxu0 0.0
    %1165 = vmatpush.xpose.msra.mxu0 0.0
    %1166 = vmatpush.xpose.msra.mxu0 0.0
    %1167 = vmatpush.xpose.msra.mxu0 0.0
    %1168 = vmatpush.xpose.msra.mxu0 0.0
    %1169 = vmatpush.xpose.msra.mxu0 0.0
    %1170 = vmatpush.xpose.msra.mxu0 0.0
    %1171 = vmatpush.xpose.msra.mxu0 0.0
    %1172 = vmatpush.xpose.msra.mxu0 0.0
    %1173 = vmatpush.xpose.msra.mxu0 0.0
    %1174 = vmatpush.xpose.msra.mxu0 0.0
    %v1175 = vand.u32 %v1027, 4294901760
    %v1176 = vsub.f32 %v1027, %v1175
    %v1177 = vand.u32 %v1176, 4294901760
    %1178 = vmatpush.xpose.msra.mxu0 %v1177
    %v1179 = vand.u32 %v1025, 4294901760
    %v1180 = vsub.f32 %v1025, %v1179
    %v1181 = vand.u32 %v1180, 4294901760
    %1182 = vmatpush.xpose.msra.mxu0 %v1181
    %v1183 = vand.u32 %v1021, 4294901760
    %1184 = vmatmul.f32.gmra.mxu0 %v1183
    %v1185 = vpop.f32.mrf.mxu0
    %v1186 = vadd.f32 %v1153, %v1185
    %v1187 = vand.u32 %v1023, 4294901760
    %1188 = vmatmul.f32.gmra.mxu0 %v1187
    %v1189 = vpop.f32.mrf.mxu0
    %v1190 = vadd.f32 %v1159, %v1189
    %1191 = vdwg.mxu0
    %1192 = vmatpush.xpose.msra.mxu0 0.0
    %1193 = vmatpush.xpose.msra.mxu0 0.0
    %1194 = vmatpush.xpose.msra.mxu0 0.0
    %1195 = vmatpush.xpose.msra.mxu0 0.0
    %1196 = vmatpush.xpose.msra.mxu0 0.0
    %1197 = vmatpush.xpose.msra.mxu0 0.0
    %1198 = vmatpush.xpose.msra.mxu0 0.0
    %1199 = vmatpush.xpose.msra.mxu0 0.0
    %1200 = vmatpush.xpose.msra.mxu0 0.0
    %1201 = vmatpush.xpose.msra.mxu0 0.0
    %1202 = vmatpush.xpose.msra.mxu0 0.0
    %1203 = vmatpush.xpose.msra.mxu0 0.0
    %1204 = vmatpush.xpose.msra.mxu0 0.0
    %1205 = vmatpush.xpose.msra.mxu0 0.0
    %v1206 = vand.u32 %v1027, 4294901760
    %1207 = vmatpush.xpose.msra.mxu0 %v1206
    %v1208 = vand.u32 %v1025, 4294901760
    %1209 = vmatpush.xpose.msra.mxu0 %v1208
    %v1210 = vand.u32 %v1021, 4294901760
    %1211 = vmatmul.f32.gmra.mxu0 %v1210
    %v1212 = vpop.f32.mrf.mxu0
    %v1213 = vadd.f32 %v1186, %v1212
    %v1214 = vand.u32 %v1023, 4294901760
    %1215 = vmatmul.f32.gmra.mxu0 %v1214
    %v1216 = vpop.f32.mrf.mxu0
    %v1217 = vadd.f32 %v1190, %v1216
    %1218 = vdwg.mxu0
    %v1219 = vsel %vm964, %v1213, -inf
    %1220 = vmax.xlane.f32.xlu0 %v1219
    %v1221 = vpop.xlane.xlu0 %1220
    %v1222 = vsel %vm964, %v1217, -inf
    %1223 = vmax.xlane.f32.xlu0 %v1222
    %v1224 = vpop.xlane.xlu0 %1223
    %v1225 = vsub.f32 %v1213, %v1221
    %v1226 = vsub.f32 %v1217, %v1224
    %v1227 = vmul.f32 %v1225, 1.442695
    %v1228 = vpow.pop %v1227
    %v1229 = vmul.f32 %v1226, 1.442695
    %v1230 = vpow.pop %v1229
    %v1231 = vsel %vm964, %v1228, 0.0
    %1232 = vadd.xlane.f32.xlu0 %v1231
    %v1233 = vpop.xlane.xlu0 %1232
    %v1234 = vsel %vm964, %v1230, 0.0
    %1235 = vadd.xlane.f32.xlu0 %v1234
    %v1236 = vpop.xlane.xlu0 %1235
    %v1237 = vrcp.pop %v1233
    %v1238 = vmul.f32 %v1233, %v1237
    %v1239 = vsub.f32 1.0, %v1238
    %v1240 = vmul.f32 %v1237, %v1239
    %v1241 = vadd.f32 %v1237, %v1240
    %vm1242 = vweird.f32 %v1233
    %vm1243 = vweird.f32 %v1237
    %vm1244 = vmor %vm1242, %vm1243
    %v1245 = vsel %vm1244, %v1237, %v1241
    %v1246 = vand.u32 2147483647, %v1233
    %vm1247 = vcmp.eq.f32.partialorder %v1246, 8.507059e+37
    %v1248 = vand.u32 %v1233, 2147483648
    %v1249 = vor.u32 1.1754944e-38, %v1248
    %v1250 = vsel %vm1247, %v1249, %v1245
    %v1251 = vmul.f32 %v1228, %v1250
    %v1252 = vrcp.pop %v1236
    %v1253 = vmul.f32 %v1236, %v1252
    %v1254 = vsub.f32 1.0, %v1253
    %v1255 = vmul.f32 %v1252, %v1254
    %v1256 = vadd.f32 %v1252, %v1255
    %vm1257 = vweird.f32 %v1236
    %vm1258 = vweird.f32 %v1252
    %vm1259 = vmor %vm1257, %vm1258
    %v1260 = vsel %vm1259, %v1252, %v1256
    %v1261 = vand.u32 2147483647, %v1236
    %vm1262 = vcmp.eq.f32.partialorder %v1261, 8.507059e+37
    %v1263 = vand.u32 %v1236, 2147483648
    %v1264 = vor.u32 1.1754944e-38, %v1263
    %v1265 = vsel %vm1262, %v1264, %v1260
    %v1266 = vmul.f32 %v1230, %v1265
    %1269 = vrot.lane.b32.xlu0 %v384, 32
    %v1270 = vpop.permute.xlu0 %1269
    %1271 = vrot.lane.b32.xlu0 %v388, 32
    %v1272 = vpop.permute.xlu0 %1271
    %v1276 = vsel %vm964, %v1251, 0
    %v1279 = vsel %vm964, %v1266, 0
    %1281 = vmatpush.msra.mxu0 0.0
    %1282 = vmatpush.msra.mxu0 0.0
    %1283 = vmatpush.msra.mxu0 0.0
    %1284 = vmatpush.msra.mxu0 0.0
    %1285 = vmatpush.msra.mxu0 0.0
    %1286 = vmatpush.msra.mxu0 0.0
    %1287 = vmatpush.msra.mxu0 0.0
    %1288 = vmatpush.msra.mxu0 0.0
    %1289 = vmatpush.msra.mxu0 0.0
    %1290 = vmatpush.msra.mxu0 0.0
    %1291 = vmatpush.msra.mxu0 0.0
    %1292 = vmatpush.msra.mxu0 0.0
    %1293 = vmatpush.msra.mxu0 0.0
    %1294 = vmatpush.msra.mxu0 0.0
    %v1295 = vand.u32 %v1272, 4294901760
    %1296 = vmatpush.msra.mxu0 %v1295
    %v1297 = vand.u32 %v1270, 4294901760
    %1298 = vmatpush.msra.mxu0 %v1297
    %v1299 = vand.u32 %v1276, 4294901760
    %v1300 = vsub.f32 %v1276, %v1299
    %v1301 = vand.u32 %v1300, 4294901760
    %v1302 = vsub.f32 %v1300, %v1301
    %v1303 = vand.u32 %v1302, 4294901760
    %1304 = vmatmul.f32.gmra.mxu0 %v1303
    %v1305 = vpop.f32.mrf.mxu0
    %v1306 = vadd.f32 0.0, %v1305
    %v1307 = vand.u32 %v1279, 4294901760
    %v1308 = vsub.f32 %v1279, %v1307
    %v1309 = vand.u32 %v1308, 4294901760
    %v1310 = vsub.f32 %v1308, %v1309
    %v1311 = vand.u32 %v1310, 4294901760
    %1312 = vmatmul.f32.gmra.mxu0 %v1311
    %v1313 = vpop.f32.mrf.mxu0
    %v1314 = vadd.f32 0.0, %v1313
    %1315 = vdwg.mxu0
    %1316 = vmatpush.msra.mxu0 0.0
    %1317 = vmatpush.msra.mxu0 0.0
    %1318 = vmatpush.msra.mxu0 0.0
    %1319 = vmatpush.msra.mxu0 0.0
    %1320 = vmatpush.msra.mxu0 0.0
    %1321 = vmatpush.msra.mxu0 0.0
    %1322 = vmatpush.msra.mxu0 0.0
    %1323 = vmatpush.msra.mxu0 0.0
    %1324 = vmatpush.msra.mxu0 0.0
    %1325 = vmatpush.msra.mxu0 0.0
    %1326 = vmatpush.msra.mxu0 0.0
    %1327 = vmatpush.msra.mxu0 0.0
    %1328 = vmatpush.msra.mxu0 0.0
    %1329 = vmatpush.msra.mxu0 0.0
    %v1330 = vand.u32 %v1272, 4294901760
    %v1331 = vsub.f32 %v1272, %v1330
    %v1332 = vand.u32 %v1331, 4294901760
    %v1333 = vsub.f32 %v1331, %v1332
    %v1334 = vand.u32 %v1333, 4294901760
    %1335 = vmatpush.msra.mxu0 %v1334
    %v1336 = vand.u32 %v1270, 4294901760
    %v1337 = vsub.f32 %v1270, %v1336
    %v1338 = vand.u32 %v1337, 4294901760
    %v1339 = vsub.f32 %v1337, %v1338
    %v1340 = vand.u32 %v1339, 4294901760
    %1341 = vmatpush.msra.mxu0 %v1340
    %v1342 = vand.u32 %v1276, 4294901760
    %1343 = vmatmul.f32.gmra.mxu0 %v1342
    %v1344 = vpop.f32.mrf.mxu0
    %v1345 = vadd.f32 %v1306, %v1344
    %v1346 = vand.u32 %v1279, 4294901760
    %1347 = vmatmul.f32.gmra.mxu0 %v1346
    %v1348 = vpop.f32.mrf.mxu0
    %v1349 = vadd.f32 %v1314, %v1348
    %1350 = vdwg.mxu0
    %1351 = vmatpush.msra.mxu0 0.0
    %1352 = vmatpush.msra.mxu0 0.0
    %1353 = vmatpush.msra.mxu0 0.0
    %1354 = vmatpush.msra.mxu0 0.0
    %1355 = vmatpush.msra.mxu0 0.0
    %1356 = vmatpush.msra.mxu0 0.0
    %1357 = vmatpush.msra.mxu0 0.0
    %1358 = vmatpush.msra.mxu0 0.0
    %1359 = vmatpush.msra.mxu0 0.0
    %1360 = vmatpush.msra.mxu0 0.0
    %1361 = vmatpush.msra.mxu0 0.0
    %1362 = vmatpush.msra.mxu0 0.0
    %1363 = vmatpush.msra.mxu0 0.0
    %1364 = vmatpush.msra.mxu0 0.0
    %v1365 = vand.u32 %v1272, 4294901760
    %v1366 = vsub.f32 %v1272, %v1365
    %1367 = vmatpush.msra.mxu0 %v1366
    %v1368 = vand.u32 %v1270, 4294901760
    %v1369 = vsub.f32 %v1270, %v1368
    %1370 = vmatpush.msra.mxu0 %v1369
    %v1371 = vand.u32 %v1276, 4294901760
    %v1372 = vsub.f32 %v1276, %v1371
    %1373 = vmatmul.f32.gmra.mxu0 %v1372
    %v1374 = vpop.f32.mrf.mxu0
    %v1375 = vadd.f32 %v1345, %v1374
    %v1376 = vand.u32 %v1279, 4294901760
    %v1377 = vsub.f32 %v1279, %v1376
    %1378 = vmatmul.f32.gmra.mxu0 %v1377
    %v1379 = vpop.f32.mrf.mxu0
    %v1380 = vadd.f32 %v1349, %v1379
    %1381 = vdwg.mxu0
    %1382 = vmatpush.msra.mxu0 0.0
    %1383 = vmatpush.msra.mxu0 0.0
    %1384 = vmatpush.msra.mxu0 0.0
    %1385 = vmatpush.msra.mxu0 0.0
    %1386 = vmatpush.msra.mxu0 0.0
    %1387 = vmatpush.msra.mxu0 0.0
    %1388 = vmatpush.msra.mxu0 0.0
    %1389 = vmatpush.msra.mxu0 0.0
    %1390 = vmatpush.msra.mxu0 0.0
    %1391 = vmatpush.msra.mxu0 0.0
    %1392 = vmatpush.msra.mxu0 0.0
    %1393 = vmatpush.msra.mxu0 0.0
    %1394 = vmatpush.msra.mxu0 0.0
    %1395 = vmatpush.msra.mxu0 0.0
    %v1396 = vand.u32 %v1272, 4294901760
    %1397 = vmatpush.msra.mxu0 %v1396
    %v1398 = vand.u32 %v1270, 4294901760
    %1399 = vmatpush.msra.mxu0 %v1398
    %v1400 = vand.u32 %v1276, 4294901760
    %v1401 = vsub.f32 %v1276, %v1400
    %v1402 = vand.u32 %v1401, 4294901760
    %1403 = vmatmul.f32.gmra.mxu0 %v1402
    %v1404 = vpop.f32.mrf.mxu0
    %v1405 = vadd.f32 %v1375, %v1404
    %v1406 = vand.u32 %v1279, 4294901760
    %v1407 = vsub.f32 %v1279, %v1406
    %v1408 = vand.u32 %v1407, 4294901760
    %1409 = vmatmul.f32.gmra.mxu0 %v1408
    %v1410 = vpop.f32.mrf.mxu0
    %v1411 = vadd.f32 %v1380, %v1410
    %1412 = vdwg.mxu0
    %1413 = vmatpush.msra.mxu0 0.0
    %1414 = vmatpush.msra.mxu0 0.0
    %1415 = vmatpush.msra.mxu0 0.0
    %1416 = vmatpush.msra.mxu0 0.0
    %1417 = vmatpush.msra.mxu0 0.0
    %1418 = vmatpush.msra.mxu0 0.0
    %1419 = vmatpush.msra.mxu0 0.0
    %1420 = vmatpush.msra.mxu0 0.0
    %1421 = vmatpush.msra.mxu0 0.0
    %1422 = vmatpush.msra.mxu0 0.0
    %1423 = vmatpush.msra.mxu0 0.0
    %1424 = vmatpush.msra.mxu0 0.0
    %1425 = vmatpush.msra.mxu0 0.0
    %1426 = vmatpush.msra.mxu0 0.0
    %v1427 = vand.u32 %v1272, 4294901760
    %v1428 = vsub.f32 %v1272, %v1427
    %v1429 = vand.u32 %v1428, 4294901760
    %1430 = vmatpush.msra.mxu0 %v1429
    %v1431 = vand.u32 %v1270, 4294901760
    %v1432 = vsub.f32 %v1270, %v1431
    %v1433 = vand.u32 %v1432, 4294901760
    %1434 = vmatpush.msra.mxu0 %v1433
    %v1435 = vand.u32 %v1276, 4294901760
    %1436 = vmatmul.f32.gmra.mxu0 %v1435
    %v1437 = vpop.f32.mrf.mxu0
    %v1438 = vadd.f32 %v1405, %v1437
    %v1439 = vand.u32 %v1279, 4294901760
    %1440 = vmatmul.f32.gmra.mxu0 %v1439
    %v1441 = vpop.f32.mrf.mxu0
    %v1442 = vadd.f32 %v1411, %v1441
    %1443 = vdwg.mxu0
    %1444 = vmatpush.msra.mxu0 0.0
    %1445 = vmatpush.msra.mxu0 0.0
    %1446 = vmatpush.msra.mxu0 0.0
    %1447 = vmatpush.msra.mxu0 0.0
    %1448 = vmatpush.msra.mxu0 0.0
    %1449 = vmatpush.msra.mxu0 0.0
    %1450 = vmatpush.msra.mxu0 0.0
    %1451 = vmatpush.msra.mxu0 0.0
    %1452 = vmatpush.msra.mxu0 0.0
    %1453 = vmatpush.msra.mxu0 0.0
    %1454 = vmatpush.msra.mxu0 0.0
    %1455 = vmatpush.msra.mxu0 0.0
    %1456 = vmatpush.msra.mxu0 0.0
    %1457 = vmatpush.msra.mxu0 0.0
    %v1458 = vand.u32 %v1272, 4294901760
    %1459 = vmatpush.msra.mxu0 %v1458
    %v1460 = vand.u32 %v1270, 4294901760
    %1461 = vmatpush.msra.mxu0 %v1460
    %v1462 = vand.u32 %v1276, 4294901760
    %1463 = vmatmul.f32.gmra.mxu0 %v1462
    %v1464 = vpop.f32.mrf.mxu0
    %v1465 = vadd.f32 %v1438, %v1464
    %v1466 = vand.u32 %v1279, 4294901760
    %1467 = vmatmul.f32.gmra.mxu0 %v1466
    %v1468 = vpop.f32.mrf.mxu0
    %v1469 = vadd.f32 %v1442, %v1468
    %1470 = vdwg.mxu0
    %1471 = vrot.lane.b32.xlu0 %v384, 64
    %v1472 = vpop.permute.xlu0 %1471
    %1473 = vrot.lane.b32.xlu0 %v388, 64
    %v1474 = vpop.permute.xlu0 %1473
    %v1478 = vsel %vm964, %v997, 0
    %v1481 = vsel %vm964, %v1012, 0
    %1483 = vmatpush.msra.mxu0 0.0
    %1484 = vmatpush.msra.mxu0 0.0
    %1485 = vmatpush.msra.mxu0 0.0
    %1486 = vmatpush.msra.mxu0 0.0
    %1487 = vmatpush.msra.mxu0 0.0
    %1488 = vmatpush.msra.mxu0 0.0
    %1489 = vmatpush.msra.mxu0 0.0
    %1490 = vmatpush.msra.mxu0 0.0
    %1491 = vmatpush.msra.mxu0 0.0
    %1492 = vmatpush.msra.mxu0 0.0
    %1493 = vmatpush.msra.mxu0 0.0
    %1494 = vmatpush.msra.mxu0 0.0
    %1495 = vmatpush.msra.mxu0 0.0
    %1496 = vmatpush.msra.mxu0 0.0
    %v1497 = vand.u32 %v1474, 4294901760
    %1498 = vmatpush.msra.mxu0 %v1497
    %v1499 = vand.u32 %v1472, 4294901760
    %1500 = vmatpush.msra.mxu0 %v1499
    %v1501 = vand.u32 %v1478, 4294901760
    %v1502 = vsub.f32 %v1478, %v1501
    %v1503 = vand.u32 %v1502, 4294901760
    %v1504 = vsub.f32 %v1502, %v1503
    %v1505 = vand.u32 %v1504, 4294901760
    %1506 = vmatmul.f32.gmra.mxu0 %v1505
    %v1507 = vpop.f32.mrf.mxu0
    %v1508 = vadd.f32 %v1465, %v1507
    %v1509 = vand.u32 %v1481, 4294901760
    %v1510 = vsub.f32 %v1481, %v1509
    %v1511 = vand.u32 %v1510, 4294901760
    %v1512 = vsub.f32 %v1510, %v1511
    %v1513 = vand.u32 %v1512, 4294901760
    %1514 = vmatmul.f32.gmra.mxu0 %v1513
    %v1515 = vpop.f32.mrf.mxu0
    %v1516 = vadd.f32 %v1469, %v1515
    %1517 = vdwg.mxu0
    %1518 = vmatpush.msra.mxu0 0.0
    %1519 = vmatpush.msra.mxu0 0.0
    %1520 = vmatpush.msra.mxu0 0.0
    %1521 = vmatpush.msra.mxu0 0.0
    %1522 = vmatpush.msra.mxu0 0.0
    %1523 = vmatpush.msra.mxu0 0.0
    %1524 = vmatpush.msra.mxu0 0.0
    %1525 = vmatpush.msra.mxu0 0.0
    %1526 = vmatpush.msra.mxu0 0.0
    %1527 = vmatpush.msra.mxu0 0.0
    %1528 = vmatpush.msra.mxu0 0.0
    %1529 = vmatpush.msra.mxu0 0.0
    %1530 = vmatpush.msra.mxu0 0.0
    %1531 = vmatpush.msra.mxu0 0.0
    %v1532 = vand.u32 %v1474, 4294901760
    %v1533 = vsub.f32 %v1474, %v1532
    %v1534 = vand.u32 %v1533, 4294901760
    %v1535 = vsub.f32 %v1533, %v1534
    %v1536 = vand.u32 %v1535, 4294901760
    %1537 = vmatpush.msra.mxu0 %v1536
    %v1538 = vand.u32 %v1472, 4294901760
    %v1539 = vsub.f32 %v1472, %v1538
    %v1540 = vand.u32 %v1539, 4294901760
    %v1541 = vsub.f32 %v1539, %v1540
    %v1542 = vand.u32 %v1541, 4294901760
    %1543 = vmatpush.msra.mxu0 %v1542
    %v1544 = vand.u32 %v1478, 4294901760
    %1545 = vmatmul.f32.gmra.mxu0 %v1544
    %v1546 = vpop.f32.mrf.mxu0
    %v1547 = vadd.f32 %v1508, %v1546
    %v1548 = vand.u32 %v1481, 4294901760
    %1549 = vmatmul.f32.gmra.mxu0 %v1548
    %v1550 = vpop.f32.mrf.mxu0
    %v1551 = vadd.f32 %v1516, %v1550
    %1552 = vdwg.mxu0
    %1553 = vmatpush.msra.mxu0 0.0
    %1554 = vmatpush.msra.mxu0 0.0
    %1555 = vmatpush.msra.mxu0 0.0
    %1556 = vmatpush.msra.mxu0 0.0
    %1557 = vmatpush.msra.mxu0 0.0
    %1558 = vmatpush.msra.mxu0 0.0
    %1559 = vmatpush.msra.mxu0 0.0
    %1560 = vmatpush.msra.mxu0 0.0
    %1561 = vmatpush.msra.mxu0 0.0
    %1562 = vmatpush.msra.mxu0 0.0
    %1563 = vmatpush.msra.mxu0 0.0
    %1564 = vmatpush.msra.mxu0 0.0
    %1565 = vmatpush.msra.mxu0 0.0
    %1566 = vmatpush.msra.mxu0 0.0
    %v1567 = vand.u32 %v1474, 4294901760
    %v1568 = vsub.f32 %v1474, %v1567
    %1569 = vmatpush.msra.mxu0 %v1568
    %v1570 = vand.u32 %v1472, 4294901760
    %v1571 = vsub.f32 %v1472, %v1570
    %1572 = vmatpush.msra.mxu0 %v1571
    %v1573 = vand.u32 %v1478, 4294901760
    %v1574 = vsub.f32 %v1478, %v1573
    %1575 = vmatmul.f32.gmra.mxu0 %v1574
    %v1576 = vpop.f32.mrf.mxu0
    %v1577 = vadd.f32 %v1547, %v1576
    %v1578 = vand.u32 %v1481, 4294901760
    %v1579 = vsub.f32 %v1481, %v1578
    %1580 = vmatmul.f32.gmra.mxu0 %v1579
    %v1581 = vpop.f32.mrf.mxu0
    %v1582 = vadd.f32 %v1551, %v1581
    %1583 = vdwg.mxu0
    %1584 = vmatpush.msra.mxu0 0.0
    %1585 = vmatpush.msra.mxu0 0.0
    %1586 = vmatpush.msra.mxu0 0.0
    %1587 = vmatpush.msra.mxu0 0.0
    %1588 = vmatpush.msra.mxu0 0.0
    %1589 = vmatpush.msra.mxu0 0.0
    %1590 = vmatpush.msra.mxu0 0.0
    %1591 = vmatpush.msra.mxu0 0.0
    %1592 = vmatpush.msra.mxu0 0.0
    %1593 = vmatpush.msra.mxu0 0.0
    %1594 = vmatpush.msra.mxu0 0.0
    %1595 = vmatpush.msra.mxu0 0.0
    %1596 = vmatpush.msra.mxu0 0.0
    %1597 = vmatpush.msra.mxu0 0.0
    %v1598 = vand.u32 %v1474, 4294901760
    %1599 = vmatpush.msra.mxu0 %v1598
    %v1600 = vand.u32 %v1472, 4294901760
    %1601 = vmatpush.msra.mxu0 %v1600
    %v1602 = vand.u32 %v1478, 4294901760
    %v1603 = vsub.f32 %v1478, %v1602
    %v1604 = vand.u32 %v1603, 4294901760
    %1605 = vmatmul.f32.gmra.mxu0 %v1604
    %v1606 = vpop.f32.mrf.mxu0
    %v1607 = vadd.f32 %v1577, %v1606
    %v1608 = vand.u32 %v1481, 4294901760
    %v1609 = vsub.f32 %v1481, %v1608
    %v1610 = vand.u32 %v1609, 4294901760
    %1611 = vmatmul.f32.gmra.mxu0 %v1610
    %v1612 = vpop.f32.mrf.mxu0
    %v1613 = vadd.f32 %v1582, %v1612
    %1614 = vdwg.mxu0
    %1615 = vmatpush.msra.mxu0 0.0
    %1616 = vmatpush.msra.mxu0 0.0
    %1617 = vmatpush.msra.mxu0 0.0
    %1618 = vmatpush.msra.mxu0 0.0
    %1619 = vmatpush.msra.mxu0 0.0
    %1620 = vmatpush.msra.mxu0 0.0
    %1621 = vmatpush.msra.mxu0 0.0
    %1622 = vmatpush.msra.mxu0 0.0
    %1623 = vmatpush.msra.mxu0 0.0
    %1624 = vmatpush.msra.mxu0 0.0
    %1625 = vmatpush.msra.mxu0 0.0
    %1626 = vmatpush.msra.mxu0 0.0
    %1627 = vmatpush.msra.mxu0 0.0
    %1628 = vmatpush.msra.mxu0 0.0
    %v1629 = vand.u32 %v1474, 4294901760
    %v1630 = vsub.f32 %v1474, %v1629
    %v1631 = vand.u32 %v1630, 4294901760
    %1632 = vmatpush.msra.mxu0 %v1631
    %v1633 = vand.u32 %v1472, 4294901760
    %v1634 = vsub.f32 %v1472, %v1633
    %v1635 = vand.u32 %v1634, 4294901760
    %1636 = vmatpush.msra.mxu0 %v1635
    %v1637 = vand.u32 %v1478, 4294901760
    %1638 = vmatmul.f32.gmra.mxu0 %v1637
    %v1639 = vpop.f32.mrf.mxu0
    %v1640 = vadd.f32 %v1607, %v1639
    %v1641 = vand.u32 %v1481, 4294901760
    %1642 = vmatmul.f32.gmra.mxu0 %v1641
    %v1643 = vpop.f32.mrf.mxu0
    %v1644 = vadd.f32 %v1613, %v1643
    %1645 = vdwg.mxu0
    %1646 = vmatpush.msra.mxu0 0.0
    %1647 = vmatpush.msra.mxu0 0.0
    %1648 = vmatpush.msra.mxu0 0.0
    %1649 = vmatpush.msra.mxu0 0.0
    %1650 = vmatpush.msra.mxu0 0.0
    %1651 = vmatpush.msra.mxu0 0.0
    %1652 = vmatpush.msra.mxu0 0.0
    %1653 = vmatpush.msra.mxu0 0.0
    %1654 = vmatpush.msra.mxu0 0.0
    %1655 = vmatpush.msra.mxu0 0.0
    %1656 = vmatpush.msra.mxu0 0.0
    %1657 = vmatpush.msra.mxu0 0.0
    %1658 = vmatpush.msra.mxu0 0.0
    %1659 = vmatpush.msra.mxu0 0.0
    %v1660 = vand.u32 %v1474, 4294901760
    %1661 = vmatpush.msra.mxu0 %v1660
    %v1662 = vand.u32 %v1472, 4294901760
    %1663 = vmatpush.msra.mxu0 %v1662
    %v1664 = vand.u32 %v1478, 4294901760
    %1665 = vmatmul.f32.gmra.mxu0 %v1664
    %v1666 = vpop.f32.mrf.mxu0
    %v1667 = vadd.f32 %v1640, %v1666
    %v1668 = vand.u32 %v1481, 4294901760
    %1669 = vmatmul.f32.gmra.mxu0 %v1668
    %v1670 = vpop.f32.mrf.mxu0
    %v1671 = vadd.f32 %v1644, %v1670
    %1672 = vdwg.mxu0
    %1673 = vrot.lane.b32.xlu0 %v712, 112
    %v1674 = vpop.permute.xlu0 %1673
    %1675 = vrot.lane.b32.xlu0 %v713, 112
    %v1676 = vpop.permute.xlu0 %1675
    %1677 = vrot.lane.b32.xlu0 %v712, 80
    %v1678 = vpop.permute.xlu0 %1677
    %1679 = vrot.lane.b32.xlu0 %v713, 80
    %v1680 = vpop.permute.xlu0 %1679
    %v1681 = vsel %vm765, %v1674, 0
    %v1683 = vsel %vm765, %v1676, 0
    %v1685 = vsel %vm765, %v1678, 0
    %v1687 = vsel %vm765, %v1680, 0
    %1689 = vmatpush.xpose.msra.mxu0 0.0
    %1690 = vmatpush.xpose.msra.mxu0 0.0
    %1691 = vmatpush.xpose.msra.mxu0 0.0
    %1692 = vmatpush.xpose.msra.mxu0 0.0
    %1693 = vmatpush.xpose.msra.mxu0 0.0
    %1694 = vmatpush.xpose.msra.mxu0 0.0
    %1695 = vmatpush.xpose.msra.mxu0 0.0
    %1696 = vmatpush.xpose.msra.mxu0 0.0
    %1697 = vmatpush.xpose.msra.mxu0 0.0
    %1698 = vmatpush.xpose.msra.mxu0 0.0
    %1699 = vmatpush.xpose.msra.mxu0 0.0
    %1700 = vmatpush.xpose.msra.mxu0 0.0
    %1701 = vmatpush.xpose.msra.mxu0 0.0
    %1702 = vmatpush.xpose.msra.mxu0 0.0
    %v1703 = vand.u32 %v1687, 4294901760
    %1704 = vmatpush.xpose.msra.mxu0 %v1703
    %v1705 = vand.u32 %v1685, 4294901760
    %1706 = vmatpush.xpose.msra.mxu0 %v1705
    %v1707 = vand.u32 %v1681, 4294901760
    %v1708 = vsub.f32 %v1681, %v1707
    %v1709 = vand.u32 %v1708, 4294901760
    %v1710 = vsub.f32 %v1708, %v1709
    %v1711 = vand.u32 %v1710, 4294901760
    %1712 = vmatmul.f32.gmra.mxu0 %v1711
    %v1713 = vpop.f32.mrf.mxu0
    %v1714 = vadd.f32 %v757, %v1713
    %v1715 = vand.u32 %v1683, 4294901760
    %v1716 = vsub.f32 %v1683, %v1715
    %v1717 = vand.u32 %v1716, 4294901760
    %v1718 = vsub.f32 %v1716, %v1717
    %v1719 = vand.u32 %v1718, 4294901760
    %1720 = vmatmul.f32.gmra.mxu0 %v1719
    %v1721 = vpop.f32.mrf.mxu0
    %v1722 = vadd.f32 %v758, %v1721
    %1723 = vdwg.mxu0
    %1724 = vmatpush.xpose.msra.mxu0 0.0
    %1725 = vmatpush.xpose.msra.mxu0 0.0
    %1726 = vmatpush.xpose.msra.mxu0 0.0
    %1727 = vmatpush.xpose.msra.mxu0 0.0
    %1728 = vmatpush.xpose.msra.mxu0 0.0
    %1729 = vmatpush.xpose.msra.mxu0 0.0
    %1730 = vmatpush.xpose.msra.mxu0 0.0
    %1731 = vmatpush.xpose.msra.mxu0 0.0
    %1732 = vmatpush.xpose.msra.mxu0 0.0
    %1733 = vmatpush.xpose.msra.mxu0 0.0
    %1734 = vmatpush.xpose.msra.mxu0 0.0
    %1735 = vmatpush.xpose.msra.mxu0 0.0
    %1736 = vmatpush.xpose.msra.mxu0 0.0
    %1737 = vmatpush.xpose.msra.mxu0 0.0
    %v1738 = vand.u32 %v1687, 4294901760
    %v1739 = vsub.f32 %v1687, %v1738
    %v1740 = vand.u32 %v1739, 4294901760
    %v1741 = vsub.f32 %v1739, %v1740
    %v1742 = vand.u32 %v1741, 4294901760
    %1743 = vmatpush.xpose.msra.mxu0 %v1742
    %v1744 = vand.u32 %v1685, 4294901760
    %v1745 = vsub.f32 %v1685, %v1744
    %v1746 = vand.u32 %v1745, 4294901760
    %v1747 = vsub.f32 %v1745, %v1746
    %v1748 = vand.u32 %v1747, 4294901760
    %1749 = vmatpush.xpose.msra.mxu0 %v1748
    %v1750 = vand.u32 %v1681, 4294901760
    %1751 = vmatmul.f32.gmra.mxu0 %v1750
    %v1752 = vpop.f32.mrf.mxu0
    %v1753 = vadd.f32 %v1714, %v1752
    %v1754 = vand.u32 %v1683, 4294901760
    %1755 = vmatmul.f32.gmra.mxu0 %v1754
    %v1756 = vpop.f32.mrf.mxu0
    %v1757 = vadd.f32 %v1722, %v1756
    %1758 = vdwg.mxu0
    %1759 = vmatpush.xpose.msra.mxu0 0.0
    %1760 = vmatpush.xpose.msra.mxu0 0.0
    %1761 = vmatpush.xpose.msra.mxu0 0.0
    %1762 = vmatpush.xpose.msra.mxu0 0.0
    %1763 = vmatpush.xpose.msra.mxu0 0.0
    %1764 = vmatpush.xpose.msra.mxu0 0.0
    %1765 = vmatpush.xpose.msra.mxu0 0.0
    %1766 = vmatpush.xpose.msra.mxu0 0.0
    %1767 = vmatpush.xpose.msra.mxu0 0.0
    %1768 = vmatpush.xpose.msra.mxu0 0.0
    %1769 = vmatpush.xpose.msra.mxu0 0.0
    %1770 = vmatpush.xpose.msra.mxu0 0.0
    %1771 = vmatpush.xpose.msra.mxu0 0.0
    %1772 = vmatpush.xpose.msra.mxu0 0.0
    %v1773 = vand.u32 %v1687, 4294901760
    %v1774 = vsub.f32 %v1687, %v1773
    %1775 = vmatpush.xpose.msra.mxu0 %v1774
    %v1776 = vand.u32 %v1685, 4294901760
    %v1777 = vsub.f32 %v1685, %v1776
    %1778 = vmatpush.xpose.msra.mxu0 %v1777
    %v1779 = vand.u32 %v1681, 4294901760
    %v1780 = vsub.f32 %v1681, %v1779
    %1781 = vmatmul.f32.gmra.mxu0 %v1780
    %v1782 = vpop.f32.mrf.mxu0
    %v1783 = vadd.f32 %v1753, %v1782
    %v1784 = vand.u32 %v1683, 4294901760
    %v1785 = vsub.f32 %v1683, %v1784
    %1786 = vmatmul.f32.gmra.mxu0 %v1785
    %v1787 = vpop.f32.mrf.mxu0
    %v1788 = vadd.f32 %v1757, %v1787
    %1789 = vdwg.mxu0
    %1790 = vmatpush.xpose.msra.mxu0 0.0
    %1791 = vmatpush.xpose.msra.mxu0 0.0
    %1792 = vmatpush.xpose.msra.mxu0 0.0
    %1793 = vmatpush.xpose.msra.mxu0 0.0
    %1794 = vmatpush.xpose.msra.mxu0 0.0
    %1795 = vmatpush.xpose.msra.mxu0 0.0
    %1796 = vmatpush.xpose.msra.mxu0 0.0
    %1797 = vmatpush.xpose.msra.mxu0 0.0
    %1798 = vmatpush.xpose.msra.mxu0 0.0
    %1799 = vmatpush.xpose.msra.mxu0 0.0
    %1800 = vmatpush.xpose.msra.mxu0 0.0
    %1801 = vmatpush.xpose.msra.mxu0 0.0
    %1802 = vmatpush.xpose.msra.mxu0 0.0
    %1803 = vmatpush.xpose.msra.mxu0 0.0
    %v1804 = vand.u32 %v1687, 4294901760
    %1805 = vmatpush.xpose.msra.mxu0 %v1804
    %v1806 = vand.u32 %v1685, 4294901760
    %1807 = vmatpush.xpose.msra.mxu0 %v1806
    %v1808 = vand.u32 %v1681, 4294901760
    %v1809 = vsub.f32 %v1681, %v1808
    %v1810 = vand.u32 %v1809, 4294901760
    %1811 = vmatmul.f32.gmra.mxu0 %v1810
    %v1812 = vpop.f32.mrf.mxu0
    %v1813 = vadd.f32 %v1783, %v1812
    %v1814 = vand.u32 %v1683, 4294901760
    %v1815 = vsub.f32 %v1683, %v1814
    %v1816 = vand.u32 %v1815, 4294901760
    %1817 = vmatmul.f32.gmra.mxu0 %v1816
    %v1818 = vpop.f32.mrf.mxu0
    %v1819 = vadd.f32 %v1788, %v1818
    %1820 = vdwg.mxu0
    %1821 = vmatpush.xpose.msra.mxu0 0.0
    %1822 = vmatpush.xpose.msra.mxu0 0.0
    %1823 = vmatpush.xpose.msra.mxu0 0.0
    %1824 = vmatpush.xpose.msra.mxu0 0.0
    %1825 = vmatpush.xpose.msra.mxu0 0.0
    %1826 = vmatpush.xpose.msra.mxu0 0.0
    %1827 = vmatpush.xpose.msra.mxu0 0.0
    %1828 = vmatpush.xpose.msra.mxu0 0.0
    %1829 = vmatpush.xpose.msra.mxu0 0.0
    %1830 = vmatpush.xpose.msra.mxu0 0.0
    %1831 = vmatpush.xpose.msra.mxu0 0.0
    %1832 = vmatpush.xpose.msra.mxu0 0.0
    %1833 = vmatpush.xpose.msra.mxu0 0.0
    %1834 = vmatpush.xpose.msra.mxu0 0.0
    %v1835 = vand.u32 %v1687, 4294901760
    %v1836 = vsub.f32 %v1687, %v1835
    %v1837 = vand.u32 %v1836, 4294901760
    %1838 = vmatpush.xpose.msra.mxu0 %v1837
    %v1839 = vand.u32 %v1685, 4294901760
    %v1840 = vsub.f32 %v1685, %v1839
    %v1841 = vand.u32 %v1840, 4294901760
    %1842 = vmatpush.xpose.msra.mxu0 %v1841
    %v1843 = vand.u32 %v1681, 4294901760
    %1844 = vmatmul.f32.gmra.mxu0 %v1843
    %v1845 = vpop.f32.mrf.mxu0
    %v1846 = vadd.f32 %v1813, %v1845
    %v1847 = vand.u32 %v1683, 4294901760
    %1848 = vmatmul.f32.gmra.mxu0 %v1847
    %v1849 = vpop.f32.mrf.mxu0
    %v1850 = vadd.f32 %v1819, %v1849
    %1851 = vdwg.mxu0
    %1852 = vmatpush.xpose.msra.mxu0 0.0
    %1853 = vmatpush.xpose.msra.mxu0 0.0
    %1854 = vmatpush.xpose.msra.mxu0 0.0
    %1855 = vmatpush.xpose.msra.mxu0 0.0
    %1856 = vmatpush.xpose.msra.mxu0 0.0
    %1857 = vmatpush.xpose.msra.mxu0 0.0
    %1858 = vmatpush.xpose.msra.mxu0 0.0
    %1859 = vmatpush.xpose.msra.mxu0 0.0
    %1860 = vmatpush.xpose.msra.mxu0 0.0
    %1861 = vmatpush.xpose.msra.mxu0 0.0
    %1862 = vmatpush.xpose.msra.mxu0 0.0
    %1863 = vmatpush.xpose.msra.mxu0 0.0
    %1864 = vmatpush.xpose.msra.mxu0 0.0
    %1865 = vmatpush.xpose.msra.mxu0 0.0
    %v1866 = vand.u32 %v1687, 4294901760
    %1867 = vmatpush.xpose.msra.mxu0 %v1866
    %v1868 = vand.u32 %v1685, 4294901760
    %1869 = vmatpush.xpose.msra.mxu0 %v1868
    %v1870 = vand.u32 %v1681, 4294901760
    %1871 = vmatmul.f32.gmra.mxu0 %v1870
    %v1872 = vpop.f32.mrf.mxu0
    %v1873 = vadd.f32 %v1846, %v1872
    %v1874 = vand.u32 %v1683, 4294901760
    %1875 = vmatmul.f32.gmra.mxu0 %v1874
    %v1876 = vpop.f32.mrf.mxu0
    %v1877 = vadd.f32 %v1850, %v1876
    %1878 = vdwg.mxu0
    %v1879 = vsel %vm964, %v1873, -inf
    %1880 = vmax.xlane.f32.xlu0 %v1879
    %v1881 = vpop.xlane.xlu0 %1880
    %v1882 = vsel %vm964, %v1877, -inf
    %1883 = vmax.xlane.f32.xlu0 %v1882
    %v1884 = vpop.xlane.xlu0 %1883
    %v1885 = vsub.f32 %v1873, %v1881
    %v1886 = vsub.f32 %v1877, %v1884
    %v1887 = vmul.f32 %v1885, 1.442695
    %v1888 = vpow.pop %v1887
    %v1889 = vmul.f32 %v1886, 1.442695
    %v1890 = vpow.pop %v1889
    %v1891 = vsel %vm964, %v1888, 0.0
    %1892 = vadd.xlane.f32.xlu0 %v1891
    %v1893 = vpop.xlane.xlu0 %1892
    %v1894 = vsel %vm964, %v1890, 0.0
    %1895 = vadd.xlane.f32.xlu0 %v1894
    %v1896 = vpop.xlane.xlu0 %1895
    %v1897 = vrcp.pop %v1893
    %v1898 = vmul.f32 %v1893, %v1897
    %v1899 = vsub.f32 1.0, %v1898
    %v1900 = vmul.f32 %v1897, %v1899
    %v1901 = vadd.f32 %v1897, %v1900
    %vm1902 = vweird.f32 %v1893
    %vm1903 = vweird.f32 %v1897
    %vm1904 = vmor %vm1902, %vm1903
    %v1905 = vsel %vm1904, %v1897, %v1901
    %v1906 = vand.u32 2147483647, %v1893
    %vm1907 = vcmp.eq.f32.partialorder %v1906, 8.507059e+37
    %v1908 = vand.u32 %v1893, 2147483648
    %v1909 = vor.u32 1.1754944e-38, %v1908
    %v1910 = vsel %vm1907, %v1909, %v1905
    %v1911 = vmul.f32 %v1888, %v1910
    %v1912 = vrcp.pop %v1896
    %v1913 = vmul.f32 %v1896, %v1912
    %v1914 = vsub.f32 1.0, %v1913
    %v1915 = vmul.f32 %v1912, %v1914
    %v1916 = vadd.f32 %v1912, %v1915
    %vm1917 = vweird.f32 %v1896
    %vm1918 = vweird.f32 %v1912
    %vm1919 = vmor %vm1917, %vm1918
    %v1920 = vsel %vm1919, %v1912, %v1916
    %v1921 = vand.u32 2147483647, %v1896
    %vm1922 = vcmp.eq.f32.partialorder %v1921, 8.507059e+37
    %v1923 = vand.u32 %v1896, 2147483648
    %v1924 = vor.u32 1.1754944e-38, %v1923
    %v1925 = vsel %vm1922, %v1924, %v1920
    %v1926 = vmul.f32 %v1890, %v1925
    %v1928 = vsel %vm964, %v1911, 0
    %v1931 = vsel %vm964, %v1926, 0
    %1933 = vmatpush.msra.mxu0 0.0
    %1934 = vmatpush.msra.mxu0 0.0
    %1935 = vmatpush.msra.mxu0 0.0
    %1936 = vmatpush.msra.mxu0 0.0
    %1937 = vmatpush.msra.mxu0 0.0
    %1938 = vmatpush.msra.mxu0 0.0
    %1939 = vmatpush.msra.mxu0 0.0
    %1940 = vmatpush.msra.mxu0 0.0
    %1941 = vmatpush.msra.mxu0 0.0
    %1942 = vmatpush.msra.mxu0 0.0
    %1943 = vmatpush.msra.mxu0 0.0
    %1944 = vmatpush.msra.mxu0 0.0
    %1945 = vmatpush.msra.mxu0 0.0
    %1946 = vmatpush.msra.mxu0 0.0
    %v1947 = vand.u32 %v708, 4294901760
    %1948 = vmatpush.msra.mxu0 %v1947
    %v1949 = vand.u32 %v704, 4294901760
    %1950 = vmatpush.msra.mxu0 %v1949
    %v1951 = vand.u32 %v1928, 4294901760
    %v1952 = vsub.f32 %v1928, %v1951
    %v1953 = vand.u32 %v1952, 4294901760
    %v1954 = vsub.f32 %v1952, %v1953
    %v1955 = vand.u32 %v1954, 4294901760
    %1956 = vmatmul.f32.gmra.mxu0 %v1955
    %v1957 = vpop.f32.mrf.mxu0
    %v1958 = vadd.f32 0.0, %v1957
    %v1959 = vand.u32 %v1931, 4294901760
    %v1960 = vsub.f32 %v1931, %v1959
    %v1961 = vand.u32 %v1960, 4294901760
    %v1962 = vsub.f32 %v1960, %v1961
    %v1963 = vand.u32 %v1962, 4294901760
    %1964 = vmatmul.f32.gmra.mxu0 %v1963
    %v1965 = vpop.f32.mrf.mxu0
    %v1966 = vadd.f32 0.0, %v1965
    %1967 = vdwg.mxu0
    %1968 = vmatpush.msra.mxu0 0.0
    %1969 = vmatpush.msra.mxu0 0.0
    %1970 = vmatpush.msra.mxu0 0.0
    %1971 = vmatpush.msra.mxu0 0.0
    %1972 = vmatpush.msra.mxu0 0.0
    %1973 = vmatpush.msra.mxu0 0.0
    %1974 = vmatpush.msra.mxu0 0.0
    %1975 = vmatpush.msra.mxu0 0.0
    %1976 = vmatpush.msra.mxu0 0.0
    %1977 = vmatpush.msra.mxu0 0.0
    %1978 = vmatpush.msra.mxu0 0.0
    %1979 = vmatpush.msra.mxu0 0.0
    %1980 = vmatpush.msra.mxu0 0.0
    %1981 = vmatpush.msra.mxu0 0.0
    %v1982 = vand.u32 %v708, 4294901760
    %v1983 = vsub.f32 %v708, %v1982
    %v1984 = vand.u32 %v1983, 4294901760
    %v1985 = vsub.f32 %v1983, %v1984
    %v1986 = vand.u32 %v1985, 4294901760
    %1987 = vmatpush.msra.mxu0 %v1986
    %v1988 = vand.u32 %v704, 4294901760
    %v1989 = vsub.f32 %v704, %v1988
    %v1990 = vand.u32 %v1989, 4294901760
    %v1991 = vsub.f32 %v1989, %v1990
    %v1992 = vand.u32 %v1991, 4294901760
    %1993 = vmatpush.msra.mxu0 %v1992
    %v1994 = vand.u32 %v1928, 4294901760
    %1995 = vmatmul.f32.gmra.mxu0 %v1994
    %v1996 = vpop.f32.mrf.mxu0
    %v1997 = vadd.f32 %v1958, %v1996
    %v1998 = vand.u32 %v1931, 4294901760
    %1999 = vmatmul.f32.gmra.mxu0 %v1998
    %v2000 = vpop.f32.mrf.mxu0
    %v2001 = vadd.f32 %v1966, %v2000
    %2002 = vdwg.mxu0
    %2003 = vmatpush.msra.mxu0 0.0
    %2004 = vmatpush.msra.mxu0 0.0
    %2005 = vmatpush.msra.mxu0 0.0
    %2006 = vmatpush.msra.mxu0 0.0
    %2007 = vmatpush.msra.mxu0 0.0
    %2008 = vmatpush.msra.mxu0 0.0
    %2009 = vmatpush.msra.mxu0 0.0
    %2010 = vmatpush.msra.mxu0 0.0
    %2011 = vmatpush.msra.mxu0 0.0
    %2012 = vmatpush.msra.mxu0 0.0
    %2013 = vmatpush.msra.mxu0 0.0
    %2014 = vmatpush.msra.mxu0 0.0
    %2015 = vmatpush.msra.mxu0 0.0
    %2016 = vmatpush.msra.mxu0 0.0
    %v2017 = vand.u32 %v708, 4294901760
    %v2018 = vsub.f32 %v708, %v2017
    %2019 = vmatpush.msra.mxu0 %v2018
    %v2020 = vand.u32 %v704, 4294901760
    %v2021 = vsub.f32 %v704, %v2020
    %2022 = vmatpush.msra.mxu0 %v2021
    %v2023 = vand.u32 %v1928, 4294901760
    %v2024 = vsub.f32 %v1928, %v2023
    %2025 = vmatmul.f32.gmra.mxu0 %v2024
    %v2026 = vpop.f32.mrf.mxu0
    %v2027 = vadd.f32 %v1997, %v2026
    %v2028 = vand.u32 %v1931, 4294901760
    %v2029 = vsub.f32 %v1931, %v2028
    %2030 = vmatmul.f32.gmra.mxu0 %v2029
    %v2031 = vpop.f32.mrf.mxu0
    %v2032 = vadd.f32 %v2001, %v2031
    %2033 = vdwg.mxu0
    %2034 = vmatpush.msra.mxu0 0.0
    %2035 = vmatpush.msra.mxu0 0.0
    %2036 = vmatpush.msra.mxu0 0.0
    %2037 = vmatpush.msra.mxu0 0.0
    %2038 = vmatpush.msra.mxu0 0.0
    %2039 = vmatpush.msra.mxu0 0.0
    %2040 = vmatpush.msra.mxu0 0.0
    %2041 = vmatpush.msra.mxu0 0.0
    %2042 = vmatpush.msra.mxu0 0.0
    %2043 = vmatpush.msra.mxu0 0.0
    %2044 = vmatpush.msra.mxu0 0.0
    %2045 = vmatpush.msra.mxu0 0.0
    %2046 = vmatpush.msra.mxu0 0.0
    %2047 = vmatpush.msra.mxu0 0.0
    %v2048 = vand.u32 %v708, 4294901760
    %2049 = vmatpush.msra.mxu0 %v2048
    %v2050 = vand.u32 %v704, 4294901760
    %2051 = vmatpush.msra.mxu0 %v2050
    %v2052 = vand.u32 %v1928, 4294901760
    %v2053 = vsub.f32 %v1928, %v2052
    %v2054 = vand.u32 %v2053, 4294901760
    %2055 = vmatmul.f32.gmra.mxu0 %v2054
    %v2056 = vpop.f32.mrf.mxu0
    %v2057 = vadd.f32 %v2027, %v2056
    %v2058 = vand.u32 %v1931, 4294901760
    %v2059 = vsub.f32 %v1931, %v2058
    %v2060 = vand.u32 %v2059, 4294901760
    %2061 = vmatmul.f32.gmra.mxu0 %v2060
    %v2062 = vpop.f32.mrf.mxu0
    %v2063 = vadd.f32 %v2032, %v2062
    %2064 = vdwg.mxu0
    %2065 = vmatpush.msra.mxu0 0.0
    %2066 = vmatpush.msra.mxu0 0.0
    %2067 = vmatpush.msra.mxu0 0.0
    %2068 = vmatpush.msra.mxu0 0.0
    %2069 = vmatpush.msra.mxu0 0.0
    %2070 = vmatpush.msra.mxu0 0.0
    %2071 = vmatpush.msra.mxu0 0.0
    %2072 = vmatpush.msra.mxu0 0.0
    %2073 = vmatpush.msra.mxu0 0.0
    %2074 = vmatpush.msra.mxu0 0.0
    %2075 = vmatpush.msra.mxu0 0.0
    %2076 = vmatpush.msra.mxu0 0.0
    %2077 = vmatpush.msra.mxu0 0.0
    %2078 = vmatpush.msra.mxu0 0.0
    %v2079 = vand.u32 %v708, 4294901760
    %v2080 = vsub.f32 %v708, %v2079
    %v2081 = vand.u32 %v2080, 4294901760
    %2082 = vmatpush.msra.mxu0 %v2081
    %v2083 = vand.u32 %v704, 4294901760
    %v2084 = vsub.f32 %v704, %v2083
    %v2085 = vand.u32 %v2084, 4294901760
    %2086 = vmatpush.msra.mxu0 %v2085
    %v2087 = vand.u32 %v1928, 4294901760
    %2088 = vmatmul.f32.gmra.mxu0 %v2087
    %v2089 = vpop.f32.mrf.mxu0
    %v2090 = vadd.f32 %v2057, %v2089
    %v2091 = vand.u32 %v1931, 4294901760
    %2092 = vmatmul.f32.gmra.mxu0 %v2091
    %v2093 = vpop.f32.mrf.mxu0
    %v2094 = vadd.f32 %v2063, %v2093
    %2095 = vdwg.mxu0
    %2096 = vmatpush.msra.mxu0 0.0
    %2097 = vmatpush.msra.mxu0 0.0
    %2098 = vmatpush.msra.mxu0 0.0
    %2099 = vmatpush.msra.mxu0 0.0
    %2100 = vmatpush.msra.mxu0 0.0
    %2101 = vmatpush.msra.mxu0 0.0
    %2102 = vmatpush.msra.mxu0 0.0
    %2103 = vmatpush.msra.mxu0 0.0
    %2104 = vmatpush.msra.mxu0 0.0
    %2105 = vmatpush.msra.mxu0 0.0
    %2106 = vmatpush.msra.mxu0 0.0
    %2107 = vmatpush.msra.mxu0 0.0
    %2108 = vmatpush.msra.mxu0 0.0
    %2109 = vmatpush.msra.mxu0 0.0
    %v2110 = vand.u32 %v708, 4294901760
    %2111 = vmatpush.msra.mxu0 %v2110
    %v2112 = vand.u32 %v704, 4294901760
    %2113 = vmatpush.msra.mxu0 %v2112
    %v2114 = vand.u32 %v1928, 4294901760
    %2115 = vmatmul.f32.gmra.mxu0 %v2114
    %v2116 = vpop.f32.mrf.mxu0
    %v2117 = vadd.f32 %v2090, %v2116
    %v2118 = vand.u32 %v1931, 4294901760
    %2119 = vmatmul.f32.gmra.mxu0 %v2118
    %v2120 = vpop.f32.mrf.mxu0
    %v2121 = vadd.f32 %v2094, %v2120
    %2122 = vdwg.mxu0
    %v2123 = vadd.f32 %v1667, %v2117
    %v2124 = vadd.f32 %v1671, %v2121
    %2125 = vrot.lane.b32.xlu0 %v712, 104
    %v2126 = vpop.permute.xlu0 %2125
    %2127 = vrot.lane.b32.xlu0 %v713, 104
    %v2128 = vpop.permute.xlu0 %2127
    %2129 = vrot.lane.b32.xlu0 %v712, 72
    %v2130 = vpop.permute.xlu0 %2129
    %2131 = vrot.lane.b32.xlu0 %v713, 72
    %v2132 = vpop.permute.xlu0 %2131
    %v2133 = vsel %vm765, %v2126, 0
    %v2135 = vsel %vm765, %v2128, 0
    %v2137 = vsel %vm765, %v2130, 0
    %v2139 = vsel %vm765, %v2132, 0
    %2141 = vmatpush.xpose.msra.mxu0 0.0
    %2142 = vmatpush.xpose.msra.mxu0 0.0
    %2143 = vmatpush.xpose.msra.mxu0 0.0
    %2144 = vmatpush.xpose.msra.mxu0 0.0
    %2145 = vmatpush.xpose.msra.mxu0 0.0
    %2146 = vmatpush.xpose.msra.mxu0 0.0
    %2147 = vmatpush.xpose.msra.mxu0 0.0
    %2148 = vmatpush.xpose.msra.mxu0 0.0
    %2149 = vmatpush.xpose.msra.mxu0 0.0
    %2150 = vmatpush.xpose.msra.mxu0 0.0
    %2151 = vmatpush.xpose.msra.mxu0 0.0
    %2152 = vmatpush.xpose.msra.mxu0 0.0
    %2153 = vmatpush.xpose.msra.mxu0 0.0
    %2154 = vmatpush.xpose.msra.mxu0 0.0
    %v2155 = vand.u32 %v2139, 4294901760
    %2156 = vmatpush.xpose.msra.mxu0 %v2155
    %v2157 = vand.u32 %v2137, 4294901760
    %2158 = vmatpush.xpose.msra.mxu0 %v2157
    %v2159 = vand.u32 %v2133, 4294901760
    %v2160 = vsub.f32 %v2133, %v2159
    %v2161 = vand.u32 %v2160, 4294901760
    %v2162 = vsub.f32 %v2160, %v2161
    %v2163 = vand.u32 %v2162, 4294901760
    %2164 = vmatmul.f32.gmra.mxu0 %v2163
    %v2165 = vpop.f32.mrf.mxu0
    %v2166 = vadd.f32 %v757, %v2165
    %v2167 = vand.u32 %v2135, 4294901760
    %v2168 = vsub.f32 %v2135, %v2167
    %v2169 = vand.u32 %v2168, 4294901760
    %v2170 = vsub.f32 %v2168, %v2169
    %v2171 = vand.u32 %v2170, 4294901760
    %2172 = vmatmul.f32.gmra.mxu0 %v2171
    %v2173 = vpop.f32.mrf.mxu0
    %v2174 = vadd.f32 %v758, %v2173
    %2175 = vdwg.mxu0
    %2176 = vmatpush.xpose.msra.mxu0 0.0
    %2177 = vmatpush.xpose.msra.mxu0 0.0
    %2178 = vmatpush.xpose.msra.mxu0 0.0
    %2179 = vmatpush.xpose.msra.mxu0 0.0
    %2180 = vmatpush.xpose.msra.mxu0 0.0
    %2181 = vmatpush.xpose.msra.mxu0 0.0
    %2182 = vmatpush.xpose.msra.mxu0 0.0
    %2183 = vmatpush.xpose.msra.mxu0 0.0
    %2184 = vmatpush.xpose.msra.mxu0 0.0
    %2185 = vmatpush.xpose.msra.mxu0 0.0
    %2186 = vmatpush.xpose.msra.mxu0 0.0
    %2187 = vmatpush.xpose.msra.mxu0 0.0
    %2188 = vmatpush.xpose.msra.mxu0 0.0
    %2189 = vmatpush.xpose.msra.mxu0 0.0
    %v2190 = vand.u32 %v2139, 4294901760
    %v2191 = vsub.f32 %v2139, %v2190
    %v2192 = vand.u32 %v2191, 4294901760
    %v2193 = vsub.f32 %v2191, %v2192
    %v2194 = vand.u32 %v2193, 4294901760
    %2195 = vmatpush.xpose.msra.mxu0 %v2194
    %v2196 = vand.u32 %v2137, 4294901760
    %v2197 = vsub.f32 %v2137, %v2196
    %v2198 = vand.u32 %v2197, 4294901760
    %v2199 = vsub.f32 %v2197, %v2198
    %v2200 = vand.u32 %v2199, 4294901760
    %2201 = vmatpush.xpose.msra.mxu0 %v2200
    %v2202 = vand.u32 %v2133, 4294901760
    %2203 = vmatmul.f32.gmra.mxu0 %v2202
    %v2204 = vpop.f32.mrf.mxu0
    %v2205 = vadd.f32 %v2166, %v2204
    %v2206 = vand.u32 %v2135, 4294901760
    %2207 = vmatmul.f32.gmra.mxu0 %v2206
    %v2208 = vpop.f32.mrf.mxu0
    %v2209 = vadd.f32 %v2174, %v2208
    %2210 = vdwg.mxu0
    %2211 = vmatpush.xpose.msra.mxu0 0.0
    %2212 = vmatpush.xpose.msra.mxu0 0.0
    %2213 = vmatpush.xpose.msra.mxu0 0.0
    %2214 = vmatpush.xpose.msra.mxu0 0.0
    %2215 = vmatpush.xpose.msra.mxu0 0.0
    %2216 = vmatpush.xpose.msra.mxu0 0.0
    %2217 = vmatpush.xpose.msra.mxu0 0.0
    %2218 = vmatpush.xpose.msra.mxu0 0.0
    %2219 = vmatpush.xpose.msra.mxu0 0.0
    %2220 = vmatpush.xpose.msra.mxu0 0.0
    %2221 = vmatpush.xpose.msra.mxu0 0.0
    %2222 = vmatpush.xpose.msra.mxu0 0.0
    %2223 = vmatpush.xpose.msra.mxu0 0.0
    %2224 = vmatpush.xpose.msra.mxu0 0.0
    %v2225 = vand.u32 %v2139, 4294901760
    %v2226 = vsub.f32 %v2139, %v2225
    %2227 = vmatpush.xpose.msra.mxu0 %v2226
    %v2228 = vand.u32 %v2137, 4294901760
    %v2229 = vsub.f32 %v2137, %v2228
    %2230 = vmatpush.xpose.msra.mxu0 %v2229
    %v2231 = vand.u32 %v2133, 4294901760
    %v2232 = vsub.f32 %v2133, %v2231
    %2233 = vmatmul.f32.gmra.mxu0 %v2232
    %v2234 = vpop.f32.mrf.mxu0
    %v2235 = vadd.f32 %v2205, %v2234
    %v2236 = vand.u32 %v2135, 4294901760
    %v2237 = vsub.f32 %v2135, %v2236
    %2238 = vmatmul.f32.gmra.mxu0 %v2237
    %v2239 = vpop.f32.mrf.mxu0
    %v2240 = vadd.f32 %v2209, %v2239
    %2241 = vdwg.mxu0
    %2242 = vmatpush.xpose.msra.mxu0 0.0
    %2243 = vmatpush.xpose.msra.mxu0 0.0
    %2244 = vmatpush.xpose.msra.mxu0 0.0
    %2245 = vmatpush.xpose.msra.mxu0 0.0
    %2246 = vmatpush.xpose.msra.mxu0 0.0
    %2247 = vmatpush.xpose.msra.mxu0 0.0
    %2248 = vmatpush.xpose.msra.mxu0 0.0
    %2249 = vmatpush.xpose.msra.mxu0 0.0
    %2250 = vmatpush.xpose.msra.mxu0 0.0
    %2251 = vmatpush.xpose.msra.mxu0 0.0
    %2252 = vmatpush.xpose.msra.mxu0 0.0
    %2253 = vmatpush.xpose.msra.mxu0 0.0
    %2254 = vmatpush.xpose.msra.mxu0 0.0
    %2255 = vmatpush.xpose.msra.mxu0 0.0
    %v2256 = vand.u32 %v2139, 4294901760
    %2257 = vmatpush.xpose.msra.mxu0 %v2256
    %v2258 = vand.u32 %v2137, 4294901760
    %2259 = vmatpush.xpose.msra.mxu0 %v2258
    %v2260 = vand.u32 %v2133, 4294901760
    %v2261 = vsub.f32 %v2133, %v2260
    %v2262 = vand.u32 %v2261, 4294901760
    %2263 = vmatmul.f32.gmra.mxu0 %v2262
    %v2264 = vpop.f32.mrf.mxu0
    %v2265 = vadd.f32 %v2235, %v2264
    %v2266 = vand.u32 %v2135, 4294901760
    %v2267 = vsub.f32 %v2135, %v2266
    %v2268 = vand.u32 %v2267, 4294901760
    %2269 = vmatmul.f32.gmra.mxu0 %v2268
    %v2270 = vpop.f32.mrf.mxu0
    %v2271 = vadd.f32 %v2240, %v2270
    %2272 = vdwg.mxu0
    %2273 = vmatpush.xpose.msra.mxu0 0.0
    %2274 = vmatpush.xpose.msra.mxu0 0.0
    %2275 = vmatpush.xpose.msra.mxu0 0.0
    %2276 = vmatpush.xpose.msra.mxu0 0.0
    %2277 = vmatpush.xpose.msra.mxu0 0.0
    %2278 = vmatpush.xpose.msra.mxu0 0.0
    %2279 = vmatpush.xpose.msra.mxu0 0.0
    %2280 = vmatpush.xpose.msra.mxu0 0.0
    %2281 = vmatpush.xpose.msra.mxu0 0.0
    %2282 = vmatpush.xpose.msra.mxu0 0.0
    %2283 = vmatpush.xpose.msra.mxu0 0.0
    %2284 = vmatpush.xpose.msra.mxu0 0.0
    %2285 = vmatpush.xpose.msra.mxu0 0.0
    %2286 = vmatpush.xpose.msra.mxu0 0.0
    %v2287 = vand.u32 %v2139, 4294901760
    %v2288 = vsub.f32 %v2139, %v2287
    %v2289 = vand.u32 %v2288, 4294901760
    %2290 = vmatpush.xpose.msra.mxu0 %v2289
    %v2291 = vand.u32 %v2137, 4294901760
    %v2292 = vsub.f32 %v2137, %v2291
    %v2293 = vand.u32 %v2292, 4294901760
    %2294 = vmatpush.xpose.msra.mxu0 %v2293
    %v2295 = vand.u32 %v2133, 4294901760
    %2296 = vmatmul.f32.gmra.mxu0 %v2295
    %v2297 = vpop.f32.mrf.mxu0
    %v2298 = vadd.f32 %v2265, %v2297
    %v2299 = vand.u32 %v2135, 4294901760
    %2300 = vmatmul.f32.gmra.mxu0 %v2299
    %v2301 = vpop.f32.mrf.mxu0
    %v2302 = vadd.f32 %v2271, %v2301
    %2303 = vdwg.mxu0
    %2304 = vmatpush.xpose.msra.mxu0 0.0
    %2305 = vmatpush.xpose.msra.mxu0 0.0
    %2306 = vmatpush.xpose.msra.mxu0 0.0
    %2307 = vmatpush.xpose.msra.mxu0 0.0
    %2308 = vmatpush.xpose.msra.mxu0 0.0
    %2309 = vmatpush.xpose.msra.mxu0 0.0
    %2310 = vmatpush.xpose.msra.mxu0 0.0
    %2311 = vmatpush.xpose.msra.mxu0 0.0
    %2312 = vmatpush.xpose.msra.mxu0 0.0
    %2313 = vmatpush.xpose.msra.mxu0 0.0
    %2314 = vmatpush.xpose.msra.mxu0 0.0
    %2315 = vmatpush.xpose.msra.mxu0 0.0
    %2316 = vmatpush.xpose.msra.mxu0 0.0
    %2317 = vmatpush.xpose.msra.mxu0 0.0
    %v2318 = vand.u32 %v2139, 4294901760
    %2319 = vmatpush.xpose.msra.mxu0 %v2318
    %v2320 = vand.u32 %v2137, 4294901760
    %2321 = vmatpush.xpose.msra.mxu0 %v2320
    %v2322 = vand.u32 %v2133, 4294901760
    %2323 = vmatmul.f32.gmra.mxu0 %v2322
    %v2324 = vpop.f32.mrf.mxu0
    %v2325 = vadd.f32 %v2298, %v2324
    %v2326 = vand.u32 %v2135, 4294901760
    %2327 = vmatmul.f32.gmra.mxu0 %v2326
    %v2328 = vpop.f32.mrf.mxu0
    %v2329 = vadd.f32 %v2302, %v2328
    %2330 = vdwg.mxu0
    %v2331 = vsel %vm964, %v2325, -inf
    %2332 = vmax.xlane.f32.xlu0 %v2331
    %v2333 = vpop.xlane.xlu0 %2332
    %v2334 = vsel %vm964, %v2329, -inf
    %2335 = vmax.xlane.f32.xlu0 %v2334
    %v2336 = vpop.xlane.xlu0 %2335
    %v2337 = vsub.f32 %v2325, %v2333
    %v2338 = vsub.f32 %v2329, %v2336
    %v2339 = vmul.f32 %v2337, 1.442695
    %v2340 = vpow.pop %v2339
    %v2341 = vmul.f32 %v2338, 1.442695
    %v2342 = vpow.pop %v2341
    %v2343 = vsel %vm964, %v2340, 0.0
    %2344 = vadd.xlane.f32.xlu0 %v2343
    %v2345 = vpop.xlane.xlu0 %2344
    %v2346 = vsel %vm964, %v2342, 0.0
    %2347 = vadd.xlane.f32.xlu0 %v2346
    %v2348 = vpop.xlane.xlu0 %2347
    %v2349 = vrcp.pop %v2345
    %v2350 = vmul.f32 %v2345, %v2349
    %v2351 = vsub.f32 1.0, %v2350
    %v2352 = vmul.f32 %v2349, %v2351
    %v2353 = vadd.f32 %v2349, %v2352
    %vm2354 = vweird.f32 %v2345
    %vm2355 = vweird.f32 %v2349
    %vm2356 = vmor %vm2354, %vm2355
    %v2357 = vsel %vm2356, %v2349, %v2353
    %v2358 = vand.u32 2147483647, %v2345
    %vm2359 = vcmp.eq.f32.partialorder %v2358, 8.507059e+37
    %v2360 = vand.u32 %v2345, 2147483648
    %v2361 = vor.u32 1.1754944e-38, %v2360
    %v2362 = vsel %vm2359, %v2361, %v2357
    %v2363 = vmul.f32 %v2340, %v2362
    %v2364 = vrcp.pop %v2348
    %v2365 = vmul.f32 %v2348, %v2364
    %v2366 = vsub.f32 1.0, %v2365
    %v2367 = vmul.f32 %v2364, %v2366
    %v2368 = vadd.f32 %v2364, %v2367
    %vm2369 = vweird.f32 %v2348
    %vm2370 = vweird.f32 %v2364
    %vm2371 = vmor %vm2369, %vm2370
    %v2372 = vsel %vm2371, %v2364, %v2368
    %v2373 = vand.u32 2147483647, %v2348
    %vm2374 = vcmp.eq.f32.partialorder %v2373, 8.507059e+37
    %v2375 = vand.u32 %v2348, 2147483648
    %v2376 = vor.u32 1.1754944e-38, %v2375
    %v2377 = vsel %vm2374, %v2376, %v2372
    %v2378 = vmul.f32 %v2342, %v2377
    %2381 = vrot.lane.b32.xlu0 %v704, 96
    %v2382 = vpop.permute.xlu0 %2381
    %2383 = vrot.lane.b32.xlu0 %v708, 96
    %v2384 = vpop.permute.xlu0 %2383
    %v2388 = vsel %vm964, %v2363, 0
    %v2391 = vsel %vm964, %v2378, 0
    %2393 = vmatpush.msra.mxu0 0.0
    %2394 = vmatpush.msra.mxu0 0.0
    %2395 = vmatpush.msra.mxu0 0.0
    %2396 = vmatpush.msra.mxu0 0.0
    %2397 = vmatpush.msra.mxu0 0.0
    %2398 = vmatpush.msra.mxu0 0.0
    %2399 = vmatpush.msra.mxu0 0.0
    %2400 = vmatpush.msra.mxu0 0.0
    %2401 = vmatpush.msra.mxu0 0.0
    %2402 = vmatpush.msra.mxu0 0.0
    %2403 = vmatpush.msra.mxu0 0.0
    %2404 = vmatpush.msra.mxu0 0.0
    %2405 = vmatpush.msra.mxu0 0.0
    %2406 = vmatpush.msra.mxu0 0.0
    %v2407 = vand.u32 %v2384, 4294901760
    %2408 = vmatpush.msra.mxu0 %v2407
    %v2409 = vand.u32 %v2382, 4294901760
    %2410 = vmatpush.msra.mxu0 %v2409
    %v2411 = vand.u32 %v2388, 4294901760
    %v2412 = vsub.f32 %v2388, %v2411
    %v2413 = vand.u32 %v2412, 4294901760
    %v2414 = vsub.f32 %v2412, %v2413
    %v2415 = vand.u32 %v2414, 4294901760
    %2416 = vmatmul.f32.gmra.mxu0 %v2415
    %v2417 = vpop.f32.mrf.mxu0
    %v2418 = vadd.f32 0.0, %v2417
    %v2419 = vand.u32 %v2391, 4294901760
    %v2420 = vsub.f32 %v2391, %v2419
    %v2421 = vand.u32 %v2420, 4294901760
    %v2422 = vsub.f32 %v2420, %v2421
    %v2423 = vand.u32 %v2422, 4294901760
    %2424 = vmatmul.f32.gmra.mxu0 %v2423
    %v2425 = vpop.f32.mrf.mxu0
    %v2426 = vadd.f32 0.0, %v2425
    %2427 = vdwg.mxu0
    %2428 = vmatpush.msra.mxu0 0.0
    %2429 = vmatpush.msra.mxu0 0.0
    %2430 = vmatpush.msra.mxu0 0.0
    %2431 = vmatpush.msra.mxu0 0.0
    %2432 = vmatpush.msra.mxu0 0.0
    %2433 = vmatpush.msra.mxu0 0.0
    %2434 = vmatpush.msra.mxu0 0.0
    %2435 = vmatpush.msra.mxu0 0.0
    %2436 = vmatpush.msra.mxu0 0.0
    %2437 = vmatpush.msra.mxu0 0.0
    %2438 = vmatpush.msra.mxu0 0.0
    %2439 = vmatpush.msra.mxu0 0.0
    %2440 = vmatpush.msra.mxu0 0.0
    %2441 = vmatpush.msra.mxu0 0.0
    %v2442 = vand.u32 %v2384, 4294901760
    %v2443 = vsub.f32 %v2384, %v2442
    %v2444 = vand.u32 %v2443, 4294901760
    %v2445 = vsub.f32 %v2443, %v2444
    %v2446 = vand.u32 %v2445, 4294901760
    %2447 = vmatpush.msra.mxu0 %v2446
    %v2448 = vand.u32 %v2382, 4294901760
    %v2449 = vsub.f32 %v2382, %v2448
    %v2450 = vand.u32 %v2449, 4294901760
    %v2451 = vsub.f32 %v2449, %v2450
    %v2452 = vand.u32 %v2451, 4294901760
    %2453 = vmatpush.msra.mxu0 %v2452
    %v2454 = vand.u32 %v2388, 4294901760
    %2455 = vmatmul.f32.gmra.mxu0 %v2454
    %v2456 = vpop.f32.mrf.mxu0
    %v2457 = vadd.f32 %v2418, %v2456
    %v2458 = vand.u32 %v2391, 4294901760
    %2459 = vmatmul.f32.gmra.mxu0 %v2458
    %v2460 = vpop.f32.mrf.mxu0
    %v2461 = vadd.f32 %v2426, %v2460
    %2462 = vdwg.mxu0
    %2463 = vmatpush.msra.mxu0 0.0
    %2464 = vmatpush.msra.mxu0 0.0
    %2465 = vmatpush.msra.mxu0 0.0
    %2466 = vmatpush.msra.mxu0 0.0
    %2467 = vmatpush.msra.mxu0 0.0
    %2468 = vmatpush.msra.mxu0 0.0
    %2469 = vmatpush.msra.mxu0 0.0
    %2470 = vmatpush.msra.mxu0 0.0
    %2471 = vmatpush.msra.mxu0 0.0
    %2472 = vmatpush.msra.mxu0 0.0
    %2473 = vmatpush.msra.mxu0 0.0
    %2474 = vmatpush.msra.mxu0 0.0
    %2475 = vmatpush.msra.mxu0 0.0
    %2476 = vmatpush.msra.mxu0 0.0
    %v2477 = vand.u32 %v2384, 4294901760
    %v2478 = vsub.f32 %v2384, %v2477
    %2479 = vmatpush.msra.mxu0 %v2478
    %v2480 = vand.u32 %v2382, 4294901760
    %v2481 = vsub.f32 %v2382, %v2480
    %2482 = vmatpush.msra.mxu0 %v2481
    %v2483 = vand.u32 %v2388, 4294901760
    %v2484 = vsub.f32 %v2388, %v2483
    %2485 = vmatmul.f32.gmra.mxu0 %v2484
    %v2486 = vpop.f32.mrf.mxu0
    %v2487 = vadd.f32 %v2457, %v2486
    %v2488 = vand.u32 %v2391, 4294901760
    %v2489 = vsub.f32 %v2391, %v2488
    %2490 = vmatmul.f32.gmra.mxu0 %v2489
    %v2491 = vpop.f32.mrf.mxu0
    %v2492 = vadd.f32 %v2461, %v2491
    %2493 = vdwg.mxu0
    %2494 = vmatpush.msra.mxu0 0.0
    %2495 = vmatpush.msra.mxu0 0.0
    %2496 = vmatpush.msra.mxu0 0.0
    %2497 = vmatpush.msra.mxu0 0.0
    %2498 = vmatpush.msra.mxu0 0.0
    %2499 = vmatpush.msra.mxu0 0.0
    %2500 = vmatpush.msra.mxu0 0.0
    %2501 = vmatpush.msra.mxu0 0.0
    %2502 = vmatpush.msra.mxu0 0.0
    %2503 = vmatpush.msra.mxu0 0.0
    %2504 = vmatpush.msra.mxu0 0.0
    %2505 = vmatpush.msra.mxu0 0.0
    %2506 = vmatpush.msra.mxu0 0.0
    %2507 = vmatpush.msra.mxu0 0.0
    %v2508 = vand.u32 %v2384, 4294901760
    %2509 = vmatpush.msra.mxu0 %v2508
    %v2510 = vand.u32 %v2382, 4294901760
    %2511 = vmatpush.msra.mxu0 %v2510
    %v2512 = vand.u32 %v2388, 4294901760
    %v2513 = vsub.f32 %v2388, %v2512
    %v2514 = vand.u32 %v2513, 4294901760
    %2515 = vmatmul.f32.gmra.mxu0 %v2514
    %v2516 = vpop.f32.mrf.mxu0
    %v2517 = vadd.f32 %v2487, %v2516
    %v2518 = vand.u32 %v2391, 4294901760
    %v2519 = vsub.f32 %v2391, %v2518
    %v2520 = vand.u32 %v2519, 4294901760
    %2521 = vmatmul.f32.gmra.mxu0 %v2520
    %v2522 = vpop.f32.mrf.mxu0
    %v2523 = vadd.f32 %v2492, %v2522
    %2524 = vdwg.mxu0
    %2525 = vmatpush.msra.mxu0 0.0
    %2526 = vmatpush.msra.mxu0 0.0
    %2527 = vmatpush.msra.mxu0 0.0
    %2528 = vmatpush.msra.mxu0 0.0
    %2529 = vmatpush.msra.mxu0 0.0
    %2530 = vmatpush.msra.mxu0 0.0
    %2531 = vmatpush.msra.mxu0 0.0
    %2532 = vmatpush.msra.mxu0 0.0
    %2533 = vmatpush.msra.mxu0 0.0
    %2534 = vmatpush.msra.mxu0 0.0
    %2535 = vmatpush.msra.mxu0 0.0
    %2536 = vmatpush.msra.mxu0 0.0
    %2537 = vmatpush.msra.mxu0 0.0
    %2538 = vmatpush.msra.mxu0 0.0
    %v2539 = vand.u32 %v2384, 4294901760
    %v2540 = vsub.f32 %v2384, %v2539
    %v2541 = vand.u32 %v2540, 4294901760
    %2542 = vmatpush.msra.mxu0 %v2541
    %v2543 = vand.u32 %v2382, 4294901760
    %v2544 = vsub.f32 %v2382, %v2543
    %v2545 = vand.u32 %v2544, 4294901760
    %2546 = vmatpush.msra.mxu0 %v2545
    %v2547 = vand.u32 %v2388, 4294901760
    %2548 = vmatmul.f32.gmra.mxu0 %v2547
    %v2549 = vpop.f32.mrf.mxu0
    %v2550 = vadd.f32 %v2517, %v2549
    %v2551 = vand.u32 %v2391, 4294901760
    %2552 = vmatmul.f32.gmra.mxu0 %v2551
    %v2553 = vpop.f32.mrf.mxu0
    %v2554 = vadd.f32 %v2523, %v2553
    %2555 = vdwg.mxu0
    %2556 = vmatpush.msra.mxu0 0.0
    %2557 = vmatpush.msra.mxu0 0.0
    %2558 = vmatpush.msra.mxu0 0.0
    %2559 = vmatpush.msra.mxu0 0.0
    %2560 = vmatpush.msra.mxu0 0.0
    %2561 = vmatpush.msra.mxu0 0.0
    %2562 = vmatpush.msra.mxu0 0.0
    %2563 = vmatpush.msra.mxu0 0.0
    %2564 = vmatpush.msra.mxu0 0.0
    %2565 = vmatpush.msra.mxu0 0.0
    %2566 = vmatpush.msra.mxu0 0.0
    %2567 = vmatpush.msra.mxu0 0.0
    %2568 = vmatpush.msra.mxu0 0.0
    %2569 = vmatpush.msra.mxu0 0.0
    %v2570 = vand.u32 %v2384, 4294901760
    %2571 = vmatpush.msra.mxu0 %v2570
    %v2572 = vand.u32 %v2382, 4294901760
    %2573 = vmatpush.msra.mxu0 %v2572
    %v2574 = vand.u32 %v2388, 4294901760
    %2575 = vmatmul.f32.gmra.mxu0 %v2574
    %v2576 = vpop.f32.mrf.mxu0
    %v2577 = vadd.f32 %v2550, %v2576
    %v2578 = vand.u32 %v2391, 4294901760
    %2579 = vmatmul.f32.gmra.mxu0 %v2578
    %v2580 = vpop.f32.mrf.mxu0
    %v2581 = vadd.f32 %v2554, %v2580
    %2582 = vdwg.mxu0
    %v2583 = vadd.f32 %v2123, %v2577
    %v2584 = vadd.f32 %v2124, %v2581
    %v2585 = vld [vmem:[%s4 + $0x1] sm:$0x1]
    %v2586 = vperm.slane %v2585, 0
    %v2587 = vadd.f32 %v2583, %v2586
    %v2588 = vadd.f32 %v2584, %v2586
    %2591 = vrot.lane.b32.xlu0 %v2587, 64
    %v2592 = vpop.permute.xlu0 %2591
    %2593 = vrot.lane.b32.xlu0 %v2588, 64
    %v2594 = vpop.permute.xlu0 %2593
    %v2597 = vadd.f32 %v37, %v2592
    %v2598 = vadd.f32 %v38, %v2594
    %v2599 = vld [vmem:[%s4 + $0x4] sm:$0x1]
    %v2600 = vld [vmem:[%s4 + $0x5] sm:$0x1]
    %2603 = vrot.lane.b32.xlu0 %v2597, 64
    %v2604 = vpop.permute.xlu0 %2603
    %2605 = vrot.lane.b32.xlu0 %v2598, 64
    %v2606 = vpop.permute.xlu0 %2605
    %vm2609 = vcmask 261120
    %v2610 = vsel %vm2609, %v2604, 0.0
    %2611 = vadd.xlane.f32.xlu0 %v2610
    %v2612 = vpop.xlane.xlu0 %2611
    %v2613 = vsel %vm2609, %v2606, 0.0
    %2614 = vadd.xlane.f32.xlu0 %v2613
    %v2615 = vpop.xlane.xlu0 %2614
    %v2616 = vrcp.pop 32.0
    %v2617 = vmul.f32 32.0, %v2616
    %v2618 = vsub.f32 1.0, %v2617
    %v2619 = vmul.f32 %v2616, %v2618
    %v2620 = vadd.f32 %v2616, %v2619
    %vm2621 = vweird.f32 %v2616
    %v2622 = vsel %vm2621, %v2616, %v2620
    %v2623 = vmul.f32 %v2612, %v2622
    %v2624 = vmul.f32 %v2615, %v2622
    %v2625 = vsub.f32 %v2597, %v2623
    %v2626 = vsub.f32 %v2598, %v2624
    %v2627 = vmul.f32 %v2625, %v2625
    %v2628 = vmul.f32 %v2626, %v2626
    %2631 = vrot.lane.b32.xlu0 %v2627, 64
    %v2632 = vpop.permute.xlu0 %2631
    %2633 = vrot.lane.b32.xlu0 %v2628, 64
    %v2634 = vpop.permute.xlu0 %2633
    %v2637 = vsel %vm2609, %v2632, 0.0
    %2638 = vadd.xlane.f32.xlu0 %v2637
    %v2639 = vpop.xlane.xlu0 %2638
    %v2640 = vsel %vm2609, %v2634, 0.0
    %2641 = vadd.xlane.f32.xlu0 %v2640
    %v2642 = vpop.xlane.xlu0 %2641
    %v2643 = vmul.f32 %v2639, %v2622
    %v2644 = vmul.f32 %v2642, %v2622
    %v2645 = vadd.f32 %v2643, 1e-05
    %v2646 = vadd.f32 %v2644, 1e-05
    %v2647 = vrsqrt.pop %v2645
    %v2648 = vmul.f32 %v2647, %v2645
    %v2649 = vmul.f32 %v2648, %v2647
    %v2650 = vmul.f32 0.5, %v2649
    %v2651 = vsub.f32 1.5, %v2650
    %v2652 = vmul.f32 %v2647, %v2651
    %vm2653 = vweird.f32 %v2645
    %vm2654 = vweird.f32 %v2647
    %vm2655 = vmor %vm2653, %vm2654
    %v2656 = vsel %vm2655, %v2647, %v2652
    %v2657 = vrsqrt.pop %v2646
    %v2658 = vmul.f32 %v2657, %v2646
    %v2659 = vmul.f32 %v2658, %v2657
    %v2660 = vmul.f32 0.5, %v2659
    %v2661 = vsub.f32 1.5, %v2660
    %v2662 = vmul.f32 %v2657, %v2661
    %vm2663 = vweird.f32 %v2646
    %vm2664 = vweird.f32 %v2657
    %vm2665 = vmor %vm2663, %vm2664
    %v2666 = vsel %vm2665, %v2657, %v2662
    %v2667 = vmul.f32 %v2625, %v2656
    %v2668 = vmul.f32 %v2626, %v2666
    %v2669 = vperm.slane %v2599, 0
    %2671 = vrot.lane.b32.xlu0 %v2669, 64
    %v2672 = vpop.permute.xlu0 %2671
    %v2674 = vmul.f32 %v2667, %v2672
    %v2675 = vmul.f32 %v2668, %v2672
    %v2676 = vperm.slane %v2600, 0
    %2678 = vrot.lane.b32.xlu0 %v2676, 64
    %v2679 = vpop.permute.xlu0 %2678
    %v2681 = vadd.f32 %v2674, %v2679
    %v2682 = vadd.f32 %v2675, %v2679
    %v2683 = vld [vmem:[%s2] sm:$0xff]
    %v2684 = vld [vmem:[%s2 + $0x8] sm:$0xff]
    %v2685 = vld [vmem:[%s2 + $0x10] sm:$0xff]
    %v2686 = vld [vmem:[%s2 + $0x18] sm:$0xff]
    %v2687 = vld [vmem:[%s4 + $0x2] sm:$0x1]
    %v2688 = vperm.slane %v2687, 0
    %2691 = vrot.lane.b32.xlu0 %v2681, 64
    %v2692 = vpop.permute.xlu0 %2691
    %2693 = vrot.lane.b32.xlu0 %v2682, 64
    %v2694 = vpop.permute.xlu0 %2693
    %v2695 = vsel %vm2609, %v2692, 0
    %v2697 = vsel %vm2609, %v2694, 0
    %2699 = vmatpush.msra.mxu0 0.0
    %2700 = vmatpush.msra.mxu0 0.0
    %2701 = vmatpush.msra.mxu0 0.0
    %2702 = vmatpush.msra.mxu0 0.0
    %2703 = vmatpush.msra.mxu0 0.0
    %2704 = vmatpush.msra.mxu0 0.0
    %2705 = vmatpush.msra.mxu0 0.0
    %2706 = vmatpush.msra.mxu0 0.0
    %2707 = vmatpush.msra.mxu0 0.0
    %2708 = vmatpush.msra.mxu0 0.0
    %2709 = vmatpush.msra.mxu0 0.0
    %2710 = vmatpush.msra.mxu0 0.0
    %v2711 = vand.u32 %v2686, 4294901760
    %2712 = vmatpush.msra.mxu0 %v2711
    %v2713 = vand.u32 %v2685, 4294901760
    %2714 = vmatpush.msra.mxu0 %v2713
    %v2715 = vand.u32 %v2684, 4294901760
    %2716 = vmatpush.msra.mxu0 %v2715
    %v2717 = vand.u32 %v2683, 4294901760
    %2718 = vmatpush.msra.mxu0 %v2717
    %v2719 = vand.u32 %v2695, 4294901760
    %v2720 = vsub.f32 %v2695, %v2719
    %v2721 = vand.u32 %v2720, 4294901760
    %v2722 = vsub.f32 %v2720, %v2721
    %v2723 = vand.u32 %v2722, 4294901760
    %2724 = vmatmul.f32.gmra.mxu0 %v2723
    %v2725 = vpop.f32.mrf.mxu0
    %v2726 = vadd.f32 %v2688, %v2725
    %v2727 = vand.u32 %v2697, 4294901760
    %v2728 = vsub.f32 %v2697, %v2727
    %v2729 = vand.u32 %v2728, 4294901760
    %v2730 = vsub.f32 %v2728, %v2729
    %v2731 = vand.u32 %v2730, 4294901760
    %2732 = vmatmul.f32.gmra.mxu0 %v2731
    %v2733 = vpop.f32.mrf.mxu0
    %v2734 = vadd.f32 %v2688, %v2733
    %2735 = vdwg.mxu0
    %2736 = vmatpush.msra.mxu0 0.0
    %2737 = vmatpush.msra.mxu0 0.0
    %2738 = vmatpush.msra.mxu0 0.0
    %2739 = vmatpush.msra.mxu0 0.0
    %2740 = vmatpush.msra.mxu0 0.0
    %2741 = vmatpush.msra.mxu0 0.0
    %2742 = vmatpush.msra.mxu0 0.0
    %2743 = vmatpush.msra.mxu0 0.0
    %2744 = vmatpush.msra.mxu0 0.0
    %2745 = vmatpush.msra.mxu0 0.0
    %2746 = vmatpush.msra.mxu0 0.0
    %2747 = vmatpush.msra.mxu0 0.0
    %v2748 = vand.u32 %v2686, 4294901760
    %v2749 = vsub.f32 %v2686, %v2748
    %v2750 = vand.u32 %v2749, 4294901760
    %v2751 = vsub.f32 %v2749, %v2750
    %v2752 = vand.u32 %v2751, 4294901760
    %2753 = vmatpush.msra.mxu0 %v2752
    %v2754 = vand.u32 %v2685, 4294901760
    %v2755 = vsub.f32 %v2685, %v2754
    %v2756 = vand.u32 %v2755, 4294901760
    %v2757 = vsub.f32 %v2755, %v2756
    %v2758 = vand.u32 %v2757, 4294901760
    %2759 = vmatpush.msra.mxu0 %v2758
    %v2760 = vand.u32 %v2684, 4294901760
    %v2761 = vsub.f32 %v2684, %v2760
    %v2762 = vand.u32 %v2761, 4294901760
    %v2763 = vsub.f32 %v2761, %v2762
    %v2764 = vand.u32 %v2763, 4294901760
    %2765 = vmatpush.msra.mxu0 %v2764
    %v2766 = vand.u32 %v2683, 4294901760
    %v2767 = vsub.f32 %v2683, %v2766
    %v2768 = vand.u32 %v2767, 4294901760
    %v2769 = vsub.f32 %v2767, %v2768
    %v2770 = vand.u32 %v2769, 4294901760
    %2771 = vmatpush.msra.mxu0 %v2770
    %v2772 = vand.u32 %v2695, 4294901760
    %2773 = vmatmul.f32.gmra.mxu0 %v2772
    %v2774 = vpop.f32.mrf.mxu0
    %v2775 = vadd.f32 %v2726, %v2774
    %v2776 = vand.u32 %v2697, 4294901760
    %2777 = vmatmul.f32.gmra.mxu0 %v2776
    %v2778 = vpop.f32.mrf.mxu0
    %v2779 = vadd.f32 %v2734, %v2778
    %2780 = vdwg.mxu0
    %2781 = vmatpush.msra.mxu0 0.0
    %2782 = vmatpush.msra.mxu0 0.0
    %2783 = vmatpush.msra.mxu0 0.0
    %2784 = vmatpush.msra.mxu0 0.0
    %2785 = vmatpush.msra.mxu0 0.0
    %2786 = vmatpush.msra.mxu0 0.0
    %2787 = vmatpush.msra.mxu0 0.0
    %2788 = vmatpush.msra.mxu0 0.0
    %2789 = vmatpush.msra.mxu0 0.0
    %2790 = vmatpush.msra.mxu0 0.0
    %2791 = vmatpush.msra.mxu0 0.0
    %2792 = vmatpush.msra.mxu0 0.0
    %v2793 = vand.u32 %v2686, 4294901760
    %v2794 = vsub.f32 %v2686, %v2793
    %2795 = vmatpush.msra.mxu0 %v2794
    %v2796 = vand.u32 %v2685, 4294901760
    %v2797 = vsub.f32 %v2685, %v2796
    %2798 = vmatpush.msra.mxu0 %v2797
    %v2799 = vand.u32 %v2684, 4294901760
    %v2800 = vsub.f32 %v2684, %v2799
    %2801 = vmatpush.msra.mxu0 %v2800
    %v2802 = vand.u32 %v2683, 4294901760
    %v2803 = vsub.f32 %v2683, %v2802
    %2804 = vmatpush.msra.mxu0 %v2803
    %v2805 = vand.u32 %v2695, 4294901760
    %v2806 = vsub.f32 %v2695, %v2805
    %2807 = vmatmul.f32.gmra.mxu0 %v2806
    %v2808 = vpop.f32.mrf.mxu0
    %v2809 = vadd.f32 %v2775, %v2808
    %v2810 = vand.u32 %v2697, 4294901760
    %v2811 = vsub.f32 %v2697, %v2810
    %2812 = vmatmul.f32.gmra.mxu0 %v2811
    %v2813 = vpop.f32.mrf.mxu0
    %v2814 = vadd.f32 %v2779, %v2813
    %2815 = vdwg.mxu0
    %2816 = vmatpush.msra.mxu0 0.0
    %2817 = vmatpush.msra.mxu0 0.0
    %2818 = vmatpush.msra.mxu0 0.0
    %2819 = vmatpush.msra.mxu0 0.0
    %2820 = vmatpush.msra.mxu0 0.0
    %2821 = vmatpush.msra.mxu0 0.0
    %2822 = vmatpush.msra.mxu0 0.0
    %2823 = vmatpush.msra.mxu0 0.0
    %2824 = vmatpush.msra.mxu0 0.0
    %2825 = vmatpush.msra.mxu0 0.0
    %2826 = vmatpush.msra.mxu0 0.0
    %2827 = vmatpush.msra.mxu0 0.0
    %v2828 = vand.u32 %v2686, 4294901760
    %2829 = vmatpush.msra.mxu0 %v2828
    %v2830 = vand.u32 %v2685, 4294901760
    %2831 = vmatpush.msra.mxu0 %v2830
    %v2832 = vand.u32 %v2684, 4294901760
    %2833 = vmatpush.msra.mxu0 %v2832
    %v2834 = vand.u32 %v2683, 4294901760
    %2835 = vmatpush.msra.mxu0 %v2834
    %v2836 = vand.u32 %v2695, 4294901760
    %v2837 = vsub.f32 %v2695, %v2836
    %v2838 = vand.u32 %v2837, 4294901760
    %2839 = vmatmul.f32.gmra.mxu0 %v2838
    %v2840 = vpop.f32.mrf.mxu0
    %v2841 = vadd.f32 %v2809, %v2840
    %v2842 = vand.u32 %v2697, 4294901760
    %v2843 = vsub.f32 %v2697, %v2842
    %v2844 = vand.u32 %v2843, 4294901760
    %2845 = vmatmul.f32.gmra.mxu0 %v2844
    %v2846 = vpop.f32.mrf.mxu0
    %v2847 = vadd.f32 %v2814, %v2846
    %2848 = vdwg.mxu0
    %2849 = vmatpush.msra.mxu0 0.0
    %2850 = vmatpush.msra.mxu0 0.0
    %2851 = vmatpush.msra.mxu0 0.0
    %2852 = vmatpush.msra.mxu0 0.0
    %2853 = vmatpush.msra.mxu0 0.0
    %2854 = vmatpush.msra.mxu0 0.0
    %2855 = vmatpush.msra.mxu0 0.0
    %2856 = vmatpush.msra.mxu0 0.0
    %2857 = vmatpush.msra.mxu0 0.0
    %2858 = vmatpush.msra.mxu0 0.0
    %2859 = vmatpush.msra.mxu0 0.0
    %2860 = vmatpush.msra.mxu0 0.0
    %v2861 = vand.u32 %v2686, 4294901760
    %v2862 = vsub.f32 %v2686, %v2861
    %v2863 = vand.u32 %v2862, 4294901760
    %2864 = vmatpush.msra.mxu0 %v2863
    %v2865 = vand.u32 %v2685, 4294901760
    %v2866 = vsub.f32 %v2685, %v2865
    %v2867 = vand.u32 %v2866, 4294901760
    %2868 = vmatpush.msra.mxu0 %v2867
    %v2869 = vand.u32 %v2684, 4294901760
    %v2870 = vsub.f32 %v2684, %v2869
    %v2871 = vand.u32 %v2870, 4294901760
    %2872 = vmatpush.msra.mxu0 %v2871
    %v2873 = vand.u32 %v2683, 4294901760
    %v2874 = vsub.f32 %v2683, %v2873
    %v2875 = vand.u32 %v2874, 4294901760
    %2876 = vmatpush.msra.mxu0 %v2875
    %v2877 = vand.u32 %v2695, 4294901760
    %2878 = vmatmul.f32.gmra.mxu0 %v2877
    %v2879 = vpop.f32.mrf.mxu0
    %v2880 = vadd.f32 %v2841, %v2879
    %v2881 = vand.u32 %v2697, 4294901760
    %2882 = vmatmul.f32.gmra.mxu0 %v2881
    %v2883 = vpop.f32.mrf.mxu0
    %v2884 = vadd.f32 %v2847, %v2883
    %2885 = vdwg.mxu0
    %2886 = vmatpush.msra.mxu0 0.0
    %2887 = vmatpush.msra.mxu0 0.0
    %2888 = vmatpush.msra.mxu0 0.0
    %2889 = vmatpush.msra.mxu0 0.0
    %2890 = vmatpush.msra.mxu0 0.0
    %2891 = vmatpush.msra.mxu0 0.0
    %2892 = vmatpush.msra.mxu0 0.0
    %2893 = vmatpush.msra.mxu0 0.0
    %2894 = vmatpush.msra.mxu0 0.0
    %2895 = vmatpush.msra.mxu0 0.0
    %2896 = vmatpush.msra.mxu0 0.0
    %2897 = vmatpush.msra.mxu0 0.0
    %v2898 = vand.u32 %v2686, 4294901760
    %2899 = vmatpush.msra.mxu0 %v2898
    %v2900 = vand.u32 %v2685, 4294901760
    %2901 = vmatpush.msra.mxu0 %v2900
    %v2902 = vand.u32 %v2684, 4294901760
    %2903 = vmatpush.msra.mxu0 %v2902
    %v2904 = vand.u32 %v2683, 4294901760
    %2905 = vmatpush.msra.mxu0 %v2904
    %v2906 = vand.u32 %v2695, 4294901760
    %2907 = vmatmul.f32.gmra.mxu0 %v2906
    %v2908 = vpop.f32.mrf.mxu0
    %v2909 = vadd.f32 %v2880, %v2908
    %v2910 = vand.u32 %v2697, 4294901760
    %2911 = vmatmul.f32.gmra.mxu0 %v2910
    %v2912 = vpop.f32.mrf.mxu0
    %v2913 = vadd.f32 %v2884, %v2912
    %2914 = vdwg.mxu0
    %v2915 = vmax.f32 %v2909, 0.0
    %v2916 = vmax.f32 %v2913, 0.0
    %v2917 = vld [vmem:[%s3] sm:$0xff]
    %v2918 = vld [vmem:[%s3 + $0x8] sm:$0xff]
    %v2919 = vld [vmem:[%s3 + $0x10] sm:$0xff]
    %v2920 = vld [vmem:[%s3 + $0x18] sm:$0xff]
    %v2921 = vld [vmem:[%s3 + $0x20] sm:$0xff]
    %v2922 = vld [vmem:[%s3 + $0x28] sm:$0xff]
    %v2923 = vld [vmem:[%s3 + $0x30] sm:$0xff]
    %v2924 = vld [vmem:[%s3 + $0x38] sm:$0xff]
    %v2925 = vld [vmem:[%s4 + $0x3] sm:$0x1]
    %v2926 = vperm.slane %v2925, 0
    %vm2927 = vcmask 523264
    %v2929 = vsel %vm2927, %v2915, 0
    %v2932 = vsel %vm2927, %v2916, 0
    %2934 = vmatpush.msra.mxu0 0.0
    %2935 = vmatpush.msra.mxu0 0.0
    %2936 = vmatpush.msra.mxu0 0.0
    %2937 = vmatpush.msra.mxu0 0.0
    %2938 = vmatpush.msra.mxu0 0.0
    %2939 = vmatpush.msra.mxu0 0.0
    %2940 = vmatpush.msra.mxu0 0.0
    %2941 = vmatpush.msra.mxu0 0.0
    %v2942 = vand.u32 %v2924, 4294901760
    %2943 = vmatpush.msra.mxu0 %v2942
    %v2944 = vand.u32 %v2923, 4294901760
    %2945 = vmatpush.msra.mxu0 %v2944
    %v2946 = vand.u32 %v2922, 4294901760
    %2947 = vmatpush.msra.mxu0 %v2946
    %v2948 = vand.u32 %v2921, 4294901760
    %2949 = vmatpush.msra.mxu0 %v2948
    %v2950 = vand.u32 %v2920, 4294901760
    %2951 = vmatpush.msra.mxu0 %v2950
    %v2952 = vand.u32 %v2919, 4294901760
    %2953 = vmatpush.msra.mxu0 %v2952
    %v2954 = vand.u32 %v2918, 4294901760
    %2955 = vmatpush.msra.mxu0 %v2954
    %v2956 = vand.u32 %v2917, 4294901760
    %2957 = vmatpush.msra.mxu0 %v2956
    %v2958 = vand.u32 %v2929, 4294901760
    %v2959 = vsub.f32 %v2929, %v2958
    %v2960 = vand.u32 %v2959, 4294901760
    %v2961 = vsub.f32 %v2959, %v2960
    %v2962 = vand.u32 %v2961, 4294901760
    %2963 = vmatmul.f32.gmra.mxu0 %v2962
    %v2964 = vpop.f32.mrf.mxu0
    %v2965 = vadd.f32 %v2926, %v2964
    %v2966 = vand.u32 %v2932, 4294901760
    %v2967 = vsub.f32 %v2932, %v2966
    %v2968 = vand.u32 %v2967, 4294901760
    %v2969 = vsub.f32 %v2967, %v2968
    %v2970 = vand.u32 %v2969, 4294901760
    %2971 = vmatmul.f32.gmra.mxu0 %v2970
    %v2972 = vpop.f32.mrf.mxu0
    %v2973 = vadd.f32 %v2926, %v2972
    %2974 = vdwg.mxu0
    %2975 = vmatpush.msra.mxu0 0.0
    %2976 = vmatpush.msra.mxu0 0.0
    %2977 = vmatpush.msra.mxu0 0.0
    %2978 = vmatpush.msra.mxu0 0.0
    %2979 = vmatpush.msra.mxu0 0.0
    %2980 = vmatpush.msra.mxu0 0.0
    %2981 = vmatpush.msra.mxu0 0.0
    %2982 = vmatpush.msra.mxu0 0.0
    %v2983 = vand.u32 %v2924, 4294901760
    %v2984 = vsub.f32 %v2924, %v2983
    %v2985 = vand.u32 %v2984, 4294901760
    %v2986 = vsub.f32 %v2984, %v2985
    %v2987 = vand.u32 %v2986, 4294901760
    %2988 = vmatpush.msra.mxu0 %v2987
    %v2989 = vand.u32 %v2923, 4294901760
    %v2990 = vsub.f32 %v2923, %v2989
    %v2991 = vand.u32 %v2990, 4294901760
    %v2992 = vsub.f32 %v2990, %v2991
    %v2993 = vand.u32 %v2992, 4294901760
    %2994 = vmatpush.msra.mxu0 %v2993
    %v2995 = vand.u32 %v2922, 4294901760
    %v2996 = vsub.f32 %v2922, %v2995
    %v2997 = vand.u32 %v2996, 4294901760
    %v2998 = vsub.f32 %v2996, %v2997
    %v2999 = vand.u32 %v2998, 4294901760
    %3000 = vmatpush.msra.mxu0 %v2999
    %v3001 = vand.u32 %v2921, 4294901760
    %v3002 = vsub.f32 %v2921, %v3001
    %v3003 = vand.u32 %v3002, 4294901760
    %v3004 = vsub.f32 %v3002, %v3003
    %v3005 = vand.u32 %v3004, 4294901760
    %3006 = vmatpush.msra.mxu0 %v3005
    %v3007 = vand.u32 %v2920, 4294901760
    %v3008 = vsub.f32 %v2920, %v3007
    %v3009 = vand.u32 %v3008, 4294901760
    %v3010 = vsub.f32 %v3008, %v3009
    %v3011 = vand.u32 %v3010, 4294901760
    %3012 = vmatpush.msra.mxu0 %v3011
    %v3013 = vand.u32 %v2919, 4294901760
    %v3014 = vsub.f32 %v2919, %v3013
    %v3015 = vand.u32 %v3014, 4294901760
    %v3016 = vsub.f32 %v3014, %v3015
    %v3017 = vand.u32 %v3016, 4294901760
    %3018 = vmatpush.msra.mxu0 %v3017
    %v3019 = vand.u32 %v2918, 4294901760
    %v3020 = vsub.f32 %v2918, %v3019
    %v3021 = vand.u32 %v3020, 4294901760
    %v3022 = vsub.f32 %v3020, %v3021
    %v3023 = vand.u32 %v3022, 4294901760
    %3024 = vmatpush.msra.mxu0 %v3023
    %v3025 = vand.u32 %v2917, 4294901760
    %v3026 = vsub.f32 %v2917, %v3025
    %v3027 = vand.u32 %v3026, 4294901760
    %v3028 = vsub.f32 %v3026, %v3027
    %v3029 = vand.u32 %v3028, 4294901760
    %3030 = vmatpush.msra.mxu0 %v3029
    %v3031 = vand.u32 %v2929, 4294901760
    %3032 = vmatmul.f32.gmra.mxu0 %v3031
    %v3033 = vpop.f32.mrf.mxu0
    %v3034 = vadd.f32 %v2965, %v3033
    %v3035 = vand.u32 %v2932, 4294901760
    %3036 = vmatmul.f32.gmra.mxu0 %v3035
    %v3037 = vpop.f32.mrf.mxu0
    %v3038 = vadd.f32 %v2973, %v3037
    %3039 = vdwg.mxu0
    %3040 = vmatpush.msra.mxu0 0.0
    %3041 = vmatpush.msra.mxu0 0.0
    %3042 = vmatpush.msra.mxu0 0.0
    %3043 = vmatpush.msra.mxu0 0.0
    %3044 = vmatpush.msra.mxu0 0.0
    %3045 = vmatpush.msra.mxu0 0.0
    %3046 = vmatpush.msra.mxu0 0.0
    %3047 = vmatpush.msra.mxu0 0.0
    %v3048 = vand.u32 %v2924, 4294901760
    %v3049 = vsub.f32 %v2924, %v3048
    %3050 = vmatpush.msra.mxu0 %v3049
    %v3051 = vand.u32 %v2923, 4294901760
    %v3052 = vsub.f32 %v2923, %v3051
    %3053 = vmatpush.msra.mxu0 %v3052
    %v3054 = vand.u32 %v2922, 4294901760
    %v3055 = vsub.f32 %v2922, %v3054
    %3056 = vmatpush.msra.mxu0 %v3055
    %v3057 = vand.u32 %v2921, 4294901760
    %v3058 = vsub.f32 %v2921, %v3057
    %3059 = vmatpush.msra.mxu0 %v3058
    %v3060 = vand.u32 %v2920, 4294901760
    %v3061 = vsub.f32 %v2920, %v3060
    %3062 = vmatpush.msra.mxu0 %v3061
    %v3063 = vand.u32 %v2919, 4294901760
    %v3064 = vsub.f32 %v2919, %v3063
    %3065 = vmatpush.msra.mxu0 %v3064
    %v3066 = vand.u32 %v2918, 4294901760
    %v3067 = vsub.f32 %v2918, %v3066
    %3068 = vmatpush.msra.mxu0 %v3067
    %v3069 = vand.u32 %v2917, 4294901760
    %v3070 = vsub.f32 %v2917, %v3069
    %3071 = vmatpush.msra.mxu0 %v3070
    %v3072 = vand.u32 %v2929, 4294901760
    %v3073 = vsub.f32 %v2929, %v3072
    %3074 = vmatmul.f32.gmra.mxu0 %v3073
    %v3075 = vpop.f32.mrf.mxu0
    %v3076 = vadd.f32 %v3034, %v3075
    %v3077 = vand.u32 %v2932, 4294901760
    %v3078 = vsub.f32 %v2932, %v3077
    %3079 = vmatmul.f32.gmra.mxu0 %v3078
    %v3080 = vpop.f32.mrf.mxu0
    %v3081 = vadd.f32 %v3038, %v3080
    %3082 = vdwg.mxu0
    %3083 = vmatpush.msra.mxu0 0.0
    %3084 = vmatpush.msra.mxu0 0.0
    %3085 = vmatpush.msra.mxu0 0.0
    %3086 = vmatpush.msra.mxu0 0.0
    %3087 = vmatpush.msra.mxu0 0.0
    %3088 = vmatpush.msra.mxu0 0.0
    %3089 = vmatpush.msra.mxu0 0.0
    %3090 = vmatpush.msra.mxu0 0.0
    %v3091 = vand.u32 %v2924, 4294901760
    %3092 = vmatpush.msra.mxu0 %v3091
    %v3093 = vand.u32 %v2923, 4294901760
    %3094 = vmatpush.msra.mxu0 %v3093
    %v3095 = vand.u32 %v2922, 4294901760
    %3096 = vmatpush.msra.mxu0 %v3095
    %v3097 = vand.u32 %v2921, 4294901760
    %3098 = vmatpush.msra.mxu0 %v3097
    %v3099 = vand.u32 %v2920, 4294901760
    %3100 = vmatpush.msra.mxu0 %v3099
    %v3101 = vand.u32 %v2919, 4294901760
    %3102 = vmatpush.msra.mxu0 %v3101
    %v3103 = vand.u32 %v2918, 4294901760
    %3104 = vmatpush.msra.mxu0 %v3103
    %v3105 = vand.u32 %v2917, 4294901760
    %3106 = vmatpush.msra.mxu0 %v3105
    %v3107 = vand.u32 %v2929, 4294901760
    %v3108 = vsub.f32 %v2929, %v3107
    %v3109 = vand.u32 %v3108, 4294901760
    %3110 = vmatmul.f32.gmra.mxu0 %v3109
    %v3111 = vpop.f32.mrf.mxu0
    %v3112 = vadd.f32 %v3076, %v3111
    %v3113 = vand.u32 %v2932, 4294901760
    %v3114 = vsub.f32 %v2932, %v3113
    %v3115 = vand.u32 %v3114, 4294901760
    %3116 = vmatmul.f32.gmra.mxu0 %v3115
    %v3117 = vpop.f32.mrf.mxu0
    %v3118 = vadd.f32 %v3081, %v3117
    %3119 = vdwg.mxu0
    %3120 = vmatpush.msra.mxu0 0.0
    %3121 = vmatpush.msra.mxu0 0.0
    %3122 = vmatpush.msra.mxu0 0.0
    %3123 = vmatpush.msra.mxu0 0.0
    %3124 = vmatpush.msra.mxu0 0.0
    %3125 = vmatpush.msra.mxu0 0.0
    %3126 = vmatpush.msra.mxu0 0.0
    %3127 = vmatpush.msra.mxu0 0.0
    %v3128 = vand.u32 %v2924, 4294901760
    %v3129 = vsub.f32 %v2924, %v3128
    %v3130 = vand.u32 %v3129, 4294901760
    %3131 = vmatpush.msra.mxu0 %v3130
    %v3132 = vand.u32 %v2923, 4294901760
    %v3133 = vsub.f32 %v2923, %v3132
    %v3134 = vand.u32 %v3133, 4294901760
    %3135 = vmatpush.msra.mxu0 %v3134
    %v3136 = vand.u32 %v2922, 4294901760
    %v3137 = vsub.f32 %v2922, %v3136
    %v3138 = vand.u32 %v3137, 4294901760
    %3139 = vmatpush.msra.mxu0 %v3138
    %v3140 = vand.u32 %v2921, 4294901760
    %v3141 = vsub.f32 %v2921, %v3140
    %v3142 = vand.u32 %v3141, 4294901760
    %3143 = vmatpush.msra.mxu0 %v3142
    %v3144 = vand.u32 %v2920, 4294901760
    %v3145 = vsub.f32 %v2920, %v3144
    %v3146 = vand.u32 %v3145, 4294901760
    %3147 = vmatpush.msra.mxu0 %v3146
    %v3148 = vand.u32 %v2919, 4294901760
    %v3149 = vsub.f32 %v2919, %v3148
    %v3150 = vand.u32 %v3149, 4294901760
    %3151 = vmatpush.msra.mxu0 %v3150
    %v3152 = vand.u32 %v2918, 4294901760
    %v3153 = vsub.f32 %v2918, %v3152
    %v3154 = vand.u32 %v3153, 4294901760
    %3155 = vmatpush.msra.mxu0 %v3154
    %v3156 = vand.u32 %v2917, 4294901760
    %v3157 = vsub.f32 %v2917, %v3156
    %v3158 = vand.u32 %v3157, 4294901760
    %3159 = vmatpush.msra.mxu0 %v3158
    %v3160 = vand.u32 %v2929, 4294901760
    %3161 = vmatmul.f32.gmra.mxu0 %v3160
    %v3162 = vpop.f32.mrf.mxu0
    %v3163 = vadd.f32 %v3112, %v3162
    %v3164 = vand.u32 %v2932, 4294901760
    %3165 = vmatmul.f32.gmra.mxu0 %v3164
    %v3166 = vpop.f32.mrf.mxu0
    %v3167 = vadd.f32 %v3118, %v3166
    %3168 = vdwg.mxu0
    %3169 = vmatpush.msra.mxu0 0.0
    %3170 = vmatpush.msra.mxu0 0.0
    %3171 = vmatpush.msra.mxu0 0.0
    %3172 = vmatpush.msra.mxu0 0.0
    %3173 = vmatpush.msra.mxu0 0.0
    %3174 = vmatpush.msra.mxu0 0.0
    %3175 = vmatpush.msra.mxu0 0.0
    %3176 = vmatpush.msra.mxu0 0.0
    %v3177 = vand.u32 %v2924, 4294901760
    %3178 = vmatpush.msra.mxu0 %v3177
    %v3179 = vand.u32 %v2923, 4294901760
    %3180 = vmatpush.msra.mxu0 %v3179
    %v3181 = vand.u32 %v2922, 4294901760
    %3182 = vmatpush.msra.mxu0 %v3181
    %v3183 = vand.u32 %v2921, 4294901760
    %3184 = vmatpush.msra.mxu0 %v3183
    %v3185 = vand.u32 %v2920, 4294901760
    %3186 = vmatpush.msra.mxu0 %v3185
    %v3187 = vand.u32 %v2919, 4294901760
    %3188 = vmatpush.msra.mxu0 %v3187
    %v3189 = vand.u32 %v2918, 4294901760
    %3190 = vmatpush.msra.mxu0 %v3189
    %v3191 = vand.u32 %v2917, 4294901760
    %3192 = vmatpush.msra.mxu0 %v3191
    %v3193 = vand.u32 %v2929, 4294901760
    %3194 = vmatmul.f32.gmra.mxu0 %v3193
    %v3195 = vpop.f32.mrf.mxu0
    %v3196 = vadd.f32 %v3163, %v3195
    %v3197 = vand.u32 %v2932, 4294901760
    %3198 = vmatmul.f32.gmra.mxu0 %v3197
    %v3199 = vpop.f32.mrf.mxu0
    %v3200 = vadd.f32 %v3167, %v3199
    %3201 = vdwg.mxu0
    %3204 = vrot.lane.b32.xlu0 %v3196, 64
    %v3205 = vpop.permute.xlu0 %3204
    %3206 = vrot.lane.b32.xlu0 %v3200, 64
    %v3207 = vpop.permute.xlu0 %3206
    %v3210 = vadd.f32 %v2681, %v3205
    %v3211 = vadd.f32 %v2682, %v3207
    %v3212 = vld [vmem:[%s4 + $0x6] sm:$0x1]
    %v3213 = vld [vmem:[%s4 + $0x7] sm:$0x1]
    %3216 = vrot.lane.b32.xlu0 %v3210, 64
    %v3217 = vpop.permute.xlu0 %3216
    %3218 = vrot.lane.b32.xlu0 %v3211, 64
    %v3219 = vpop.permute.xlu0 %3218
    %v3222 = vsel %vm2609, %v3217, 0.0
    %3223 = vadd.xlane.f32.xlu0 %v3222
    %v3224 = vpop.xlane.xlu0 %3223
    %v3225 = vsel %vm2609, %v3219, 0.0
    %3226 = vadd.xlane.f32.xlu0 %v3225
    %v3227 = vpop.xlane.xlu0 %3226
    %v3228 = vmul.f32 %v3224, %v2622
    %v3229 = vmul.f32 %v3227, %v2622
    %v3230 = vsub.f32 %v3210, %v3228
    %v3231 = vsub.f32 %v3211, %v3229
    %v3232 = vmul.f32 %v3230, %v3230
    %v3233 = vmul.f32 %v3231, %v3231
    %3236 = vrot.lane.b32.xlu0 %v3232, 64
    %v3237 = vpop.permute.xlu0 %3236
    %3238 = vrot.lane.b32.xlu0 %v3233, 64
    %v3239 = vpop.permute.xlu0 %3238
    %v3242 = vsel %vm2609, %v3237, 0.0
    %3243 = vadd.xlane.f32.xlu0 %v3242
    %v3244 = vpop.xlane.xlu0 %3243
    %v3245 = vsel %vm2609, %v3239, 0.0
    %3246 = vadd.xlane.f32.xlu0 %v3245
    %v3247 = vpop.xlane.xlu0 %3246
    %v3248 = vmul.f32 %v3244, %v2622
    %v3249 = vmul.f32 %v3247, %v2622
    %v3250 = vadd.f32 %v3248, 1e-05
    %v3251 = vadd.f32 %v3249, 1e-05
    %v3252 = vrsqrt.pop %v3250
    %v3253 = vmul.f32 %v3252, %v3250
    %v3254 = vmul.f32 %v3253, %v3252
    %v3255 = vmul.f32 0.5, %v3254
    %v3256 = vsub.f32 1.5, %v3255
    %v3257 = vmul.f32 %v3252, %v3256
    %vm3258 = vweird.f32 %v3250
    %vm3259 = vweird.f32 %v3252
    %vm3260 = vmor %vm3258, %vm3259
    %v3261 = vsel %vm3260, %v3252, %v3257
    %v3262 = vrsqrt.pop %v3251
    %v3263 = vmul.f32 %v3262, %v3251
    %v3264 = vmul.f32 %v3263, %v3262
    %v3265 = vmul.f32 0.5, %v3264
    %v3266 = vsub.f32 1.5, %v3265
    %v3267 = vmul.f32 %v3262, %v3266
    %vm3268 = vweird.f32 %v3251
    %vm3269 = vweird.f32 %v3262
    %vm3270 = vmor %vm3268, %vm3269
    %v3271 = vsel %vm3270, %v3262, %v3267
    %v3272 = vmul.f32 %v3230, %v3261
    %v3273 = vmul.f32 %v3231, %v3271
    %v3274 = vperm.slane %v3212, 0
    %3276 = vrot.lane.b32.xlu0 %v3274, 64
    %v3277 = vpop.permute.xlu0 %3276
    %v3279 = vmul.f32 %v3272, %v3277
    %v3280 = vmul.f32 %v3273, %v3277
    %v3281 = vperm.slane %v3213, 0
    %3283 = vrot.lane.b32.xlu0 %v3281, 64
    %v3284 = vpop.permute.xlu0 %3283
    %v3286 = vadd.f32 %v3279, %v3284
    %v3287 = vadd.f32 %v3280, %v3284
    %3290 = vrot.lane.b32.xlu0 %v3286, 64
    %v3291 = vpop.permute.xlu0 %3290
    %3292 = vrot.lane.b32.xlu0 %v3287, 64
    %v3293 = vpop.permute.xlu0 %3292
    %v3296 = vsel %vm2609, %v3291, 0.0
    %v3297 = vsel %vm2609, %v3293, 0.0
    %3298 = vst [vmem:[#allocation5] sm:$0xff] %v3296
    %3299 = vst [vmem:[#allocation5 + $0x8] sm:$0xff] %v3297
    // Predicated region
    $region26: #{transformer_encoder_layer.1} parent=1 // pred_check
      _
    $region27: #{transformer_encoder_layer.1} parent=1 // pred_check_branch
      %3301 = sbr.rel (0) target = $region29
    $region28: #{transformer_encoder_layer.1} parent=1 // pred_region
      %3303 = vsyncadd [#allocation4], 0
      %s3304 = sshll.u32 [#allocation5], 4
      %s3305 = int_to_ptr.vmem [resolvable:$true] %s3304
      %s3306 = sshll.u32 %s5, 4
      %s3307 = int_to_ptr.hbm [resolvable:$true] %s3306
      %3312 = dma.vmem_to_hbm [thread:$0]  %s3305, 256, %s3307, [#allocation4], 128, 128, 8
    $region29: #{transformer_encoder_layer.1} parent=1 // pred_fallthru
      _
    // Predicated region
    $region30: #{transformer_encoder_layer.1} parent=1 // pred_check
      _
    $region31: #{transformer_encoder_layer.1} parent=1 // pred_check_branch
      %3314 = sbr.rel (0) target = $region33
    $region32: #{transformer_encoder_layer.1} parent=1 // pred_region
      %3316 = dma.done [#allocation4], 256
    $region33: #{transformer_encoder_layer.1} parent=1 // pred_fallthru
      _
    %3317 = vsyncpa [#allocation3], 1
    %3318 = vsyncpa [#allocation4], 1

</llo_original>
